<compile_context>
chip_gen: v5e
topology: v5e:2x2
jax: 0.10.0
libtpu: 0.0.40
codegen_flags: <defaults>
</compile_context>

<pallas_src>
import jax
import jax.numpy as jnp
from jax import lax
from jax.experimental import pallas as pl
from jax.experimental.pallas import tpu as pltpu

_PAD = 8   # halo columns on each side of the pooling scratch (left edge 8-aligned)


# ----------------------------------------------------------------------------
# Fused SPPF kernel
# ----------------------------------------------------------------------------
def _sppf_kernel(x_ref, w1_ref, b1_ref, w2_ref, b2_ref, o_ref, pbuf_ref, cat_ref):
    """x_ref   : (1, H, W, C1)          NHWC input tile (f32)
       w1_ref  : (C1, C_)               cv1 1x1 weights, BN folded (bf16)
       b1_ref  : (1, C_)                cv1 folded BN bias (f32)
       w2_ref  : (4*C_, C2)             cv2 1x1 weights [x,y1,y2,y3] rows (bf16)
       b2_ref  : (1, C2)                cv2 folded BN bias (f32)
       o_ref   : (1, H, W, C2)          NHWC output tile
       pbuf_ref: (H+4, W+2*_PAD, C_)    f32 scratch with -inf halo for both pool passes
       cat_ref : (H*W, 4*C_)            bf16 staging buffer for the cv2 matmul
    """
    H, W, C1 = x_ref.shape[1], x_ref.shape[2], x_ref.shape[3]
    C_ = w1_ref.shape[1]
    C2 = o_ref.shape[3]
    HW = H * W
    Wp = pbuf_ref.shape[1]
    neg = jnp.float32(-jnp.inf)

    # ---- -inf border fill (halo rows + halo columns only; interior is
    #      overwritten by every pool pass) ------------------------------------
    pbuf_ref[:2, :, :] = jnp.full((2, Wp, C_), neg, jnp.float32)
    pbuf_ref[2 + H:, :, :] = jnp.full((2, Wp, C_), neg, jnp.float32)
    pbuf_ref[2:2 + H, :_PAD, :] = jnp.full((H, _PAD, C_), neg, jnp.float32)
    pbuf_ref[2:2 + H, _PAD + W:, :] = jnp.full((H, Wp - _PAD - W, C_), neg, jnp.float32)

    # ---- cv1: 1x1 conv (BN folded) + SiLU — single bf16 MXU matmul ----------
    x2d = x_ref[...].reshape(HW, C1).astype(jnp.bfloat16)
    h = jnp.dot(x2d, w1_ref[...], preferred_element_type=jnp.float32)
    h = h + b1_ref[...]
    h = h * jax.nn.sigmoid(h)                               # (HW, C_) f32
    cat_ref[:, 0:C_] = h.astype(jnp.bfloat16)

    # ---- 5x5 / stride-1 / pad-2 max pool (applied 3x), separable ------------
    def maxpool5(t):                                        # t: (H, W, C_) f32
        # W pass: shifted sublane windows out of the -inf-bordered scratch.
        pbuf_ref[2:2 + H, _PAD:_PAD + W, :] = t
        r = t
        for dw in (-2, -1, 1, 2):
            r = jnp.maximum(r, pbuf_ref[2:2 + H, _PAD + dw:_PAD + dw + W, :])
        # H pass: leading-axis shifted windows (pure addressing; halo rows = -inf).
        pbuf_ref[2:2 + H, _PAD:_PAD + W, :] = r
        out = r
        for dh in (-2, -1, 1, 2):
            out = jnp.maximum(out, pbuf_ref[2 + dh:2 + dh + H, _PAD:_PAD + W, :])
        return out

    h3 = h.reshape(H, W, C_)
    y1 = maxpool5(h3)
    cat_ref[:, 1 * C_:2 * C_] = y1.reshape(HW, C_).astype(jnp.bfloat16)
    y2 = maxpool5(y1)
    cat_ref[:, 2 * C_:3 * C_] = y2.reshape(HW, C_).astype(jnp.bfloat16)
    y3 = maxpool5(y2)
    cat_ref[:, 3 * C_:4 * C_] = y3.reshape(HW, C_).astype(jnp.bfloat16)

    # ---- cv2: ONE (HW, 4C_) x (4C_, C2) bf16 MXU matmul + bias + SiLU -------
    z = jnp.dot(cat_ref[...], w2_ref[...], preferred_element_type=jnp.float32)
    z = z + b2_ref[...]
    z = z * jax.nn.sigmoid(z)
    o_ref[...] = z.reshape(1, H, W, C2).astype(o_ref.dtype)


# ----------------------------------------------------------------------------
# Wrappers: single fused pallas_call, NHWC end-to-end (perf path)
# ----------------------------------------------------------------------------
@jax.jit
def sppf_forward(x_nhwc, params):
    N, H, W, C1 = x_nhwc.shape
    w1, b1, w2, b2 = params["w1"], params["b1"], params["w2"], params["b2"]
    C_ = w1.shape[1]
    C2 = w2.shape[1]

    return pl.pallas_call(
        _sppf_kernel,
        out_shape=jax.ShapeDtypeStruct((N, H, W, C2), x_nhwc.dtype),
        grid_spec=pltpu.PrefetchScalarGridSpec(
            num_scalar_prefetch=0,
            grid=(N,),
            in_specs=[
                pl.BlockSpec((1, H, W, C1), lambda n: (n, 0, 0, 0)),
                pl.BlockSpec((C1, C_), lambda n: (0, 0)),
                pl.BlockSpec((1, C_), lambda n: (0, 0)),
                pl.BlockSpec((4 * C_, C2), lambda n: (0, 0)),
                pl.BlockSpec((1, C2), lambda n: (0, 0)),
            ],
            out_specs=pl.BlockSpec((1, H, W, C2), lambda n: (n, 0, 0, 0)),
            scratch_shapes=[
                pltpu.VMEM((H + 4, W + 2 * _PAD, C_), jnp.float32),  # pool halo buf
                pltpu.VMEM((H * W, 4 * C_), jnp.bfloat16),           # cv2 staging
            ],
        ),
        compiler_params=pltpu.CompilerParams(
            dimension_semantics=("parallel",),
            vmem_limit_bytes=32 * 1024 * 1024,
        ),
        cost_estimate=pl.CostEstimate(
            flops=2 * N * H * W * (C1 * C_ + 4 * C_ * C2),
            transcendentals=N * H * W * (C_ + C2),
            bytes_accessed=(4 * N * H * W * (C1 + C2)
                            + 2 * (C1 * C_ + 4 * C_ * C2)
                            + 4 * (C_ + C2)),
        ),
    )(x_nhwc, w1, b1.reshape(1, C_), w2, b2.reshape(1, C2))


@jax.jit
def sppf_forward_nchw(x_nchw, params):
    """PyTorch-interface (NCHW) compatibility wrapper.  Production code should
    stay NHWC end-to-end and call sppf_forward directly — each transpose here
    is an extra full HBM round trip of the activation."""
    out_nhwc = sppf_forward(jnp.transpose(x_nchw, (0, 2, 3, 1)), params)
    return jnp.transpose(out_nhwc, (0, 3, 1, 2))


# ----------------------------------------------------------------------------
# Parameters (deterministic; eval-mode BatchNorm folded into conv weights)
# ----------------------------------------------------------------------------
def make_sppf_params(key, c1, c2, eps=1e-5):
    c_ = c1 // 2
    ks = jax.random.split(key, 10)

    def folded_bn(i, c):
        gamma = 1.0 + 0.1 * jax.random.normal(ks[i], (c,), jnp.float32)
        beta = 0.05 * jax.random.normal(ks[i + 1], (c,), jnp.float32)
        mean = 0.1 * jax.random.normal(ks[i + 2], (c,), jnp.float32)
        var = 1.0 + 0.1 * jnp.abs(jax.random.normal(ks[i + 3], (c,), jnp.float32))
        scale = gamma / jnp.sqrt(var + eps)
        bias = beta - mean * scale
        return scale, bias

    # cv1: Conv2d(c1, c_, 1, bias=False), PyTorch weight layout (c_, c1)
    w1_oc_ic = 0.2 * jax.random.normal(ks[0], (c_, c1), jnp.float32)
    s1, b1 = folded_bn(1, c_)
    # cv2: Conv2d(4*c_, c2, 1, bias=False), weight (c2, 4*c_)
    w2_oc_ic = 0.1 * jax.random.normal(ks[5], (c2, 4 * c_), jnp.float32)
    s2, b2 = folded_bn(6, c2)

    w1_f32 = (w1_oc_ic * s1[:, None]).T       # (c1, c_)   BN scale folded
    w2_f32 = (w2_oc_ic * s2[:, None]).T       # (4*c_, c2)

    return {
        # bf16 MXU operands for the kernel (f32 accumulation in-kernel):
        "w1": w1_f32.astype(jnp.bfloat16),
        "w2": w2_f32.astype(jnp.bfloat16),
        # f32 biases (epilogue stays f32):
        "b1": b1,
        "b2": b2,
        # exact f32 copies kept for the unquantized reference check:
        "w1_f32": w1_f32,
        "w2_f32": w2_f32,
    }


# ----------------------------------------------------------------------------
# Pure-JAX (XLA) references for validation (NHWC)
# ----------------------------------------------------------------------------
def _silu(x):
    return x * jax.nn.sigmoid(x)


def sppf_reference(x_nhwc, params, emulate_bf16=True):
    if emulate_bf16:
        # Same bf16-rounded operands the kernel feeds the MXU, f32 accumulation.
        w1 = params["w1"].astype(jnp.float32)
        w2 = params["w2"].astype(jnp.float32)
        cast = lambda t: t.astype(jnp.bfloat16).astype(jnp.float32)
    else:
        w1, w2 = params["w1_f32"], params["w2_f32"]
        cast = lambda t: t
    b1, b2 = params["b1"], params["b2"]

    y = jnp.einsum("nhwi,io->nhwo", cast(x_nhwc), w1) + b1
    y = _silu(y)

    def maxpool5(t):  # PyTorch MaxPool2d(k=5, s=1, p=2): implicit -inf padding
        return lax.reduce_window(
            t, -jnp.inf, lax.max,
            window_dimensions=(1, 5, 5, 1),
            window_strides=(1, 1, 1, 1),
            padding=((0, 0), (2, 2), (2, 2), (0, 0)))

    y1 = maxpool5(y)
    y2 = maxpool5(y1)
    y3 = maxpool5(y2)
    cat = jnp.concatenate([cast(y), cast(y1), cast(y2), cast(y3)], axis=-1)
    z = jnp.einsum("nhwi,io->nhwo", cat, w2) + b2
    return _silu(z)


# ----------------------------------------------------------------------------
if __name__ == "__main__":
    key = jax.random.PRNGKey(0)
    k_x, k_p = jax.random.split(key)

    # SPPF(c1=32, c2=32, k=5) -> c_ = 16, concat channels = 64.
    # Demo sizes are functional-only (lane-sparse); real SPPF uses c_ >= 128.
    N, H, W, C1, C2 = 2, 16, 16, 32, 32

    x = jax.random.normal(k_x, (N, H, W, C1), jnp.float32)   # NHWC perf layout
    params = make_sppf_params(k_p, C1, C2)

    out = jax.block_until_ready(sppf_forward(x, params))
    assert out.shape == (N, H, W, C2), out.shape

    # Tight check vs a reference that emulates the kernel's bf16 MXU operands.
    ref_bf16 = jax.block_until_ready(sppf_reference(x, params, emulate_bf16=True))
    err = float(jnp.max(jnp.abs(out - ref_bf16)))
    assert err < 2e-3, f"mismatch vs bf16-emulating reference: {err}"

    # Looser sanity check vs the exact f32 module semantics.
    ref_f32 = jax.block_until_ready(sppf_reference(x, params, emulate_bf16=False))
    err_f32 = float(jnp.max(jnp.abs(out - ref_f32)))
    assert err_f32 < 6e-2, f"mismatch vs full-f32 reference: {err_f32}"

    print("KERNEL_OK")
</pallas_src>

<mosaic_0001>
module attributes {stable_mosaic.version = 11 : i64} {
  func.func @_sppf_kernel(%arg0: i32, %arg1: memref<1x16x16x32xf32, #tpu.memory_space<vmem>>, %arg2: memref<32x16xbf16, #tpu.memory_space<vmem>>, %arg3: memref<1x16xf32, #tpu.memory_space<vmem>>, %arg4: memref<64x32xbf16, #tpu.memory_space<vmem>>, %arg5: memref<1x32xf32, #tpu.memory_space<vmem>>, %arg6: memref<1x16x16x32xf32, #tpu.memory_space<vmem>>, %arg7: memref<20x32x16xf32, #tpu.memory_space<vmem>>, %arg8: memref<256x64xbf16, #tpu.memory_space<vmem>>) attributes {dimension_semantics = [#tpu.dimension_semantics<parallel>], iteration_bounds = array<i64: 2>, scalar_prefetch = 0 : i64, scratch_operands = 2 : i64, tpu.core_type = #tpu.core_type<tc>, window_params = [{transform_indices = @transform_0, window_bounds = array<i64: 1, 16, 16, 32>}, {pipeline_mode = #tpu.pipeline_mode<synchronous>, transform_indices = @transform_1, window_bounds = array<i64: 32, 16>}, {pipeline_mode = #tpu.pipeline_mode<synchronous>, transform_indices = @transform_2, window_bounds = array<i64: 1, 16>}, {pipeline_mode = #tpu.pipeline_mode<synchronous>, transform_indices = @transform_3, window_bounds = array<i64: 64, 32>}, {pipeline_mode = #tpu.pipeline_mode<synchronous>, transform_indices = @transform_4, window_bounds = array<i64: 1, 32>}, {transform_indices = @transform_5, window_bounds = array<i64: 1, 16, 16, 32>}]} {
    %cst = arith.constant 0xFF800000 : f32
    %0 = vector.broadcast %cst : f32 to vector<2x32x16xf32>
    %c0 = arith.constant 0 : index
    %c0_0 = arith.constant 0 : index
    %c0_1 = arith.constant 0 : index
    %1 = vector.load %arg7[%c0, %c0_0, %c0_1] : memref<20x32x16xf32, #tpu.memory_space<vmem>>, vector<2x32x16xf32>
    tpu.vector_store %arg7[%c0, %c0_0, %c0_1], %0 {strides = array<i32>} : memref<20x32x16xf32, #tpu.memory_space<vmem>>, vector<2x32x16xf32>,
    %cst_2 = arith.constant 0xFF800000 : f32
    %2 = vector.broadcast %cst_2 : f32 to vector<2x32x16xf32>
    %c18 = arith.constant 18 : index
    %c0_3 = arith.constant 0 : index
    %c0_4 = arith.constant 0 : index
    %3 = vector.load %arg7[%c18, %c0_3, %c0_4] : memref<20x32x16xf32, #tpu.memory_space<vmem>>, vector<2x32x16xf32>
    tpu.vector_store %arg7[%c18, %c0_3, %c0_4], %2 {strides = array<i32>} : memref<20x32x16xf32, #tpu.memory_space<vmem>>, vector<2x32x16xf32>,
    %cst_5 = arith.constant 0xFF800000 : f32
    %4 = vector.broadcast %cst_5 : f32 to vector<16x8x16xf32>
    %c2 = arith.constant 2 : index
    %c0_6 = arith.constant 0 : index
    %c0_7 = arith.constant 0 : index
    %5 = vector.load %arg7[%c2, %c0_6, %c0_7] : memref<20x32x16xf32, #tpu.memory_space<vmem>>, vector<16x8x16xf32>
    tpu.vector_store %arg7[%c2, %c0_6, %c0_7], %4 {strides = array<i32>} : memref<20x32x16xf32, #tpu.memory_space<vmem>>, vector<16x8x16xf32>,
    %cst_8 = arith.constant 0xFF800000 : f32
    %6 = vector.broadcast %cst_8 : f32 to vector<16x8x16xf32>
    %c2_9 = arith.constant 2 : index
    %c24 = arith.constant 24 : index
    %c0_10 = arith.constant 0 : index
    %7 = vector.load %arg7[%c2_9, %c24, %c0_10] : memref<20x32x16xf32, #tpu.memory_space<vmem>>, vector<16x8x16xf32>
    tpu.vector_store %arg7[%c2_9, %c24, %c0_10], %6 {strides = array<i32>} : memref<20x32x16xf32, #tpu.memory_space<vmem>>, vector<16x8x16xf32>,
    %c0_11 = arith.constant 0 : index
    %c0_12 = arith.constant 0 : index
    %c0_13 = arith.constant 0 : index
    %c0_14 = arith.constant 0 : index
    %8 = vector.load %arg1[%c0_11, %c0_12, %c0_13, %c0_14] : memref<1x16x16x32xf32, #tpu.memory_space<vmem>>, vector<1x16x16x32xf32>
    %9 = vector.shape_cast %8 : vector<1x16x16x32xf32> to vector<256x32xf32>
    %10 = arith.truncf %9 : vector<256x32xf32> to vector<256x32xbf16>
    %c0_15 = arith.constant 0 : index
    %c0_16 = arith.constant 0 : index
    %11 = vector.load %arg2[%c0_15, %c0_16] : memref<32x16xbf16, #tpu.memory_space<vmem>>, vector<32x16xbf16>
    %cst_17 = arith.constant dense<0.000000e+00> : vector<256x16xf32>
    %12 = tpu.matmul %10, %11, %cst_17 {dimension_numbers = #tpu.dot_dimension_numbers<[1], [0], [0], [1], [0, 0, 1, 1], [], []>} : vector<256x32xbf16>, vector<32x16xbf16>, vector<256x16xf32> -> vector<256x16xf32>
    %c0_18 = arith.constant 0 : index
    %c0_19 = arith.constant 0 : index
    %13 = vector.load %arg3[%c0_18, %c0_19] : memref<1x16xf32, #tpu.memory_space<vmem>>, vector<1x16xf32>
    %14 = vector.broadcast %13 : vector<1x16xf32> to vector<256x16xf32>
    %15 = arith.addf %12, %14 : vector<256x16xf32>
    %16 = arith.negf %15 : vector<256x16xf32>
    %17 = math.exp %16 : vector<256x16xf32>
    %cst_20 = arith.constant 1.000000e+00 : f32
    %18 = vector.broadcast %cst_20 : f32 to vector<256x16xf32>
    %19 = arith.addf %18, %17 : vector<256x16xf32>
    %20 = arith.divf %18, %19 : vector<256x16xf32>
    %21 = arith.mulf %15, %20 : vector<256x16xf32>
    %22 = arith.truncf %21 : vector<256x16xf32> to vector<256x16xbf16>
    %c0_21 = arith.constant 0 : index
    %c0_22 = arith.constant 0 : index
    %23 = vector.load %arg8[%c0_21, %c0_22] : memref<256x64xbf16, #tpu.memory_space<vmem>>, vector<256x16xbf16>
    tpu.vector_store %arg8[%c0_21, %c0_22], %22 {strides = array<i32>} : memref<256x64xbf16, #tpu.memory_space<vmem>>, vector<256x16xbf16>,
    %24 = vector.shape_cast %21 : vector<256x16xf32> to vector<16x16x16xf32>
    %c2_23 = arith.constant 2 : index
    %c8 = arith.constant 8 : index
    %c0_24 = arith.constant 0 : index
    %25 = vector.load %arg7[%c2_23, %c8, %c0_24] : memref<20x32x16xf32, #tpu.memory_space<vmem>>, vector<16x16x16xf32>
    tpu.vector_store %arg7[%c2_23, %c8, %c0_24], %24 {strides = array<i32>} : memref<20x32x16xf32, #tpu.memory_space<vmem>>, vector<16x16x16xf32>,
    %c2_25 = arith.constant 2 : index
    %c6 = arith.constant 6 : index
    %c0_26 = arith.constant 0 : index
    %26 = vector.load %arg7[%c2_25, %c6, %c0_26] : memref<20x32x16xf32, #tpu.memory_space<vmem>>, vector<16x16x16xf32>
    %27 = arith.maximumf %24, %26 : vector<16x16x16xf32>
    %c2_27 = arith.constant 2 : index
    %c7 = arith.constant 7 : index
    %c0_28 = arith.constant 0 : index
    %28 = vector.load %arg7[%c2_27, %c7, %c0_28] : memref<20x32x16xf32, #tpu.memory_space<vmem>>, vector<16x16x16xf32>
    %29 = arith.maximumf %27, %28 : vector<16x16x16xf32>
    %c2_29 = arith.constant 2 : index
    %c9 = arith.constant 9 : index
    %c0_30 = arith.constant 0 : index
    %30 = vector.load %arg7[%c2_29, %c9, %c0_30] : memref<20x32x16xf32, #tpu.memory_space<vmem>>, vector<16x16x16xf32>
    %31 = arith.maximumf %29, %30 : vector<16x16x16xf32>
    %c2_31 = arith.constant 2 : index
    %c10 = arith.constant 10 : index
    %c0_32 = arith.constant 0 : index
    %32 = vector.load %arg7[%c2_31, %c10, %c0_32] : memref<20x32x16xf32, #tpu.memory_space<vmem>>, vector<16x16x16xf32>
    %33 = arith.maximumf %31, %32 : vector<16x16x16xf32>
    %c2_33 = arith.constant 2 : index
    %c8_34 = arith.constant 8 : index
    %c0_35 = arith.constant 0 : index
    %34 = vector.load %arg7[%c2_33, %c8_34, %c0_35] : memref<20x32x16xf32, #tpu.memory_space<vmem>>, vector<16x16x16xf32>
    tpu.vector_store %arg7[%c2_33, %c8_34, %c0_35], %33 {strides = array<i32>} : memref<20x32x16xf32, #tpu.memory_space<vmem>>, vector<16x16x16xf32>,
    %c0_36 = arith.constant 0 : index
    %c8_37 = arith.constant 8 : index
    %c0_38 = arith.constant 0 : index
    %35 = vector.load %arg7[%c0_36, %c8_37, %c0_38] : memref<20x32x16xf32, #tpu.memory_space<vmem>>, vector<16x16x16xf32>
    %36 = arith.maximumf %33, %35 : vector<16x16x16xf32>
    %c1 = arith.constant 1 : index
    %c8_39 = arith.constant 8 : index
    %c0_40 = arith.constant 0 : index
    %37 = vector.load %arg7[%c1, %c8_39, %c0_40] : memref<20x32x16xf32, #tpu.memory_space<vmem>>, vector<16x16x16xf32>
    %38 = arith.maximumf %36, %37 : vector<16x16x16xf32>
    %c3 = arith.constant 3 : index
    %c8_41 = arith.constant 8 : index
    %c0_42 = arith.constant 0 : index
    %39 = vector.load %arg7[%c3, %c8_41, %c0_42] : memref<20x32x16xf32, #tpu.memory_space<vmem>>, vector<16x16x16xf32>
    %40 = arith.maximumf %38, %39 : vector<16x16x16xf32>
    %c4 = arith.constant 4 : index
    %c8_43 = arith.constant 8 : index
    %c0_44 = arith.constant 0 : index
    %41 = vector.load %arg7[%c4, %c8_43, %c0_44] : memref<20x32x16xf32, #tpu.memory_space<vmem>>, vector<16x16x16xf32>
    %42 = arith.maximumf %40, %41 : vector<16x16x16xf32>
    %43 = vector.shape_cast %42 : vector<16x16x16xf32> to vector<256x16xf32>
    %44 = arith.truncf %43 : vector<256x16xf32> to vector<256x16xbf16>
    %c0_45 = arith.constant 0 : index
    %c16 = arith.constant 16 : index
    %45 = vector.load %arg8[%c0_45, %c16] : memref<256x64xbf16, #tpu.memory_space<vmem>>, vector<256x16xbf16>
    tpu.vector_store %arg8[%c0_45, %c16], %44 {strides = array<i32>} : memref<256x64xbf16, #tpu.memory_space<vmem>>, vector<256x16xbf16>,
    %c2_46 = arith.constant 2 : index
    %c8_47 = arith.constant 8 : index
    %c0_48 = arith.constant 0 : index
    %46 = vector.load %arg7[%c2_46, %c8_47, %c0_48] : memref<20x32x16xf32, #tpu.memory_space<vmem>>, vector<16x16x16xf32>
    tpu.vector_store %arg7[%c2_46, %c8_47, %c0_48], %42 {strides = array<i32>} : memref<20x32x16xf32, #tpu.memory_space<vmem>>, vector<16x16x16xf32>,
    %c2_49 = arith.constant 2 : index
    %c6_50 = arith.constant 6 : index
    %c0_51 = arith.constant 0 : index
    %47 = vector.load %arg7[%c2_49, %c6_50, %c0_51] : memref<20x32x16xf32, #tpu.memory_space<vmem>>, vector<16x16x16xf32>
    %48 = arith.maximumf %42, %47 : vector<16x16x16xf32>
    %c2_52 = arith.constant 2 : index
    %c7_53 = arith.constant 7 : index
    %c0_54 = arith.constant 0 : index
    %49 = vector.load %arg7[%c2_52, %c7_53, %c0_54] : memref<20x32x16xf32, #tpu.memory_space<vmem>>, vector<16x16x16xf32>
    %50 = arith.maximumf %48, %49 : vector<16x16x16xf32>
    %c2_55 = arith.constant 2 : index
    %c9_56 = arith.constant 9 : index
    %c0_57 = arith.constant 0 : index
    %51 = vector.load %arg7[%c2_55, %c9_56, %c0_57] : memref<20x32x16xf32, #tpu.memory_space<vmem>>, vector<16x16x16xf32>
    %52 = arith.maximumf %50, %51 : vector<16x16x16xf32>
    %c2_58 = arith.constant 2 : index
    %c10_59 = arith.constant 10 : index
    %c0_60 = arith.constant 0 : index
    %53 = vector.load %arg7[%c2_58, %c10_59, %c0_60] : memref<20x32x16xf32, #tpu.memory_space<vmem>>, vector<16x16x16xf32>
    %54 = arith.maximumf %52, %53 : vector<16x16x16xf32>
    %c2_61 = arith.constant 2 : index
    %c8_62 = arith.constant 8 : index
    %c0_63 = arith.constant 0 : index
    %55 = vector.load %arg7[%c2_61, %c8_62, %c0_63] : memref<20x32x16xf32, #tpu.memory_space<vmem>>, vector<16x16x16xf32>
    tpu.vector_store %arg7[%c2_61, %c8_62, %c0_63], %54 {strides = array<i32>} : memref<20x32x16xf32, #tpu.memory_space<vmem>>, vector<16x16x16xf32>,
    %c0_64 = arith.constant 0 : index
    %c8_65 = arith.constant 8 : index
    %c0_66 = arith.constant 0 : index
    %56 = vector.load %arg7[%c0_64, %c8_65, %c0_66] : memref<20x32x16xf32, #tpu.memory_space<vmem>>, vector<16x16x16xf32>
    %57 = arith.maximumf %54, %56 : vector<16x16x16xf32>
    %c1_67 = arith.constant 1 : index
    %c8_68 = arith.constant 8 : index
    %c0_69 = arith.constant 0 : index
    %58 = vector.load %arg7[%c1_67, %c8_68, %c0_69] : memref<20x32x16xf32, #tpu.memory_space<vmem>>, vector<16x16x16xf32>
    %59 = arith.maximumf %57, %58 : vector<16x16x16xf32>
    %c3_70 = arith.constant 3 : index
    %c8_71 = arith.constant 8 : index
    %c0_72 = arith.constant 0 : index
    %60 = vector.load %arg7[%c3_70, %c8_71, %c0_72] : memref<20x32x16xf32, #tpu.memory_space<vmem>>, vector<16x16x16xf32>
    %61 = arith.maximumf %59, %60 : vector<16x16x16xf32>
    %c4_73 = arith.constant 4 : index
    %c8_74 = arith.constant 8 : index
    %c0_75 = arith.constant 0 : index
    %62 = vector.load %arg7[%c4_73, %c8_74, %c0_75] : memref<20x32x16xf32, #tpu.memory_space<vmem>>, vector<16x16x16xf32>
    %63 = arith.maximumf %61, %62 : vector<16x16x16xf32>
    %64 = vector.shape_cast %63 : vector<16x16x16xf32> to vector<256x16xf32>
    %65 = arith.truncf %64 : vector<256x16xf32> to vector<256x16xbf16>
    %c0_76 = arith.constant 0 : index
    %c32 = arith.constant 32 : index
    %66 = vector.load %arg8[%c0_76, %c32] : memref<256x64xbf16, #tpu.memory_space<vmem>>, vector<256x16xbf16>
    tpu.vector_store %arg8[%c0_76, %c32], %65 {strides = array<i32>} : memref<256x64xbf16, #tpu.memory_space<vmem>>, vector<256x16xbf16>,
    %c2_77 = arith.constant 2 : index
    %c8_78 = arith.constant 8 : index
    %c0_79 = arith.constant 0 : index
    %67 = vector.load %arg7[%c2_77, %c8_78, %c0_79] : memref<20x32x16xf32, #tpu.memory_space<vmem>>, vector<16x16x16xf32>
    tpu.vector_store %arg7[%c2_77, %c8_78, %c0_79], %63 {strides = array<i32>} : memref<20x32x16xf32, #tpu.memory_space<vmem>>, vector<16x16x16xf32>,
    %c2_80 = arith.constant 2 : index
    %c6_81 = arith.constant 6 : index
    %c0_82 = arith.constant 0 : index
    %68 = vector.load %arg7[%c2_80, %c6_81, %c0_82] : memref<20x32x16xf32, #tpu.memory_space<vmem>>, vector<16x16x16xf32>
    %69 = arith.maximumf %63, %68 : vector<16x16x16xf32>
    %c2_83 = arith.constant 2 : index
    %c7_84 = arith.constant 7 : index
    %c0_85 = arith.constant 0 : index
    %70 = vector.load %arg7[%c2_83, %c7_84, %c0_85] : memref<20x32x16xf32, #tpu.memory_space<vmem>>, vector<16x16x16xf32>
    %71 = arith.maximumf %69, %70 : vector<16x16x16xf32>
    %c2_86 = arith.constant 2 : index
    %c9_87 = arith.constant 9 : index
    %c0_88 = arith.constant 0 : index
    %72 = vector.load %arg7[%c2_86, %c9_87, %c0_88] : memref<20x32x16xf32, #tpu.memory_space<vmem>>, vector<16x16x16xf32>
    %73 = arith.maximumf %71, %72 : vector<16x16x16xf32>
    %c2_89 = arith.constant 2 : index
    %c10_90 = arith.constant 10 : index
    %c0_91 = arith.constant 0 : index
    %74 = vector.load %arg7[%c2_89, %c10_90, %c0_91] : memref<20x32x16xf32, #tpu.memory_space<vmem>>, vector<16x16x16xf32>
    %75 = arith.maximumf %73, %74 : vector<16x16x16xf32>
    %c2_92 = arith.constant 2 : index
    %c8_93 = arith.constant 8 : index
    %c0_94 = arith.constant 0 : index
    %76 = vector.load %arg7[%c2_92, %c8_93, %c0_94] : memref<20x32x16xf32, #tpu.memory_space<vmem>>, vector<16x16x16xf32>
    tpu.vector_store %arg7[%c2_92, %c8_93, %c0_94], %75 {strides = array<i32>} : memref<20x32x16xf32, #tpu.memory_space<vmem>>, vector<16x16x16xf32>,
    %c0_95 = arith.constant 0 : index
    %c8_96 = arith.constant 8 : index
    %c0_97 = arith.constant 0 : index
    %77 = vector.load %arg7[%c0_95, %c8_96, %c0_97] : memref<20x32x16xf32, #tpu.memory_space<vmem>>, vector<16x16x16xf32>
    %78 = arith.maximumf %75, %77 : vector<16x16x16xf32>
    %c1_98 = arith.constant 1 : index
    %c8_99 = arith.constant 8 : index
    %c0_100 = arith.constant 0 : index
    %79 = vector.load %arg7[%c1_98, %c8_99, %c0_100] : memref<20x32x16xf32, #tpu.memory_space<vmem>>, vector<16x16x16xf32>
    %80 = arith.maximumf %78, %79 : vector<16x16x16xf32>
    %c3_101 = arith.constant 3 : index
    %c8_102 = arith.constant 8 : index
    %c0_103 = arith.constant 0 : index
    %81 = vector.load %arg7[%c3_101, %c8_102, %c0_103] : memref<20x32x16xf32, #tpu.memory_space<vmem>>, vector<16x16x16xf32>
    %82 = arith.maximumf %80, %81 : vector<16x16x16xf32>
    %c4_104 = arith.constant 4 : index
    %c8_105 = arith.constant 8 : index
    %c0_106 = arith.constant 0 : index
    %83 = vector.load %arg7[%c4_104, %c8_105, %c0_106] : memref<20x32x16xf32, #tpu.memory_space<vmem>>, vector<16x16x16xf32>
    %84 = arith.maximumf %82, %83 : vector<16x16x16xf32>
    %85 = vector.shape_cast %84 : vector<16x16x16xf32> to vector<256x16xf32>
    %86 = arith.truncf %85 : vector<256x16xf32> to vector<256x16xbf16>
    %c0_107 = arith.constant 0 : index
    %c48 = arith.constant 48 : index
    %87 = vector.load %arg8[%c0_107, %c48] : memref<256x64xbf16, #tpu.memory_space<vmem>>, vector<256x16xbf16>
    tpu.vector_store %arg8[%c0_107, %c48], %86 {strides = array<i32>} : memref<256x64xbf16, #tpu.memory_space<vmem>>, vector<256x16xbf16>,
    %c0_108 = arith.constant 0 : index
    %c0_109 = arith.constant 0 : index
    %88 = vector.load %arg8[%c0_108, %c0_109] : memref<256x64xbf16, #tpu.memory_space<vmem>>, vector<256x64xbf16>
    %c0_110 = arith.constant 0 : index
    %c0_111 = arith.constant 0 : index
    %89 = vector.load %arg4[%c0_110, %c0_111] : memref<64x32xbf16, #tpu.memory_space<vmem>>, vector<64x32xbf16>
    %cst_112 = arith.constant dense<0.000000e+00> : vector<256x32xf32>
    %90 = tpu.matmul %88, %89, %cst_112 {dimension_numbers = #tpu.dot_dimension_numbers<[1], [0], [0], [1], [0, 0, 1, 1], [], []>} : vector<256x64xbf16>, vector<64x32xbf16>, vector<256x32xf32> -> vector<256x32xf32>
    %c0_113 = arith.constant 0 : index
    %c0_114 = arith.constant 0 : index
    %91 = vector.load %arg5[%c0_113, %c0_114] : memref<1x32xf32, #tpu.memory_space<vmem>>, vector<1x32xf32>
    %92 = vector.broadcast %91 : vector<1x32xf32> to vector<256x32xf32>
    %93 = arith.addf %90, %92 : vector<256x32xf32>
    %94 = arith.negf %93 : vector<256x32xf32>
    %95 = math.exp %94 : vector<256x32xf32>
    %cst_115 = arith.constant 1.000000e+00 : f32
    %96 = vector.broadcast %cst_115 : f32 to vector<256x32xf32>
    %97 = arith.addf %96, %95 : vector<256x32xf32>
    %98 = arith.divf %96, %97 : vector<256x32xf32>
    %99 = arith.mulf %93, %98 : vector<256x32xf32>
    %100 = vector.shape_cast %99 : vector<256x32xf32> to vector<1x16x16x32xf32>
    %c0_116 = arith.constant 0 : index
    %c0_117 = arith.constant 0 : index
    %c0_118 = arith.constant 0 : index
    %c0_119 = arith.constant 0 : index
    %101 = vector.load %arg6[%c0_116, %c0_117, %c0_118, %c0_119] : memref<1x16x16x32xf32, #tpu.memory_space<vmem>>, vector<1x16x16x32xf32>
    tpu.vector_store %arg6[%c0_116, %c0_117, %c0_118, %c0_119], %100 {strides = array<i32>} : memref<1x16x16x32xf32, #tpu.memory_space<vmem>>, vector<1x16x16x32xf32>,
    return
  }
  func.func @transform_0(%arg0: i32) -> (i32, i32, i32, i32) {
    %c0_i32 = arith.constant 0 : i32
    %c0_i32_0 = arith.constant 0 : i32
    %c0_i32_1 = arith.constant 0 : i32
    %c0_i32_2 = arith.constant 0 : i32
    return %arg0, %c0_i32, %c0_i32_0, %c0_i32_1 : i32, i32, i32, i32
  }
  func.func @transform_1(%arg0: i32) -> (i32, i32) {
    %c0_i32 = arith.constant 0 : i32
    %c0_i32_0 = arith.constant 0 : i32
    %c0_i32_1 = arith.constant 0 : i32
    return %c0_i32, %c0_i32_0 : i32, i32
  }
  func.func @transform_2(%arg0: i32) -> (i32, i32) {
    %c0_i32 = arith.constant 0 : i32
    %c0_i32_0 = arith.constant 0 : i32
    %c0_i32_1 = arith.constant 0 : i32
    return %c0_i32, %c0_i32_0 : i32, i32
  }
  func.func @transform_3(%arg0: i32) -> (i32, i32) {
    %c0_i32 = arith.constant 0 : i32
    %c0_i32_0 = arith.constant 0 : i32
    %c0_i32_1 = arith.constant 0 : i32
    return %c0_i32, %c0_i32_0 : i32, i32
  }
  func.func @transform_4(%arg0: i32) -> (i32, i32) {
    %c0_i32 = arith.constant 0 : i32
    %c0_i32_0 = arith.constant 0 : i32
    %c0_i32_1 = arith.constant 0 : i32
    return %c0_i32, %c0_i32_0 : i32, i32
  }
  func.func @transform_5(%arg0: i32) -> (i32, i32, i32, i32) {
    %c0_i32 = arith.constant 0 : i32
    %c0_i32_0 = arith.constant 0 : i32
    %c0_i32_1 = arith.constant 0 : i32
    %c0_i32_2 = arith.constant 0 : i32
    return %arg0, %c0_i32, %c0_i32_0, %c0_i32_1 : i32, i32, i32, i32
  }
}

</mosaic_0001>

<llo_original>
// kernel: sppf_forward.1
$region0: #{sppf_forward.1}
  #allocation0 [shape = 'u32[]', space=smem, size = 0x4, offset = 0x4, fixed_abs, tag = 'smem constant byte address 0x4 - core index']
  #allocation1 [shape = 'u32[72,128]{1,0:T(1,128)}', space=vmem, size = 0x9000, scoped, tag = 'internal scratch']
  #allocation2 [shape = 'f32[20,32,16]{2,1,0:T(8,128)}', space=vmem, size = 0x50000, scoped, tag = 'scratch operand']
  #allocation3 [shape = 'bf16[256,64]{1,0:T(8,128)(2,1)}', space=vmem, size = 0x10000, scoped, tag = 'scratch operand']
  %s0 = inlined_call_operand.hbm [shape: f32[2,16,16,32], index: 0, kind: input, shape index: {}]
  %s1 = inlined_call_operand.vmem [shape: bf16[32,16], index: 1, kind: input, shape index: {}]
  %s2 = inlined_call_operand.vmem [shape: f32[1,16], index: 2, kind: input, shape index: {}]
  %s3 = inlined_call_operand.vmem [shape: bf16[64,32], index: 3, kind: input, shape index: {}]
  %s4 = inlined_call_operand.vmem [shape: f32[1,32], index: 4, kind: input, shape index: {}]
  %s5 = inlined_call_operand.hbm [shape: f32[2,16,16,32], index: 5, kind: output, shape index: {}]
  %s6 = sld [smem:[#allocation0]]
  $region57: #{sppf_forward.1} parent=0
    _
  %s8 = ssub.s32 1, %s6
  %s9 = scalar_select 0, %s8, %s6
  $region1: #{sppf_forward.1} parent=0
    #allocation4 [shape = 'u8[262144]{0}', space=vmem, size = 0x40000, scoped, tag = 'input window, operand 0']
    #allocation5 [shape = 's32[2]{0}', space=sflag, size = 0x8, scoped, tag = 'scoped memory for sppf_forward.1']
    #allocation6 [shape = 's32[2]{0}', space=sflag, size = 0x8, scoped, tag = 'scoped memory for sppf_forward.1']
    #allocation7 [shape = 'u8[262144]{0}', space=vmem, size = 0x40000, scoped, tag = 'output window, operand 0']
    %10 = vsyncpa [#allocation5], 0
    %s11 = scalar_lea.sflag [#allocation5], 1
    %12 = vsyncpa %s11, 0
    %13 = vsyncpa [#allocation6], 0
    %s14 = scalar_lea.sflag [#allocation6], 1
    %15 = vsyncpa %s14, 0
    loop: start=0, step=1, limit=4
    $region2: #{sppf_forward.1} parent=1 // loop_pre_header
      _
    $region3: #{sppf_forward.1} parent=1 // loop_header
      %s17 = sphi 0, %s21
      %p18 = scmp.ge.s32.totalorder %s17, 4
      %s27 = sphi 0, %s29
      %s30 = sphi 0, %s27
      %s31 = sphi 0, %s30
      %s47 = sphi 0, %s31
      %s51 = sphi 0, %s51
      %s53 = sphi 0, %s51
      %s54 = sphi 0, %s53
      %s68 = sphi 0, %s54
      %s72 = sphi 0, %s72
      %s74 = sphi 0, %s72
      %s75 = sphi 0, %s74
      %s89 = sphi 0, %s75
      %s93 = sphi 0, %s93
      %s95 = sphi 0, %s93
      %s96 = sphi 0, %s95
      %s110 = sphi 0, %s96
      %s114 = sphi 0, %s114
      %s116 = sphi 0, %s114
      %s117 = sphi 0, %s116
      %s131 = sphi 0, %s117
      %s137 = sphi 0, %s139
      %s140 = sphi 0, %s137
      %s141 = sphi 0, %s140
      %s157 = sphi 0, %s141
    $region4: #{sppf_forward.1} parent=1 // loop_header_branch
      %20 = sbr.rel (%p18) target = $region8
    $region5: #{sppf_forward.1} parent=1 // loop_body
      %s22 = ssub.s32 %s17, 1
      %s23 = ssub.s32 %s17, 2
      %s24 = sadd.s32 %s17, 1
      %s25 = ssub.s32 %s17, %s24
      %p26 = scmp.eq.s32.totalorder %s25, 0
      %s28 = sadd.s32 %s27, 1
      %s29 = scalar_select %p26, %s27, %s28
      %p32 = pneg %p26
      %p33 = scmp.eq.s32.totalorder %s17, 1
      %p34 = por %p32, %p33
      %p35 = scmp.ne.s32.totalorder %s27, %s30
      %p36 = scmp.eq.s32.totalorder %s17, 0
      %p37 = por %p35, %p36
      %p38 = scmp.ne.s32.totalorder %s27, %s30
      %p39 = scmp.eq.s32.totalorder %s22, 1
      %p40 = por %p38, %p39
      %p41 = scmp.ne.s32.totalorder %s30, %s31
      %p42 = scmp.eq.s32.totalorder %s22, 0
      %p43 = por %p41, %p42
      %p44 = scmp.ne.s32.totalorder %s30, %s31
      %p45 = scmp.eq.s32.totalorder %s23, 1
      %p46 = por %p44, %p45
      %p48 = scmp.ne.s32.totalorder %s31, %s47
      %p49 = scmp.eq.s32.totalorder %s23, 0
      %p50 = por %p48, %p49
      %s52 = sadd.s32 %s51, 1
      %p55 = scmp.eq.s32.totalorder %s17, 1
      %p56 = scmp.ne.s32.totalorder %s51, %s53
      %p57 = scmp.eq.s32.totalorder %s17, 0
      %p58 = por %p56, %p57
      %p59 = scmp.ne.s32.totalorder %s51, %s53
      %p60 = scmp.eq.s32.totalorder %s22, 1
      %p61 = por %p59, %p60
      %p62 = scmp.ne.s32.totalorder %s53, %s54
      %p63 = scmp.eq.s32.totalorder %s22, 0
      %p64 = por %p62, %p63
      %p65 = scmp.ne.s32.totalorder %s53, %s54
      %p66 = scmp.eq.s32.totalorder %s23, 1
      %p67 = por %p65, %p66
      %p69 = scmp.ne.s32.totalorder %s54, %s68
      %p70 = scmp.eq.s32.totalorder %s23, 0
      %p71 = por %p69, %p70
      %s73 = sadd.s32 %s72, 1
      %p76 = scmp.eq.s32.totalorder %s17, 1
      %p77 = scmp.ne.s32.totalorder %s72, %s74
      %p78 = scmp.eq.s32.totalorder %s17, 0
      %p79 = por %p77, %p78
      %p80 = scmp.ne.s32.totalorder %s72, %s74
      %p81 = scmp.eq.s32.totalorder %s22, 1
      %p82 = por %p80, %p81
      %p83 = scmp.ne.s32.totalorder %s74, %s75
      %p84 = scmp.eq.s32.totalorder %s22, 0
      %p85 = por %p83, %p84
      %p86 = scmp.ne.s32.totalorder %s74, %s75
      %p87 = scmp.eq.s32.totalorder %s23, 1
      %p88 = por %p86, %p87
      %p90 = scmp.ne.s32.totalorder %s75, %s89
      %p91 = scmp.eq.s32.totalorder %s23, 0
      %p92 = por %p90, %p91
      %s94 = sadd.s32 %s93, 1
      %p97 = scmp.eq.s32.totalorder %s17, 1
      %p98 = scmp.ne.s32.totalorder %s93, %s95
      %p99 = scmp.eq.s32.totalorder %s17, 0
      %p100 = por %p98, %p99
      %p101 = scmp.ne.s32.totalorder %s93, %s95
      %p102 = scmp.eq.s32.totalorder %s22, 1
      %p103 = por %p101, %p102
      %p104 = scmp.ne.s32.totalorder %s95, %s96
      %p105 = scmp.eq.s32.totalorder %s22, 0
      %p106 = por %p104, %p105
      %p107 = scmp.ne.s32.totalorder %s95, %s96
      %p108 = scmp.eq.s32.totalorder %s23, 1
      %p109 = por %p107, %p108
      %p111 = scmp.ne.s32.totalorder %s96, %s110
      %p112 = scmp.eq.s32.totalorder %s23, 0
      %p113 = por %p111, %p112
      %s115 = sadd.s32 %s114, 1
      %p118 = scmp.eq.s32.totalorder %s17, 1
      %p119 = scmp.ne.s32.totalorder %s114, %s116
      %p120 = scmp.eq.s32.totalorder %s17, 0
      %p121 = por %p119, %p120
      %p122 = scmp.ne.s32.totalorder %s114, %s116
      %p123 = scmp.eq.s32.totalorder %s22, 1
      %p124 = por %p122, %p123
      %p125 = scmp.ne.s32.totalorder %s116, %s117
      %p126 = scmp.eq.s32.totalorder %s22, 0
      %p127 = por %p125, %p126
      %p128 = scmp.ne.s32.totalorder %s116, %s117
      %p129 = scmp.eq.s32.totalorder %s23, 1
      %p130 = por %p128, %p129
      %p132 = scmp.ne.s32.totalorder %s117, %s131
      %p133 = scmp.eq.s32.totalorder %s23, 0
      %p134 = por %p132, %p133
      %s135 = ssub.s32 %s17, %s24
      %p136 = scmp.eq.s32.totalorder %s135, 0
      %s138 = sadd.s32 %s137, 1
      %s139 = scalar_select %p136, %s137, %s138
      %p142 = pneg %p136
      %p143 = scmp.eq.s32.totalorder %s17, 1
      %p144 = por %p142, %p143
      %p145 = scmp.ne.s32.totalorder %s137, %s140
      %p146 = scmp.eq.s32.totalorder %s17, 0
      %p147 = por %p145, %p146
      %p148 = scmp.ne.s32.totalorder %s137, %s140
      %p149 = scmp.eq.s32.totalorder %s22, 1
      %p150 = por %p148, %p149
      %p151 = scmp.ne.s32.totalorder %s140, %s141
      %p152 = scmp.eq.s32.totalorder %s22, 0
      %p153 = por %p151, %p152
      %p154 = scmp.ne.s32.totalorder %s140, %s141
      %p155 = scmp.eq.s32.totalorder %s23, 1
      %p156 = por %p154, %p155
      %p158 = scmp.ne.s32.totalorder %s141, %s157
      %p159 = scmp.eq.s32.totalorder %s23, 0
      %p160 = por %p158, %p159
      %p161 = scmp.le.s32.totalorder 1, %s17
      %p162 = scmp.lt.s32.totalorder %s17, 3
      %p163 = pnand %p161, %p162
      %p164 = pneg %p163
      // Predicated region
      $region9: #{sppf_forward.1} parent=5 // pred_check
        _
      $region10: #{sppf_forward.1} parent=5 // pred_check_branch
        %166 = sbr.rel (%p163) target = $region12
      $region11: #{sppf_forward.1} parent=5 // pred_region
        %s167 = ssub.s32 %s17, 1
        // Predicated region
        $region13: #{sppf_forward.1} parent=11 // pred_check
          %p168 = pneg %p64
        $region14: #{sppf_forward.1} parent=11 // pred_check_branch
          %170 = sbr.rel (%p168) target = $region16
        $region15: #{sppf_forward.1} parent=11 // pred_region
          _
        $region16: #{sppf_forward.1} parent=11 // pred_fallthru
          _
        // Predicated region
        $region17: #{sppf_forward.1} parent=11 // pred_check
          %p171 = pneg %p85
        $region18: #{sppf_forward.1} parent=11 // pred_check_branch
          %173 = sbr.rel (%p171) target = $region20
        $region19: #{sppf_forward.1} parent=11 // pred_region
          _
        $region20: #{sppf_forward.1} parent=11 // pred_fallthru
          _
        // Predicated region
        $region21: #{sppf_forward.1} parent=11 // pred_check
          %p174 = pneg %p106
        $region22: #{sppf_forward.1} parent=11 // pred_check_branch
          %176 = sbr.rel (%p174) target = $region24
        $region23: #{sppf_forward.1} parent=11 // pred_region
          _
        $region24: #{sppf_forward.1} parent=11 // pred_fallthru
          _
        // Predicated region
        $region25: #{sppf_forward.1} parent=11 // pred_check
          %p177 = pneg %p127
        $region26: #{sppf_forward.1} parent=11 // pred_check_branch
          %179 = sbr.rel (%p177) target = $region28
        $region27: #{sppf_forward.1} parent=11 // pred_region
          _
        $region28: #{sppf_forward.1} parent=11 // pred_fallthru
          _
      $region12: #{sppf_forward.1} parent=5 // pred_fallthru
        _
      %p180 = scmp.lt.s32.totalorder %s17, 2
      // Predicated region
      $region29: #{sppf_forward.1} parent=5 // pred_check
        %p181 = pneg %p180
      $region30: #{sppf_forward.1} parent=5 // pred_check_branch
        %183 = sbr.rel (%p181) target = $region32
      $region31: #{sppf_forward.1} parent=5 // pred_region
        // Predicated region
        $region33: #{sppf_forward.1} parent=31 // pred_check
          %p184 = pneg %p37
        $region34: #{sppf_forward.1} parent=31 // pred_check_branch
          %186 = sbr.rel (%p184) target = $region36
        $region35: #{sppf_forward.1} parent=31 // pred_region
          %s187 = sand.u32 %s27, 1
          %s188 = scalar_lea.sflag [#allocation5], %s187
          %s189 = sand.u32 %s27, 1
          %s190 = smul.addr %s189, 256
          %s191 = scalar_lea.vmem [#allocation4], %s190
          %193 = vsyncadd %s188, 0
          %s194 = smul.addr %s17, 32
          %s195 = smul.addr %s194, 8
          %s196 = scalar_lea.hbm %s0, %s195
          %s197 = sshll.u32 %s196, 4
          %s198 = int_to_ptr.hbm [resolvable:$true] %s197
          %s199 = sshll.u32 %s191, 4
          %s200 = int_to_ptr.vmem [resolvable:$true] %s199
          %205 = dma.hbm_to_vmem [thread:$0]  %s198, 4096, %s200, %s188, 128, 128, 8
        $region36: #{sppf_forward.1} parent=31 // pred_fallthru
          _
      $region32: #{sppf_forward.1} parent=5 // pred_fallthru
        _
      %p206 = scmp.le.s32.totalorder 1, %s17
      %p207 = scmp.lt.s32.totalorder %s17, 3
      %p208 = pnand %p206, %p207
      %p209 = pneg %p208
      // Predicated region
      $region37: #{sppf_forward.1} parent=5 // pred_check
        _
      $region38: #{sppf_forward.1} parent=5 // pred_check_branch
        %211 = sbr.rel (%p208) target = $region40
      $region39: #{sppf_forward.1} parent=5 // pred_region
        %s212 = ssub.s32 %s17, 1
        %s213 = sand.u32 %s30, 1
        %s214 = scalar_lea.sflag [#allocation5], %s213
        %s215 = sand.u32 %s30, 1
        %s216 = smul.addr %s215, 256
        %s217 = scalar_lea.vmem [#allocation4], %s216
        // Predicated region
        $region41: #{sppf_forward.1} parent=39 // pred_check
          %p218 = pneg %p43
        $region42: #{sppf_forward.1} parent=39 // pred_check_branch
          %220 = sbr.rel (%p218) target = $region44
        $region43: #{sppf_forward.1} parent=39 // pred_region
          %222 = dma.done %s214, 4096
        $region44: #{sppf_forward.1} parent=39 // pred_fallthru
          _
        %s223 = sand.u32 %s30, 1
        %s224 = scalar_lea.sflag [#allocation5], %s223
        %s225 = sand.u32 %s30, 1
        %s226 = smul.addr %s225, 256
        %s227 = scalar_lea.vmem [#allocation4], %s226
        %p228 = pneg %p43
        %p229 = pneg %p40
        %p230 = pneg %p64
        %p231 = pneg %p61
        %p232 = pneg %p85
        %p233 = pneg %p82
        %p234 = pneg %p106
        %p235 = pneg %p103
        %p236 = pneg %p127
        %p237 = pneg %p124
        %p238 = pneg %p153
        %p239 = pneg %p150
        %s240 = sand.u32 %s140, 1
        %s241 = scalar_lea.sflag [#allocation6], %s240
        %s242 = sand.u32 %s140, 1
        %s243 = smul.addr %s242, 256
        %s244 = scalar_lea.vmem [#allocation7], %s243
        %vm246 = vcmask 130048
        %247 = vst.msk [vmem:[#allocation2] sm:$0xff] %vm246, -inf
        %248 = vst.msk [vmem:[#allocation2 + $0x8] sm:$0xff] %vm246, -inf
        %249 = vst.msk [vmem:[#allocation2 + $0x10] sm:$0xff] %vm246, -inf
        %250 = vst.msk [vmem:[#allocation2 + $0x18] sm:$0xff] %vm246, -inf
        %251 = vst.msk [vmem:[#allocation2 + $0x20] sm:$0xff] %vm246, -inf
        %252 = vst.msk [vmem:[#allocation2 + $0x28] sm:$0xff] %vm246, -inf
        %253 = vst.msk [vmem:[#allocation2 + $0x30] sm:$0xff] %vm246, -inf
        %254 = vst.msk [vmem:[#allocation2 + $0x38] sm:$0xff] %vm246, -inf
        %s255 = scalar_lea.vmem [#allocation2], 576
        %256 = vst.msk [vmem:[%s255] sm:$0xff] %vm246, -inf
        %257 = vst.msk [vmem:[%s255 + $0x8] sm:$0xff] %vm246, -inf
        %258 = vst.msk [vmem:[%s255 + $0x10] sm:$0xff] %vm246, -inf
        %259 = vst.msk [vmem:[%s255 + $0x18] sm:$0xff] %vm246, -inf
        %260 = vst.msk [vmem:[%s255 + $0x20] sm:$0xff] %vm246, -inf
        %261 = vst.msk [vmem:[%s255 + $0x28] sm:$0xff] %vm246, -inf
        %262 = vst.msk [vmem:[%s255 + $0x30] sm:$0xff] %vm246, -inf
        %263 = vst.msk [vmem:[%s255 + $0x38] sm:$0xff] %vm246, -inf
        %s264 = scalar_lea.vmem [#allocation2], 64
        %265 = vst.msk [vmem:[%s264] sm:$0xff] %vm246, -inf
        %266 = vst.msk [vmem:[%s264 + $0x20] sm:$0xff] %vm246, -inf
        %267 = vst.msk [vmem:[%s264 + $0x40] sm:$0xff] %vm246, -inf
        %268 = vst.msk [vmem:[%s264 + $0x60] sm:$0xff] %vm246, -inf
        %269 = vst.msk [vmem:[%s264 + $0x80] sm:$0xff] %vm246, -inf
        %270 = vst.msk [vmem:[%s264 + $0xa0] sm:$0xff] %vm246, -inf
        %271 = vst.msk [vmem:[%s264 + $0xc0] sm:$0xff] %vm246, -inf
        %272 = vst.msk [vmem:[%s264 + $0xe0] sm:$0xff] %vm246, -inf
        %273 = vst.msk [vmem:[%s264 + $0x100] sm:$0xff] %vm246, -inf
        %274 = vst.msk [vmem:[%s264 + $0x120] sm:$0xff] %vm246, -inf
        %275 = vst.msk [vmem:[%s264 + $0x140] sm:$0xff] %vm246, -inf
        %276 = vst.msk [vmem:[%s264 + $0x160] sm:$0xff] %vm246, -inf
        %277 = vst.msk [vmem:[%s264 + $0x180] sm:$0xff] %vm246, -inf
        %278 = vst.msk [vmem:[%s264 + $0x1a0] sm:$0xff] %vm246, -inf
        %279 = vst.msk [vmem:[%s264 + $0x1c0] sm:$0xff] %vm246, -inf
        %280 = vst.msk [vmem:[%s264 + $0x1e0] sm:$0xff] %vm246, -inf
        %281 = vst.msk [vmem:[%s264 + $0x18] sm:$0xff] %vm246, -inf
        %282 = vst.msk [vmem:[%s264 + $0x38] sm:$0xff] %vm246, -inf
        %283 = vst.msk [vmem:[%s264 + $0x58] sm:$0xff] %vm246, -inf
        %284 = vst.msk [vmem:[%s264 + $0x78] sm:$0xff] %vm246, -inf
        %285 = vst.msk [vmem:[%s264 + $0x98] sm:$0xff] %vm246, -inf
        %286 = vst.msk [vmem:[%s264 + $0xb8] sm:$0xff] %vm246, -inf
        %287 = vst.msk [vmem:[%s264 + $0xd8] sm:$0xff] %vm246, -inf
        %288 = vst.msk [vmem:[%s264 + $0xf8] sm:$0xff] %vm246, -inf
        %289 = vst.msk [vmem:[%s264 + $0x118] sm:$0xff] %vm246, -inf
        %290 = vst.msk [vmem:[%s264 + $0x138] sm:$0xff] %vm246, -inf
        %291 = vst.msk [vmem:[%s264 + $0x158] sm:$0xff] %vm246, -inf
        %292 = vst.msk [vmem:[%s264 + $0x178] sm:$0xff] %vm246, -inf
        %293 = vst.msk [vmem:[%s264 + $0x198] sm:$0xff] %vm246, -inf
        %294 = vst.msk [vmem:[%s264 + $0x1b8] sm:$0xff] %vm246, -inf
        %295 = vst.msk [vmem:[%s264 + $0x1d8] sm:$0xff] %vm246, -inf
        %296 = vst.msk [vmem:[%s264 + $0x1f8] sm:$0xff] %vm246, -inf
        %v297 = vld [vmem:[%s217] sm:$0xff]
        %v298 = vld [vmem:[%s217 + $0x8] sm:$0xff]
        %v299 = vld [vmem:[%s217 + $0x10] sm:$0xff]
        %v300 = vld [vmem:[%s217 + $0x18] sm:$0xff]
        %v301 = vld [vmem:[%s217 + $0x20] sm:$0xff]
        %v302 = vld [vmem:[%s217 + $0x28] sm:$0xff]
        %v303 = vld [vmem:[%s217 + $0x30] sm:$0xff]
        %v304 = vld [vmem:[%s217 + $0x38] sm:$0xff]
        %v305 = vld [vmem:[%s217 + $0x40] sm:$0xff]
        %v306 = vld [vmem:[%s217 + $0x48] sm:$0xff]
        %v307 = vld [vmem:[%s217 + $0x50] sm:$0xff]
        %v308 = vld [vmem:[%s217 + $0x58] sm:$0xff]
        %v309 = vld [vmem:[%s217 + $0x60] sm:$0xff]
        %v310 = vld [vmem:[%s217 + $0x68] sm:$0xff]
        %v311 = vld [vmem:[%s217 + $0x70] sm:$0xff]
        %v312 = vld [vmem:[%s217 + $0x78] sm:$0xff]
        %v313 = vld [vmem:[%s217 + $0x80] sm:$0xff]
        %v314 = vld [vmem:[%s217 + $0x88] sm:$0xff]
        %v315 = vld [vmem:[%s217 + $0x90] sm:$0xff]
        %v316 = vld [vmem:[%s217 + $0x98] sm:$0xff]
        %v317 = vld [vmem:[%s217 + $0xa0] sm:$0xff]
        %v318 = vld [vmem:[%s217 + $0xa8] sm:$0xff]
        %v319 = vld [vmem:[%s217 + $0xb0] sm:$0xff]
        %v320 = vld [vmem:[%s217 + $0xb8] sm:$0xff]
        %v321 = vld [vmem:[%s217 + $0xc0] sm:$0xff]
        %v322 = vld [vmem:[%s217 + $0xc8] sm:$0xff]
        %v323 = vld [vmem:[%s217 + $0xd0] sm:$0xff]
        %v324 = vld [vmem:[%s217 + $0xd8] sm:$0xff]
        %v325 = vld [vmem:[%s217 + $0xe0] sm:$0xff]
        %v326 = vld [vmem:[%s217 + $0xe8] sm:$0xff]
        %v327 = vld [vmem:[%s217 + $0xf0] sm:$0xff]
        %v328 = vld [vmem:[%s217 + $0xf8] sm:$0xff]
        %v329 = vpack.c.bf16 %v298, %v297
        %v330 = vpack.c.bf16 %v300, %v299
        %v331 = vpack.c.bf16 %v302, %v301
        %v332 = vpack.c.bf16 %v304, %v303
        %v333 = vpack.c.bf16 %v306, %v305
        %v334 = vpack.c.bf16 %v308, %v307
        %v335 = vpack.c.bf16 %v310, %v309
        %v336 = vpack.c.bf16 %v312, %v311
        %v337 = vpack.c.bf16 %v314, %v313
        %v338 = vpack.c.bf16 %v316, %v315
        %v339 = vpack.c.bf16 %v318, %v317
        %v340 = vpack.c.bf16 %v320, %v319
        %v341 = vpack.c.bf16 %v322, %v321
        %v342 = vpack.c.bf16 %v324, %v323
        %v343 = vpack.c.bf16 %v326, %v325
        %v344 = vpack.c.bf16 %v328, %v327
        %v345 = vld [vmem:[%s1] sm:$0xf]
        %v346 = vld [vmem:[%s1 + $0x4] sm:$0xf]
        %v347 = vld [vmem:[%s1 + $0x8] sm:$0xf]
        %v348 = vld [vmem:[%s1 + $0xc] sm:$0xf]
        %v349 = vld [vmem:[%s2] sm:$0x1]
        %v351 = vperm.slane %v349, 0
        %v357 = vunpack.c.l.b16 %v345
        %v358 = vunpack.c.l.b16 %v346
        %v359 = vunpack.c.l.b16 %v347
        %v360 = vunpack.c.l.b16 %v348
        %v361 = vpack.c.b16 %v358, %v357
        %v362 = vpack.c.b16 %v360, %v359
        %vm365 = vcmask 261120
        %v367 = vsel %vm365, %v329, 0
        %v370 = vsel %vm365, %v330, 0
        %v373 = vsel %vm365, %v331, 0
        %v376 = vsel %vm365, %v332, 0
        %v379 = vsel %vm365, %v333, 0
        %v382 = vsel %vm365, %v334, 0
        %v385 = vsel %vm365, %v335, 0
        %v388 = vsel %vm365, %v336, 0
        %v391 = vsel %vm365, %v337, 0
        %v394 = vsel %vm365, %v338, 0
        %v397 = vsel %vm365, %v339, 0
        %v400 = vsel %vm365, %v340, 0
        %v403 = vsel %vm365, %v341, 0
        %v406 = vsel %vm365, %v342, 0
        %v409 = vsel %vm365, %v343, 0
        %v412 = vsel %vm365, %v344, 0
        %414 = vmatpush.bf16.msra.mxu0 0
        %415 = vmatpush.bf16.msra.mxu0 0
        %416 = vmatpush.bf16.msra.mxu0 0
        %417 = vmatpush.bf16.msra.mxu0 0
        %418 = vmatpush.bf16.msra.mxu0 0
        %419 = vmatpush.bf16.msra.mxu0 0
        %420 = vmatpush.bf16.msra.mxu0 %v362
        %421 = vmatpush.bf16.msra.mxu0 %v361
        %422 = vmatmul.bf16.gmra.mxu0 %v367
        %v423 = vpop.f32.mrf.mxu0
        %v424 = vadd.f32 %v351, %v423
        %v425 = vpop.f32.mrf.mxu0
        %v426 = vadd.f32 %v351, %v425
        %427 = vmatmul.bf16.gmra.mxu0 %v370
        %v428 = vpop.f32.mrf.mxu0
        %v429 = vadd.f32 %v351, %v428
        %v430 = vpop.f32.mrf.mxu0
        %v431 = vadd.f32 %v351, %v430
        %432 = vmatmul.bf16.gmra.mxu0 %v373
        %v433 = vpop.f32.mrf.mxu0
        %v434 = vadd.f32 %v351, %v433
        %v435 = vpop.f32.mrf.mxu0
        %v436 = vadd.f32 %v351, %v435
        %437 = vmatmul.bf16.gmra.mxu0 %v376
        %v438 = vpop.f32.mrf.mxu0
        %v439 = vadd.f32 %v351, %v438
        %v440 = vpop.f32.mrf.mxu0
        %v441 = vadd.f32 %v351, %v440
        %442 = vmatmul.bf16.gmra.mxu0 %v379
        %v443 = vpop.f32.mrf.mxu0
        %v444 = vadd.f32 %v351, %v443
        %v445 = vpop.f32.mrf.mxu0
        %v446 = vadd.f32 %v351, %v445
        %447 = vmatmul.bf16.gmra.mxu0 %v382
        %v448 = vpop.f32.mrf.mxu0
        %v449 = vadd.f32 %v351, %v448
        %v450 = vpop.f32.mrf.mxu0
        %v451 = vadd.f32 %v351, %v450
        %452 = vmatmul.bf16.gmra.mxu0 %v385
        %v453 = vpop.f32.mrf.mxu0
        %v454 = vadd.f32 %v351, %v453
        %v455 = vpop.f32.mrf.mxu0
        %v456 = vadd.f32 %v351, %v455
        %457 = vmatmul.bf16.gmra.mxu0 %v388
        %v458 = vpop.f32.mrf.mxu0
        %v459 = vadd.f32 %v351, %v458
        %v460 = vpop.f32.mrf.mxu0
        %v461 = vadd.f32 %v351, %v460
        %462 = vmatmul.bf16.gmra.mxu0 %v391
        %v463 = vpop.f32.mrf.mxu0
        %v464 = vadd.f32 %v351, %v463
        %v465 = vpop.f32.mrf.mxu0
        %v466 = vadd.f32 %v351, %v465
        %467 = vmatmul.bf16.gmra.mxu0 %v394
        %v468 = vpop.f32.mrf.mxu0
        %v469 = vadd.f32 %v351, %v468
        %v470 = vpop.f32.mrf.mxu0
        %v471 = vadd.f32 %v351, %v470
        %472 = vmatmul.bf16.gmra.mxu0 %v397
        %v473 = vpop.f32.mrf.mxu0
        %v474 = vadd.f32 %v351, %v473
        %v475 = vpop.f32.mrf.mxu0
        %v476 = vadd.f32 %v351, %v475
        %477 = vmatmul.bf16.gmra.mxu0 %v400
        %v478 = vpop.f32.mrf.mxu0
        %v479 = vadd.f32 %v351, %v478
        %v480 = vpop.f32.mrf.mxu0
        %v481 = vadd.f32 %v351, %v480
        %482 = vmatmul.bf16.gmra.mxu0 %v403
        %v483 = vpop.f32.mrf.mxu0
        %v484 = vadd.f32 %v351, %v483
        %v485 = vpop.f32.mrf.mxu0
        %v486 = vadd.f32 %v351, %v485
        %487 = vmatmul.bf16.gmra.mxu0 %v406
        %v488 = vpop.f32.mrf.mxu0
        %v489 = vadd.f32 %v351, %v488
        %v490 = vpop.f32.mrf.mxu0
        %v491 = vadd.f32 %v351, %v490
        %492 = vmatmul.bf16.gmra.mxu0 %v409
        %v493 = vpop.f32.mrf.mxu0
        %v494 = vadd.f32 %v351, %v493
        %v495 = vpop.f32.mrf.mxu0
        %v496 = vadd.f32 %v351, %v495
        %497 = vmatmul.bf16.gmra.mxu0 %v412
        %v498 = vpop.f32.mrf.mxu0
        %v499 = vadd.f32 %v351, %v498
        %v500 = vpop.f32.mrf.mxu0
        %v501 = vadd.f32 %v351, %v500
        %502 = vdwg.mxu0
        %v503 = vxor.u32 %v424, 2147483648
        %v504 = vxor.u32 %v426, 2147483648
        %v505 = vxor.u32 %v429, 2147483648
        %v506 = vxor.u32 %v431, 2147483648
        %v507 = vxor.u32 %v434, 2147483648
        %v508 = vxor.u32 %v436, 2147483648
        %v509 = vxor.u32 %v439, 2147483648
        %v510 = vxor.u32 %v441, 2147483648
        %v511 = vxor.u32 %v444, 2147483648
        %v512 = vxor.u32 %v446, 2147483648
        %v513 = vxor.u32 %v449, 2147483648
        %v514 = vxor.u32 %v451, 2147483648
        %v515 = vxor.u32 %v454, 2147483648
        %v516 = vxor.u32 %v456, 2147483648
        %v517 = vxor.u32 %v459, 2147483648
        %v518 = vxor.u32 %v461, 2147483648
        %v519 = vxor.u32 %v464, 2147483648
        %v520 = vxor.u32 %v466, 2147483648
        %v521 = vxor.u32 %v469, 2147483648
        %v522 = vxor.u32 %v471, 2147483648
        %v523 = vxor.u32 %v474, 2147483648
        %v524 = vxor.u32 %v476, 2147483648
        %v525 = vxor.u32 %v479, 2147483648
        %v526 = vxor.u32 %v481, 2147483648
        %v527 = vxor.u32 %v484, 2147483648
        %v528 = vxor.u32 %v486, 2147483648
        %v529 = vxor.u32 %v489, 2147483648
        %v530 = vxor.u32 %v491, 2147483648
        %v531 = vxor.u32 %v494, 2147483648
        %v532 = vxor.u32 %v496, 2147483648
        %v533 = vxor.u32 %v499, 2147483648
        %v534 = vxor.u32 %v501, 2147483648
        %v535 = vmul.f32 %v503, 1.442695
        %v536 = vpow.pop %v535
        %v537 = vmul.f32 %v504, 1.442695
        %v538 = vpow.pop %v537
        %v539 = vmul.f32 %v505, 1.442695
        %v540 = vpow.pop %v539
        %v541 = vmul.f32 %v506, 1.442695
        %v542 = vpow.pop %v541
        %v543 = vmul.f32 %v507, 1.442695
        %v544 = vpow.pop %v543
        %v545 = vmul.f32 %v508, 1.442695
        %v546 = vpow.pop %v545
        %v547 = vmul.f32 %v509, 1.442695
        %v548 = vpow.pop %v547
        %v549 = vmul.f32 %v510, 1.442695
        %v550 = vpow.pop %v549
        %v551 = vmul.f32 %v511, 1.442695
        %v552 = vpow.pop %v551
        %v553 = vmul.f32 %v512, 1.442695
        %v554 = vpow.pop %v553
        %v555 = vmul.f32 %v513, 1.442695
        %v556 = vpow.pop %v555
        %v557 = vmul.f32 %v514, 1.442695
        %v558 = vpow.pop %v557
        %v559 = vmul.f32 %v515, 1.442695
        %v560 = vpow.pop %v559
        %v561 = vmul.f32 %v516, 1.442695
        %v562 = vpow.pop %v561
        %v563 = vmul.f32 %v517, 1.442695
        %v564 = vpow.pop %v563
        %v565 = vmul.f32 %v518, 1.442695
        %v566 = vpow.pop %v565
        %v567 = vmul.f32 %v519, 1.442695
        %v568 = vpow.pop %v567
        %v569 = vmul.f32 %v520, 1.442695
        %v570 = vpow.pop %v569
        %v571 = vmul.f32 %v521, 1.442695
        %v572 = vpow.pop %v571
        %v573 = vmul.f32 %v522, 1.442695
        %v574 = vpow.pop %v573
        %v575 = vmul.f32 %v523, 1.442695
        %v576 = vpow.pop %v575
        %v577 = vmul.f32 %v524, 1.442695
        %v578 = vpow.pop %v577
        %v579 = vmul.f32 %v525, 1.442695
        %v580 = vpow.pop %v579
        %v581 = vmul.f32 %v526, 1.442695
        %v582 = vpow.pop %v581
        %v583 = vmul.f32 %v527, 1.442695
        %v584 = vpow.pop %v583
        %v585 = vmul.f32 %v528, 1.442695
        %v586 = vpow.pop %v585
        %v587 = vmul.f32 %v529, 1.442695
        %v588 = vpow.pop %v587
        %v589 = vmul.f32 %v530, 1.442695
        %v590 = vpow.pop %v589
        %v591 = vmul.f32 %v531, 1.442695
        %v592 = vpow.pop %v591
        %v593 = vmul.f32 %v532, 1.442695
        %v594 = vpow.pop %v593
        %v595 = vmul.f32 %v533, 1.442695
        %v596 = vpow.pop %v595
        %v597 = vmul.f32 %v534, 1.442695
        %v598 = vpow.pop %v597
        %v599 = vadd.f32 %v536, 1.0
        %v600 = vadd.f32 %v538, 1.0
        %v601 = vadd.f32 %v540, 1.0
        %v602 = vadd.f32 %v542, 1.0
        %v603 = vadd.f32 %v544, 1.0
        %v604 = vadd.f32 %v546, 1.0
        %v605 = vadd.f32 %v548, 1.0
        %v606 = vadd.f32 %v550, 1.0
        %v607 = vadd.f32 %v552, 1.0
        %v608 = vadd.f32 %v554, 1.0
        %v609 = vadd.f32 %v556, 1.0
        %v610 = vadd.f32 %v558, 1.0
        %v611 = vadd.f32 %v560, 1.0
        %v612 = vadd.f32 %v562, 1.0
        %v613 = vadd.f32 %v564, 1.0
        %v614 = vadd.f32 %v566, 1.0
        %v615 = vadd.f32 %v568, 1.0
        %v616 = vadd.f32 %v570, 1.0
        %v617 = vadd.f32 %v572, 1.0
        %v618 = vadd.f32 %v574, 1.0
        %v619 = vadd.f32 %v576, 1.0
        %v620 = vadd.f32 %v578, 1.0
        %v621 = vadd.f32 %v580, 1.0
        %v622 = vadd.f32 %v582, 1.0
        %v623 = vadd.f32 %v584, 1.0
        %v624 = vadd.f32 %v586, 1.0
        %v625 = vadd.f32 %v588, 1.0
        %v626 = vadd.f32 %v590, 1.0
        %v627 = vadd.f32 %v592, 1.0
        %v628 = vadd.f32 %v594, 1.0
        %v629 = vadd.f32 %v596, 1.0
        %v630 = vadd.f32 %v598, 1.0
        %v631 = vrcp.pop %v599
        %v632 = vmul.f32 %v599, %v631
        %v633 = vsub.f32 1.0, %v632
        %v634 = vmul.f32 %v631, %v633
        %v635 = vadd.f32 %v631, %v634
        %vm636 = vweird.f32 %v599
        %vm637 = vweird.f32 %v631
        %vm638 = vmor %vm636, %vm637
        %v639 = vsel %vm638, %v631, %v635
        %v640 = vand.u32 2147483647, %v599
        %vm641 = vcmp.eq.f32.partialorder %v640, 8.507059e+37
        %v642 = vand.u32 %v599, 2147483648
        %v643 = vor.u32 1.1754944e-38, %v642
        %v644 = vsel %vm641, %v643, %v639
        %v645 = vmul.f32 1.0, %v644
        %v646 = vrcp.pop %v600
        %v647 = vmul.f32 %v600, %v646
        %v648 = vsub.f32 1.0, %v647
        %v649 = vmul.f32 %v646, %v648
        %v650 = vadd.f32 %v646, %v649
        %vm651 = vweird.f32 %v600
        %vm652 = vweird.f32 %v646
        %vm653 = vmor %vm651, %vm652
        %v654 = vsel %vm653, %v646, %v650
        %v655 = vand.u32 2147483647, %v600
        %vm656 = vcmp.eq.f32.partialorder %v655, 8.507059e+37
        %v657 = vand.u32 %v600, 2147483648
        %v658 = vor.u32 1.1754944e-38, %v657
        %v659 = vsel %vm656, %v658, %v654
        %v660 = vmul.f32 1.0, %v659
        %v661 = vrcp.pop %v601
        %v662 = vmul.f32 %v601, %v661
        %v663 = vsub.f32 1.0, %v662
        %v664 = vmul.f32 %v661, %v663
        %v665 = vadd.f32 %v661, %v664
        %vm666 = vweird.f32 %v601
        %vm667 = vweird.f32 %v661
        %vm668 = vmor %vm666, %vm667
        %v669 = vsel %vm668, %v661, %v665
        %v670 = vand.u32 2147483647, %v601
        %vm671 = vcmp.eq.f32.partialorder %v670, 8.507059e+37
        %v672 = vand.u32 %v601, 2147483648
        %v673 = vor.u32 1.1754944e-38, %v672
        %v674 = vsel %vm671, %v673, %v669
        %v675 = vmul.f32 1.0, %v674
        %v676 = vrcp.pop %v602
        %v677 = vmul.f32 %v602, %v676
        %v678 = vsub.f32 1.0, %v677
        %v679 = vmul.f32 %v676, %v678
        %v680 = vadd.f32 %v676, %v679
        %vm681 = vweird.f32 %v602
        %vm682 = vweird.f32 %v676
        %vm683 = vmor %vm681, %vm682
        %v684 = vsel %vm683, %v676, %v680
        %v685 = vand.u32 2147483647, %v602
        %vm686 = vcmp.eq.f32.partialorder %v685, 8.507059e+37
        %v687 = vand.u32 %v602, 2147483648
        %v688 = vor.u32 1.1754944e-38, %v687
        %v689 = vsel %vm686, %v688, %v684
        %v690 = vmul.f32 1.0, %v689
        %v691 = vrcp.pop %v603
        %v692 = vmul.f32 %v603, %v691
        %v693 = vsub.f32 1.0, %v692
        %v694 = vmul.f32 %v691, %v693
        %v695 = vadd.f32 %v691, %v694
        %vm696 = vweird.f32 %v603
        %vm697 = vweird.f32 %v691
        %vm698 = vmor %vm696, %vm697
        %v699 = vsel %vm698, %v691, %v695
        %v700 = vand.u32 2147483647, %v603
        %vm701 = vcmp.eq.f32.partialorder %v700, 8.507059e+37
        %v702 = vand.u32 %v603, 2147483648
        %v703 = vor.u32 1.1754944e-38, %v702
        %v704 = vsel %vm701, %v703, %v699
        %v705 = vmul.f32 1.0, %v704
        %v706 = vrcp.pop %v604
        %v707 = vmul.f32 %v604, %v706
        %v708 = vsub.f32 1.0, %v707
        %v709 = vmul.f32 %v706, %v708
        %v710 = vadd.f32 %v706, %v709
        %vm711 = vweird.f32 %v604
        %vm712 = vweird.f32 %v706
        %vm713 = vmor %vm711, %vm712
        %v714 = vsel %vm713, %v706, %v710
        %v715 = vand.u32 2147483647, %v604
        %vm716 = vcmp.eq.f32.partialorder %v715, 8.507059e+37
        %v717 = vand.u32 %v604, 2147483648
        %v718 = vor.u32 1.1754944e-38, %v717
        %v719 = vsel %vm716, %v718, %v714
        %v720 = vmul.f32 1.0, %v719
        %v721 = vrcp.pop %v605
        %v722 = vmul.f32 %v605, %v721
        %v723 = vsub.f32 1.0, %v722
        %v724 = vmul.f32 %v721, %v723
        %v725 = vadd.f32 %v721, %v724
        %vm726 = vweird.f32 %v605
        %vm727 = vweird.f32 %v721
        %vm728 = vmor %vm726, %vm727
        %v729 = vsel %vm728, %v721, %v725
        %v730 = vand.u32 2147483647, %v605
        %vm731 = vcmp.eq.f32.partialorder %v730, 8.507059e+37
        %v732 = vand.u32 %v605, 2147483648
        %v733 = vor.u32 1.1754944e-38, %v732
        %v734 = vsel %vm731, %v733, %v729
        %v735 = vmul.f32 1.0, %v734
        %v736 = vrcp.pop %v606
        %v737 = vmul.f32 %v606, %v736
        %v738 = vsub.f32 1.0, %v737
        %v739 = vmul.f32 %v736, %v738
        %v740 = vadd.f32 %v736, %v739
        %vm741 = vweird.f32 %v606
        %vm742 = vweird.f32 %v736
        %vm743 = vmor %vm741, %vm742
        %v744 = vsel %vm743, %v736, %v740
        %v745 = vand.u32 2147483647, %v606
        %vm746 = vcmp.eq.f32.partialorder %v745, 8.507059e+37
        %v747 = vand.u32 %v606, 2147483648
        %v748 = vor.u32 1.1754944e-38, %v747
        %v749 = vsel %vm746, %v748, %v744
        %v750 = vmul.f32 1.0, %v749
        %v751 = vrcp.pop %v607
        %v752 = vmul.f32 %v607, %v751
        %v753 = vsub.f32 1.0, %v752
        %v754 = vmul.f32 %v751, %v753
        %v755 = vadd.f32 %v751, %v754
        %vm756 = vweird.f32 %v607
        %vm757 = vweird.f32 %v751
        %vm758 = vmor %vm756, %vm757
        %v759 = vsel %vm758, %v751, %v755
        %v760 = vand.u32 2147483647, %v607
        %vm761 = vcmp.eq.f32.partialorder %v760, 8.507059e+37
        %v762 = vand.u32 %v607, 2147483648
        %v763 = vor.u32 1.1754944e-38, %v762
        %v764 = vsel %vm761, %v763, %v759
        %v765 = vmul.f32 1.0, %v764
        %v766 = vrcp.pop %v608
        %v767 = vmul.f32 %v608, %v766
        %v768 = vsub.f32 1.0, %v767
        %v769 = vmul.f32 %v766, %v768
        %v770 = vadd.f32 %v766, %v769
        %vm771 = vweird.f32 %v608
        %vm772 = vweird.f32 %v766
        %vm773 = vmor %vm771, %vm772
        %v774 = vsel %vm773, %v766, %v770
        %v775 = vand.u32 2147483647, %v608
        %vm776 = vcmp.eq.f32.partialorder %v775, 8.507059e+37
        %v777 = vand.u32 %v608, 2147483648
        %v778 = vor.u32 1.1754944e-38, %v777
        %v779 = vsel %vm776, %v778, %v774
        %v780 = vmul.f32 1.0, %v779
        %v781 = vrcp.pop %v609
        %v782 = vmul.f32 %v609, %v781
        %v783 = vsub.f32 1.0, %v782
        %v784 = vmul.f32 %v781, %v783
        %v785 = vadd.f32 %v781, %v784
        %vm786 = vweird.f32 %v609
        %vm787 = vweird.f32 %v781
        %vm788 = vmor %vm786, %vm787
        %v789 = vsel %vm788, %v781, %v785
        %v790 = vand.u32 2147483647, %v609
        %vm791 = vcmp.eq.f32.partialorder %v790, 8.507059e+37
        %v792 = vand.u32 %v609, 2147483648
        %v793 = vor.u32 1.1754944e-38, %v792
        %v794 = vsel %vm791, %v793, %v789
        %v795 = vmul.f32 1.0, %v794
        %v796 = vrcp.pop %v610
        %v797 = vmul.f32 %v610, %v796
        %v798 = vsub.f32 1.0, %v797
        %v799 = vmul.f32 %v796, %v798
        %v800 = vadd.f32 %v796, %v799
        %vm801 = vweird.f32 %v610
        %vm802 = vweird.f32 %v796
        %vm803 = vmor %vm801, %vm802
        %v804 = vsel %vm803, %v796, %v800
        %v805 = vand.u32 2147483647, %v610
        %vm806 = vcmp.eq.f32.partialorder %v805, 8.507059e+37
        %v807 = vand.u32 %v610, 2147483648
        %v808 = vor.u32 1.1754944e-38, %v807
        %v809 = vsel %vm806, %v808, %v804
        %v810 = vmul.f32 1.0, %v809
        %v811 = vrcp.pop %v611
        %v812 = vmul.f32 %v611, %v811
        %v813 = vsub.f32 1.0, %v812
        %v814 = vmul.f32 %v811, %v813
        %v815 = vadd.f32 %v811, %v814
        %vm816 = vweird.f32 %v611
        %vm817 = vweird.f32 %v811
        %vm818 = vmor %vm816, %vm817
        %v819 = vsel %vm818, %v811, %v815
        %v820 = vand.u32 2147483647, %v611
        %vm821 = vcmp.eq.f32.partialorder %v820, 8.507059e+37
        %v822 = vand.u32 %v611, 2147483648
        %v823 = vor.u32 1.1754944e-38, %v822
        %v824 = vsel %vm821, %v823, %v819
        %v825 = vmul.f32 1.0, %v824
        %v826 = vrcp.pop %v612
        %v827 = vmul.f32 %v612, %v826
        %v828 = vsub.f32 1.0, %v827
        %v829 = vmul.f32 %v826, %v828
        %v830 = vadd.f32 %v826, %v829
        %vm831 = vweird.f32 %v612
        %vm832 = vweird.f32 %v826
        %vm833 = vmor %vm831, %vm832
        %v834 = vsel %vm833, %v826, %v830
        %v835 = vand.u32 2147483647, %v612
        %vm836 = vcmp.eq.f32.partialorder %v835, 8.507059e+37
        %v837 = vand.u32 %v612, 2147483648
        %v838 = vor.u32 1.1754944e-38, %v837
        %v839 = vsel %vm836, %v838, %v834
        %v840 = vmul.f32 1.0, %v839
        %v841 = vrcp.pop %v613
        %v842 = vmul.f32 %v613, %v841
        %v843 = vsub.f32 1.0, %v842
        %v844 = vmul.f32 %v841, %v843
        %v845 = vadd.f32 %v841, %v844
        %vm846 = vweird.f32 %v613
        %vm847 = vweird.f32 %v841
        %vm848 = vmor %vm846, %vm847
        %v849 = vsel %vm848, %v841, %v845
        %v850 = vand.u32 2147483647, %v613
        %vm851 = vcmp.eq.f32.partialorder %v850, 8.507059e+37
        %v852 = vand.u32 %v613, 2147483648
        %v853 = vor.u32 1.1754944e-38, %v852
        %v854 = vsel %vm851, %v853, %v849
        %v855 = vmul.f32 1.0, %v854
        %v856 = vrcp.pop %v614
        %v857 = vmul.f32 %v614, %v856
        %v858 = vsub.f32 1.0, %v857
        %v859 = vmul.f32 %v856, %v858
        %v860 = vadd.f32 %v856, %v859
        %vm861 = vweird.f32 %v614
        %vm862 = vweird.f32 %v856
        %vm863 = vmor %vm861, %vm862
        %v864 = vsel %vm863, %v856, %v860
        %v865 = vand.u32 2147483647, %v614
        %vm866 = vcmp.eq.f32.partialorder %v865, 8.507059e+37
        %v867 = vand.u32 %v614, 2147483648
        %v868 = vor.u32 1.1754944e-38, %v867
        %v869 = vsel %vm866, %v868, %v864
        %v870 = vmul.f32 1.0, %v869
        %v871 = vrcp.pop %v615
        %v872 = vmul.f32 %v615, %v871
        %v873 = vsub.f32 1.0, %v872
        %v874 = vmul.f32 %v871, %v873
        %v875 = vadd.f32 %v871, %v874
        %vm876 = vweird.f32 %v615
        %vm877 = vweird.f32 %v871
        %vm878 = vmor %vm876, %vm877
        %v879 = vsel %vm878, %v871, %v875
        %v880 = vand.u32 2147483647, %v615
        %vm881 = vcmp.eq.f32.partialorder %v880, 8.507059e+37
        %v882 = vand.u32 %v615, 2147483648
        %v883 = vor.u32 1.1754944e-38, %v882
        %v884 = vsel %vm881, %v883, %v879
        %v885 = vmul.f32 1.0, %v884
        %v886 = vrcp.pop %v616
        %v887 = vmul.f32 %v616, %v886
        %v888 = vsub.f32 1.0, %v887
        %v889 = vmul.f32 %v886, %v888
        %v890 = vadd.f32 %v886, %v889
        %vm891 = vweird.f32 %v616
        %vm892 = vweird.f32 %v886
        %vm893 = vmor %vm891, %vm892
        %v894 = vsel %vm893, %v886, %v890
        %v895 = vand.u32 2147483647, %v616
        %vm896 = vcmp.eq.f32.partialorder %v895, 8.507059e+37
        %v897 = vand.u32 %v616, 2147483648
        %v898 = vor.u32 1.1754944e-38, %v897
        %v899 = vsel %vm896, %v898, %v894
        %v900 = vmul.f32 1.0, %v899
        %v901 = vrcp.pop %v617
        %v902 = vmul.f32 %v617, %v901
        %v903 = vsub.f32 1.0, %v902
        %v904 = vmul.f32 %v901, %v903
        %v905 = vadd.f32 %v901, %v904
        %vm906 = vweird.f32 %v617
        %vm907 = vweird.f32 %v901
        %vm908 = vmor %vm906, %vm907
        %v909 = vsel %vm908, %v901, %v905
        %v910 = vand.u32 2147483647, %v617
        %vm911 = vcmp.eq.f32.partialorder %v910, 8.507059e+37
        %v912 = vand.u32 %v617, 2147483648
        %v913 = vor.u32 1.1754944e-38, %v912
        %v914 = vsel %vm911, %v913, %v909
        %v915 = vmul.f32 1.0, %v914
        %v916 = vrcp.pop %v618
        %v917 = vmul.f32 %v618, %v916
        %v918 = vsub.f32 1.0, %v917
        %v919 = vmul.f32 %v916, %v918
        %v920 = vadd.f32 %v916, %v919
        %vm921 = vweird.f32 %v618
        %vm922 = vweird.f32 %v916
        %vm923 = vmor %vm921, %vm922
        %v924 = vsel %vm923, %v916, %v920
        %v925 = vand.u32 2147483647, %v618
        %vm926 = vcmp.eq.f32.partialorder %v925, 8.507059e+37
        %v927 = vand.u32 %v618, 2147483648
        %v928 = vor.u32 1.1754944e-38, %v927
        %v929 = vsel %vm926, %v928, %v924
        %v930 = vmul.f32 1.0, %v929
        %v931 = vrcp.pop %v619
        %v932 = vmul.f32 %v619, %v931
        %v933 = vsub.f32 1.0, %v932
        %v934 = vmul.f32 %v931, %v933
        %v935 = vadd.f32 %v931, %v934
        %vm936 = vweird.f32 %v619
        %vm937 = vweird.f32 %v931
        %vm938 = vmor %vm936, %vm937
        %v939 = vsel %vm938, %v931, %v935
        %v940 = vand.u32 2147483647, %v619
        %vm941 = vcmp.eq.f32.partialorder %v940, 8.507059e+37
        %v942 = vand.u32 %v619, 2147483648
        %v943 = vor.u32 1.1754944e-38, %v942
        %v944 = vsel %vm941, %v943, %v939
        %v945 = vmul.f32 1.0, %v944
        %v946 = vrcp.pop %v620
        %v947 = vmul.f32 %v620, %v946
        %v948 = vsub.f32 1.0, %v947
        %v949 = vmul.f32 %v946, %v948
        %v950 = vadd.f32 %v946, %v949
        %vm951 = vweird.f32 %v620
        %vm952 = vweird.f32 %v946
        %vm953 = vmor %vm951, %vm952
        %v954 = vsel %vm953, %v946, %v950
        %v955 = vand.u32 2147483647, %v620
        %vm956 = vcmp.eq.f32.partialorder %v955, 8.507059e+37
        %v957 = vand.u32 %v620, 2147483648
        %v958 = vor.u32 1.1754944e-38, %v957
        %v959 = vsel %vm956, %v958, %v954
        %v960 = vmul.f32 1.0, %v959
        %v961 = vrcp.pop %v621
        %v962 = vmul.f32 %v621, %v961
        %v963 = vsub.f32 1.0, %v962
        %v964 = vmul.f32 %v961, %v963
        %v965 = vadd.f32 %v961, %v964
        %vm966 = vweird.f32 %v621
        %vm967 = vweird.f32 %v961
        %vm968 = vmor %vm966, %vm967
        %v969 = vsel %vm968, %v961, %v965
        %v970 = vand.u32 2147483647, %v621
        %vm971 = vcmp.eq.f32.partialorder %v970, 8.507059e+37
        %v972 = vand.u32 %v621, 2147483648
        %v973 = vor.u32 1.1754944e-38, %v972
        %v974 = vsel %vm971, %v973, %v969
        %v975 = vmul.f32 1.0, %v974
        %v976 = vrcp.pop %v622
        %v977 = vmul.f32 %v622, %v976
        %v978 = vsub.f32 1.0, %v977
        %v979 = vmul.f32 %v976, %v978
        %v980 = vadd.f32 %v976, %v979
        %vm981 = vweird.f32 %v622
        %vm982 = vweird.f32 %v976
        %vm983 = vmor %vm981, %vm982
        %v984 = vsel %vm983, %v976, %v980
        %v985 = vand.u32 2147483647, %v622
        %vm986 = vcmp.eq.f32.partialorder %v985, 8.507059e+37
        %v987 = vand.u32 %v622, 2147483648
        %v988 = vor.u32 1.1754944e-38, %v987
        %v989 = vsel %vm986, %v988, %v984
        %v990 = vmul.f32 1.0, %v989
        %v991 = vrcp.pop %v623
        %v992 = vmul.f32 %v623, %v991
        %v993 = vsub.f32 1.0, %v992
        %v994 = vmul.f32 %v991, %v993
        %v995 = vadd.f32 %v991, %v994
        %vm996 = vweird.f32 %v623
        %vm997 = vweird.f32 %v991
        %vm998 = vmor %vm996, %vm997
        %v999 = vsel %vm998, %v991, %v995
        %v1000 = vand.u32 2147483647, %v623
        %vm1001 = vcmp.eq.f32.partialorder %v1000, 8.507059e+37
        %v1002 = vand.u32 %v623, 2147483648
        %v1003 = vor.u32 1.1754944e-38, %v1002
        %v1004 = vsel %vm1001, %v1003, %v999
        %v1005 = vmul.f32 1.0, %v1004
        %v1006 = vrcp.pop %v624
        %v1007 = vmul.f32 %v624, %v1006
        %v1008 = vsub.f32 1.0, %v1007
        %v1009 = vmul.f32 %v1006, %v1008
        %v1010 = vadd.f32 %v1006, %v1009
        %vm1011 = vweird.f32 %v624
        %vm1012 = vweird.f32 %v1006
        %vm1013 = vmor %vm1011, %vm1012
        %v1014 = vsel %vm1013, %v1006, %v1010
        %v1015 = vand.u32 2147483647, %v624
        %vm1016 = vcmp.eq.f32.partialorder %v1015, 8.507059e+37
        %v1017 = vand.u32 %v624, 2147483648
        %v1018 = vor.u32 1.1754944e-38, %v1017
        %v1019 = vsel %vm1016, %v1018, %v1014
        %v1020 = vmul.f32 1.0, %v1019
        %v1021 = vrcp.pop %v625
        %v1022 = vmul.f32 %v625, %v1021
        %v1023 = vsub.f32 1.0, %v1022
        %v1024 = vmul.f32 %v1021, %v1023
        %v1025 = vadd.f32 %v1021, %v1024
        %vm1026 = vweird.f32 %v625
        %vm1027 = vweird.f32 %v1021
        %vm1028 = vmor %vm1026, %vm1027
        %v1029 = vsel %vm1028, %v1021, %v1025
        %v1030 = vand.u32 2147483647, %v625
        %vm1031 = vcmp.eq.f32.partialorder %v1030, 8.507059e+37
        %v1032 = vand.u32 %v625, 2147483648
        %v1033 = vor.u32 1.1754944e-38, %v1032
        %v1034 = vsel %vm1031, %v1033, %v1029
        %v1035 = vmul.f32 1.0, %v1034
        %v1036 = vrcp.pop %v626
        %v1037 = vmul.f32 %v626, %v1036
        %v1038 = vsub.f32 1.0, %v1037
        %v1039 = vmul.f32 %v1036, %v1038
        %v1040 = vadd.f32 %v1036, %v1039
        %vm1041 = vweird.f32 %v626
        %vm1042 = vweird.f32 %v1036
        %vm1043 = vmor %vm1041, %vm1042
        %v1044 = vsel %vm1043, %v1036, %v1040
        %v1045 = vand.u32 2147483647, %v626
        %vm1046 = vcmp.eq.f32.partialorder %v1045, 8.507059e+37
        %v1047 = vand.u32 %v626, 2147483648
        %v1048 = vor.u32 1.1754944e-38, %v1047
        %v1049 = vsel %vm1046, %v1048, %v1044
        %v1050 = vmul.f32 1.0, %v1049
        %v1051 = vrcp.pop %v627
        %v1052 = vmul.f32 %v627, %v1051
        %v1053 = vsub.f32 1.0, %v1052
        %v1054 = vmul.f32 %v1051, %v1053
        %v1055 = vadd.f32 %v1051, %v1054
        %vm1056 = vweird.f32 %v627
        %vm1057 = vweird.f32 %v1051
        %vm1058 = vmor %vm1056, %vm1057
        %v1059 = vsel %vm1058, %v1051, %v1055
        %v1060 = vand.u32 2147483647, %v627
        %vm1061 = vcmp.eq.f32.partialorder %v1060, 8.507059e+37
        %v1062 = vand.u32 %v627, 2147483648
        %v1063 = vor.u32 1.1754944e-38, %v1062
        %v1064 = vsel %vm1061, %v1063, %v1059
        %v1065 = vmul.f32 1.0, %v1064
        %v1066 = vrcp.pop %v628
        %v1067 = vmul.f32 %v628, %v1066
        %v1068 = vsub.f32 1.0, %v1067
        %v1069 = vmul.f32 %v1066, %v1068
        %v1070 = vadd.f32 %v1066, %v1069
        %vm1071 = vweird.f32 %v628
        %vm1072 = vweird.f32 %v1066
        %vm1073 = vmor %vm1071, %vm1072
        %v1074 = vsel %vm1073, %v1066, %v1070
        %v1075 = vand.u32 2147483647, %v628
        %vm1076 = vcmp.eq.f32.partialorder %v1075, 8.507059e+37
        %v1077 = vand.u32 %v628, 2147483648
        %v1078 = vor.u32 1.1754944e-38, %v1077
        %v1079 = vsel %vm1076, %v1078, %v1074
        %v1080 = vmul.f32 1.0, %v1079
        %v1081 = vrcp.pop %v629
        %v1082 = vmul.f32 %v629, %v1081
        %v1083 = vsub.f32 1.0, %v1082
        %v1084 = vmul.f32 %v1081, %v1083
        %v1085 = vadd.f32 %v1081, %v1084
        %vm1086 = vweird.f32 %v629
        %vm1087 = vweird.f32 %v1081
        %vm1088 = vmor %vm1086, %vm1087
        %v1089 = vsel %vm1088, %v1081, %v1085
        %v1090 = vand.u32 2147483647, %v629
        %vm1091 = vcmp.eq.f32.partialorder %v1090, 8.507059e+37
        %v1092 = vand.u32 %v629, 2147483648
        %v1093 = vor.u32 1.1754944e-38, %v1092
        %v1094 = vsel %vm1091, %v1093, %v1089
        %v1095 = vmul.f32 1.0, %v1094
        %v1096 = vrcp.pop %v630
        %v1097 = vmul.f32 %v630, %v1096
        %v1098 = vsub.f32 1.0, %v1097
        %v1099 = vmul.f32 %v1096, %v1098
        %v1100 = vadd.f32 %v1096, %v1099
        %vm1101 = vweird.f32 %v630
        %vm1102 = vweird.f32 %v1096
        %vm1103 = vmor %vm1101, %vm1102
        %v1104 = vsel %vm1103, %v1096, %v1100
        %v1105 = vand.u32 2147483647, %v630
        %vm1106 = vcmp.eq.f32.partialorder %v1105, 8.507059e+37
        %v1107 = vand.u32 %v630, 2147483648
        %v1108 = vor.u32 1.1754944e-38, %v1107
        %v1109 = vsel %vm1106, %v1108, %v1104
        %v1110 = vmul.f32 1.0, %v1109
        %v1111 = vmul.f32 %v424, %v645
        %v1112 = vmul.f32 %v426, %v660
        %v1113 = vmul.f32 %v429, %v675
        %v1114 = vmul.f32 %v431, %v690
        %v1115 = vmul.f32 %v434, %v705
        %v1116 = vmul.f32 %v436, %v720
        %v1117 = vmul.f32 %v439, %v735
        %v1118 = vmul.f32 %v441, %v750
        %v1119 = vmul.f32 %v444, %v765
        %v1120 = vmul.f32 %v446, %v780
        %v1121 = vmul.f32 %v449, %v795
        %v1122 = vmul.f32 %v451, %v810
        %v1123 = vmul.f32 %v454, %v825
        %v1124 = vmul.f32 %v456, %v840
        %v1125 = vmul.f32 %v459, %v855
        %v1126 = vmul.f32 %v461, %v870
        %v1127 = vmul.f32 %v464, %v885
        %v1128 = vmul.f32 %v466, %v900
        %v1129 = vmul.f32 %v469, %v915
        %v1130 = vmul.f32 %v471, %v930
        %v1131 = vmul.f32 %v474, %v945
        %v1132 = vmul.f32 %v476, %v960
        %v1133 = vmul.f32 %v479, %v975
        %v1134 = vmul.f32 %v481, %v990
        %v1135 = vmul.f32 %v484, %v1005
        %v1136 = vmul.f32 %v486, %v1020
        %v1137 = vmul.f32 %v489, %v1035
        %v1138 = vmul.f32 %v491, %v1050
        %v1139 = vmul.f32 %v494, %v1065
        %v1140 = vmul.f32 %v496, %v1080
        %v1141 = vmul.f32 %v499, %v1095
        %v1142 = vmul.f32 %v501, %v1110
        %v1143 = vpack.c.bf16 %v1111, %v1111
        %v1144 = vpack.c.bf16 %v1112, %v1112
        %v1145 = vpack.c.bf16 %v1113, %v1113
        %v1146 = vpack.c.bf16 %v1114, %v1114
        %v1147 = vpack.c.bf16 %v1115, %v1115
        %v1148 = vpack.c.bf16 %v1116, %v1116
        %v1149 = vpack.c.bf16 %v1117, %v1117
        %v1150 = vpack.c.bf16 %v1118, %v1118
        %v1151 = vpack.c.bf16 %v1119, %v1119
        %v1152 = vpack.c.bf16 %v1120, %v1120
        %v1153 = vpack.c.bf16 %v1121, %v1121
        %v1154 = vpack.c.bf16 %v1122, %v1122
        %v1155 = vpack.c.bf16 %v1123, %v1123
        %v1156 = vpack.c.bf16 %v1124, %v1124
        %v1157 = vpack.c.bf16 %v1125, %v1125
        %v1158 = vpack.c.bf16 %v1126, %v1126
        %v1159 = vpack.c.bf16 %v1127, %v1127
        %v1160 = vpack.c.bf16 %v1128, %v1128
        %v1161 = vpack.c.bf16 %v1129, %v1129
        %v1162 = vpack.c.bf16 %v1130, %v1130
        %v1163 = vpack.c.bf16 %v1131, %v1131
        %v1164 = vpack.c.bf16 %v1132, %v1132
        %v1165 = vpack.c.bf16 %v1133, %v1133
        %v1166 = vpack.c.bf16 %v1134, %v1134
        %v1167 = vpack.c.bf16 %v1135, %v1135
        %v1168 = vpack.c.bf16 %v1136, %v1136
        %v1169 = vpack.c.bf16 %v1137, %v1137
        %v1170 = vpack.c.bf16 %v1138, %v1138
        %v1171 = vpack.c.bf16 %v1139, %v1139
        %v1172 = vpack.c.bf16 %v1140, %v1140
        %v1173 = vpack.c.bf16 %v1141, %v1141
        %v1174 = vpack.c.bf16 %v1142, %v1142
        %vm1175 = vcmask 125952
        %1176 = vst.msk [vmem:[#allocation3] sm:$0xf] %vm1175, %v1143
        %1177 = vst.msk [vmem:[#allocation3 + $0x4] sm:$0xf] %vm1175, %v1144
        %1178 = vst.msk [vmem:[#allocation3 + $0x8] sm:$0xf] %vm1175, %v1145
        %1179 = vst.msk [vmem:[#allocation3 + $0xc] sm:$0xf] %vm1175, %v1146
        %1180 = vst.msk [vmem:[#allocation3 + $0x10] sm:$0xf] %vm1175, %v1147
        %1181 = vst.msk [vmem:[#allocation3 + $0x14] sm:$0xf] %vm1175, %v1148
        %1182 = vst.msk [vmem:[#allocation3 + $0x18] sm:$0xf] %vm1175, %v1149
        %1183 = vst.msk [vmem:[#allocation3 + $0x1c] sm:$0xf] %vm1175, %v1150
        %1184 = vst.msk [vmem:[#allocation3 + $0x20] sm:$0xf] %vm1175, %v1151
        %1185 = vst.msk [vmem:[#allocation3 + $0x24] sm:$0xf] %vm1175, %v1152
        %1186 = vst.msk [vmem:[#allocation3 + $0x28] sm:$0xf] %vm1175, %v1153
        %1187 = vst.msk [vmem:[#allocation3 + $0x2c] sm:$0xf] %vm1175, %v1154
        %1188 = vst.msk [vmem:[#allocation3 + $0x30] sm:$0xf] %vm1175, %v1155
        %1189 = vst.msk [vmem:[#allocation3 + $0x34] sm:$0xf] %vm1175, %v1156
        %1190 = vst.msk [vmem:[#allocation3 + $0x38] sm:$0xf] %vm1175, %v1157
        %1191 = vst.msk [vmem:[#allocation3 + $0x3c] sm:$0xf] %vm1175, %v1158
        %1192 = vst.msk [vmem:[#allocation3 + $0x40] sm:$0xf] %vm1175, %v1159
        %1193 = vst.msk [vmem:[#allocation3 + $0x44] sm:$0xf] %vm1175, %v1160
        %1194 = vst.msk [vmem:[#allocation3 + $0x48] sm:$0xf] %vm1175, %v1161
        %1195 = vst.msk [vmem:[#allocation3 + $0x4c] sm:$0xf] %vm1175, %v1162
        %1196 = vst.msk [vmem:[#allocation3 + $0x50] sm:$0xf] %vm1175, %v1163
        %1197 = vst.msk [vmem:[#allocation3 + $0x54] sm:$0xf] %vm1175, %v1164
        %1198 = vst.msk [vmem:[#allocation3 + $0x58] sm:$0xf] %vm1175, %v1165
        %1199 = vst.msk [vmem:[#allocation3 + $0x5c] sm:$0xf] %vm1175, %v1166
        %1200 = vst.msk [vmem:[#allocation3 + $0x60] sm:$0xf] %vm1175, %v1167
        %1201 = vst.msk [vmem:[#allocation3 + $0x64] sm:$0xf] %vm1175, %v1168
        %1202 = vst.msk [vmem:[#allocation3 + $0x68] sm:$0xf] %vm1175, %v1169
        %1203 = vst.msk [vmem:[#allocation3 + $0x6c] sm:$0xf] %vm1175, %v1170
        %1204 = vst.msk [vmem:[#allocation3 + $0x70] sm:$0xf] %vm1175, %v1171
        %1205 = vst.msk [vmem:[#allocation3 + $0x74] sm:$0xf] %vm1175, %v1172
        %1206 = vst.msk [vmem:[#allocation3 + $0x78] sm:$0xf] %vm1175, %v1173
        %1207 = vst.msk [vmem:[#allocation3 + $0x7c] sm:$0xf] %vm1175, %v1174
        %1208 = vst.msk [vmem:[%s264 + $0x8] sm:$0xff] %vm246, %v1111
        %1209 = vst.msk [vmem:[%s264 + $0x10] sm:$0xff] %vm246, %v1112
        %1210 = vst.msk [vmem:[%s264 + $0x28] sm:$0xff] %vm246, %v1113
        %1211 = vst.msk [vmem:[%s264 + $0x30] sm:$0xff] %vm246, %v1114
        %1212 = vst.msk [vmem:[%s264 + $0x48] sm:$0xff] %vm246, %v1115
        %1213 = vst.msk [vmem:[%s264 + $0x50] sm:$0xff] %vm246, %v1116
        %1214 = vst.msk [vmem:[%s264 + $0x68] sm:$0xff] %vm246, %v1117
        %1215 = vst.msk [vmem:[%s264 + $0x70] sm:$0xff] %vm246, %v1118
        %1216 = vst.msk [vmem:[%s264 + $0x88] sm:$0xff] %vm246, %v1119
        %1217 = vst.msk [vmem:[%s264 + $0x90] sm:$0xff] %vm246, %v1120
        %1218 = vst.msk [vmem:[%s264 + $0xa8] sm:$0xff] %vm246, %v1121
        %1219 = vst.msk [vmem:[%s264 + $0xb0] sm:$0xff] %vm246, %v1122
        %1220 = vst.msk [vmem:[%s264 + $0xc8] sm:$0xff] %vm246, %v1123
        %1221 = vst.msk [vmem:[%s264 + $0xd0] sm:$0xff] %vm246, %v1124
        %1222 = vst.msk [vmem:[%s264 + $0xe8] sm:$0xff] %vm246, %v1125
        %1223 = vst.msk [vmem:[%s264 + $0xf0] sm:$0xff] %vm246, %v1126
        %1224 = vst.msk [vmem:[%s264 + $0x108] sm:$0xff] %vm246, %v1127
        %1225 = vst.msk [vmem:[%s264 + $0x110] sm:$0xff] %vm246, %v1128
        %1226 = vst.msk [vmem:[%s264 + $0x128] sm:$0xff] %vm246, %v1129
        %1227 = vst.msk [vmem:[%s264 + $0x130] sm:$0xff] %vm246, %v1130
        %1228 = vst.msk [vmem:[%s264 + $0x148] sm:$0xff] %vm246, %v1131
        %1229 = vst.msk [vmem:[%s264 + $0x150] sm:$0xff] %vm246, %v1132
        %1230 = vst.msk [vmem:[%s264 + $0x168] sm:$0xff] %vm246, %v1133
        %1231 = vst.msk [vmem:[%s264 + $0x170] sm:$0xff] %vm246, %v1134
        %1232 = vst.msk [vmem:[%s264 + $0x188] sm:$0xff] %vm246, %v1135
        %1233 = vst.msk [vmem:[%s264 + $0x190] sm:$0xff] %vm246, %v1136
        %1234 = vst.msk [vmem:[%s264 + $0x1a8] sm:$0xff] %vm246, %v1137
        %1235 = vst.msk [vmem:[%s264 + $0x1b0] sm:$0xff] %vm246, %v1138
        %1236 = vst.msk [vmem:[%s264 + $0x1c8] sm:$0xff] %vm246, %v1139
        %1237 = vst.msk [vmem:[%s264 + $0x1d0] sm:$0xff] %vm246, %v1140
        %1238 = vst.msk [vmem:[%s264 + $0x1e8] sm:$0xff] %vm246, %v1141
        %1239 = vst.msk [vmem:[%s264 + $0x1f0] sm:$0xff] %vm246, %v1142
        %v1240 = vld [vmem:[%s264 + $0x6] sm:$0xff]
        %v1241 = vld [vmem:[%s264 + $0xe] sm:$0xff]
        %v1242 = vld [vmem:[%s264 + $0x26] sm:$0xff]
        %v1243 = vld [vmem:[%s264 + $0x2e] sm:$0xff]
        %v1244 = vld [vmem:[%s264 + $0x46] sm:$0xff]
        %v1245 = vld [vmem:[%s264 + $0x4e] sm:$0xff]
        %v1246 = vld [vmem:[%s264 + $0x66] sm:$0xff]
        %v1247 = vld [vmem:[%s264 + $0x6e] sm:$0xff]
        %v1248 = vld [vmem:[%s264 + $0x86] sm:$0xff]
        %v1249 = vld [vmem:[%s264 + $0x8e] sm:$0xff]
        %v1250 = vld [vmem:[%s264 + $0xa6] sm:$0xff]
        %v1251 = vld [vmem:[%s264 + $0xae] sm:$0xff]
        %v1252 = vld [vmem:[%s264 + $0xc6] sm:$0xff]
        %v1253 = vld [vmem:[%s264 + $0xce] sm:$0xff]
        %v1254 = vld [vmem:[%s264 + $0xe6] sm:$0xff]
        %v1255 = vld [vmem:[%s264 + $0xee] sm:$0xff]
        %v1256 = vld [vmem:[%s264 + $0x106] sm:$0xff]
        %v1257 = vld [vmem:[%s264 + $0x10e] sm:$0xff]
        %v1258 = vld [vmem:[%s264 + $0x126] sm:$0xff]
        %v1259 = vld [vmem:[%s264 + $0x12e] sm:$0xff]
        %v1260 = vld [vmem:[%s264 + $0x146] sm:$0xff]
        %v1261 = vld [vmem:[%s264 + $0x14e] sm:$0xff]
        %v1262 = vld [vmem:[%s264 + $0x166] sm:$0xff]
        %v1263 = vld [vmem:[%s264 + $0x16e] sm:$0xff]
        %v1264 = vld [vmem:[%s264 + $0x186] sm:$0xff]
        %v1265 = vld [vmem:[%s264 + $0x18e] sm:$0xff]
        %v1266 = vld [vmem:[%s264 + $0x1a6] sm:$0xff]
        %v1267 = vld [vmem:[%s264 + $0x1ae] sm:$0xff]
        %v1268 = vld [vmem:[%s264 + $0x1c6] sm:$0xff]
        %v1269 = vld [vmem:[%s264 + $0x1ce] sm:$0xff]
        %v1270 = vld [vmem:[%s264 + $0x1e6] sm:$0xff]
        %v1271 = vld [vmem:[%s264 + $0x1ee] sm:$0xff]
        %v1272 = vmax.f32 %v1111, %v1240
        %v1273 = vmax.f32 %v1112, %v1241
        %v1274 = vmax.f32 %v1113, %v1242
        %v1275 = vmax.f32 %v1114, %v1243
        %v1276 = vmax.f32 %v1115, %v1244
        %v1277 = vmax.f32 %v1116, %v1245
        %v1278 = vmax.f32 %v1117, %v1246
        %v1279 = vmax.f32 %v1118, %v1247
        %v1280 = vmax.f32 %v1119, %v1248
        %v1281 = vmax.f32 %v1120, %v1249
        %v1282 = vmax.f32 %v1121, %v1250
        %v1283 = vmax.f32 %v1122, %v1251
        %v1284 = vmax.f32 %v1123, %v1252
        %v1285 = vmax.f32 %v1124, %v1253
        %v1286 = vmax.f32 %v1125, %v1254
        %v1287 = vmax.f32 %v1126, %v1255
        %v1288 = vmax.f32 %v1127, %v1256
        %v1289 = vmax.f32 %v1128, %v1257
        %v1290 = vmax.f32 %v1129, %v1258
        %v1291 = vmax.f32 %v1130, %v1259
        %v1292 = vmax.f32 %v1131, %v1260
        %v1293 = vmax.f32 %v1132, %v1261
        %v1294 = vmax.f32 %v1133, %v1262
        %v1295 = vmax.f32 %v1134, %v1263
        %v1296 = vmax.f32 %v1135, %v1264
        %v1297 = vmax.f32 %v1136, %v1265
        %v1298 = vmax.f32 %v1137, %v1266
        %v1299 = vmax.f32 %v1138, %v1267
        %v1300 = vmax.f32 %v1139, %v1268
        %v1301 = vmax.f32 %v1140, %v1269
        %v1302 = vmax.f32 %v1141, %v1270
        %v1303 = vmax.f32 %v1142, %v1271
        %v1304 = vld [vmem:[%s264 + $0x7] sm:$0xff]
        %v1305 = vld [vmem:[%s264 + $0xf] sm:$0xff]
        %v1306 = vld [vmem:[%s264 + $0x27] sm:$0xff]
        %v1307 = vld [vmem:[%s264 + $0x2f] sm:$0xff]
        %v1308 = vld [vmem:[%s264 + $0x47] sm:$0xff]
        %v1309 = vld [vmem:[%s264 + $0x4f] sm:$0xff]
        %v1310 = vld [vmem:[%s264 + $0x67] sm:$0xff]
        %v1311 = vld [vmem:[%s264 + $0x6f] sm:$0xff]
        %v1312 = vld [vmem:[%s264 + $0x87] sm:$0xff]
        %v1313 = vld [vmem:[%s264 + $0x8f] sm:$0xff]
        %v1314 = vld [vmem:[%s264 + $0xa7] sm:$0xff]
        %v1315 = vld [vmem:[%s264 + $0xaf] sm:$0xff]
        %v1316 = vld [vmem:[%s264 + $0xc7] sm:$0xff]
        %v1317 = vld [vmem:[%s264 + $0xcf] sm:$0xff]
        %v1318 = vld [vmem:[%s264 + $0xe7] sm:$0xff]
        %v1319 = vld [vmem:[%s264 + $0xef] sm:$0xff]
        %v1320 = vld [vmem:[%s264 + $0x107] sm:$0xff]
        %v1321 = vld [vmem:[%s264 + $0x10f] sm:$0xff]
        %v1322 = vld [vmem:[%s264 + $0x127] sm:$0xff]
        %v1323 = vld [vmem:[%s264 + $0x12f] sm:$0xff]
        %v1324 = vld [vmem:[%s264 + $0x147] sm:$0xff]
        %v1325 = vld [vmem:[%s264 + $0x14f] sm:$0xff]
        %v1326 = vld [vmem:[%s264 + $0x167] sm:$0xff]
        %v1327 = vld [vmem:[%s264 + $0x16f] sm:$0xff]
        %v1328 = vld [vmem:[%s264 + $0x187] sm:$0xff]
        %v1329 = vld [vmem:[%s264 + $0x18f] sm:$0xff]
        %v1330 = vld [vmem:[%s264 + $0x1a7] sm:$0xff]
        %v1331 = vld [vmem:[%s264 + $0x1af] sm:$0xff]
        %v1332 = vld [vmem:[%s264 + $0x1c7] sm:$0xff]
        %v1333 = vld [vmem:[%s264 + $0x1cf] sm:$0xff]
        %v1334 = vld [vmem:[%s264 + $0x1e7] sm:$0xff]
        %v1335 = vld [vmem:[%s264 + $0x1ef] sm:$0xff]
        %v1336 = vmax.f32 %v1272, %v1304
        %v1337 = vmax.f32 %v1273, %v1305
        %v1338 = vmax.f32 %v1274, %v1306
        %v1339 = vmax.f32 %v1275, %v1307
        %v1340 = vmax.f32 %v1276, %v1308
        %v1341 = vmax.f32 %v1277, %v1309
        %v1342 = vmax.f32 %v1278, %v1310
        %v1343 = vmax.f32 %v1279, %v1311
        %v1344 = vmax.f32 %v1280, %v1312
        %v1345 = vmax.f32 %v1281, %v1313
        %v1346 = vmax.f32 %v1282, %v1314
        %v1347 = vmax.f32 %v1283, %v1315
        %v1348 = vmax.f32 %v1284, %v1316
        %v1349 = vmax.f32 %v1285, %v1317
        %v1350 = vmax.f32 %v1286, %v1318
        %v1351 = vmax.f32 %v1287, %v1319
        %v1352 = vmax.f32 %v1288, %v1320
        %v1353 = vmax.f32 %v1289, %v1321
        %v1354 = vmax.f32 %v1290, %v1322
        %v1355 = vmax.f32 %v1291, %v1323
        %v1356 = vmax.f32 %v1292, %v1324
        %v1357 = vmax.f32 %v1293, %v1325
        %v1358 = vmax.f32 %v1294, %v1326
        %v1359 = vmax.f32 %v1295, %v1327
        %v1360 = vmax.f32 %v1296, %v1328
        %v1361 = vmax.f32 %v1297, %v1329
        %v1362 = vmax.f32 %v1298, %v1330
        %v1363 = vmax.f32 %v1299, %v1331
        %v1364 = vmax.f32 %v1300, %v1332
        %v1365 = vmax.f32 %v1301, %v1333
        %v1366 = vmax.f32 %v1302, %v1334
        %v1367 = vmax.f32 %v1303, %v1335
        %v1368 = vld [vmem:[%s264 + $0x9] sm:$0xff]
        %v1369 = vld [vmem:[%s264 + $0x11] sm:$0xff]
        %v1370 = vld [vmem:[%s264 + $0x29] sm:$0xff]
        %v1371 = vld [vmem:[%s264 + $0x31] sm:$0xff]
        %v1372 = vld [vmem:[%s264 + $0x49] sm:$0xff]
        %v1373 = vld [vmem:[%s264 + $0x51] sm:$0xff]
        %v1374 = vld [vmem:[%s264 + $0x69] sm:$0xff]
        %v1375 = vld [vmem:[%s264 + $0x71] sm:$0xff]
        %v1376 = vld [vmem:[%s264 + $0x89] sm:$0xff]
        %v1377 = vld [vmem:[%s264 + $0x91] sm:$0xff]
        %v1378 = vld [vmem:[%s264 + $0xa9] sm:$0xff]
        %v1379 = vld [vmem:[%s264 + $0xb1] sm:$0xff]
        %v1380 = vld [vmem:[%s264 + $0xc9] sm:$0xff]
        %v1381 = vld [vmem:[%s264 + $0xd1] sm:$0xff]
        %v1382 = vld [vmem:[%s264 + $0xe9] sm:$0xff]
        %v1383 = vld [vmem:[%s264 + $0xf1] sm:$0xff]
        %v1384 = vld [vmem:[%s264 + $0x109] sm:$0xff]
        %v1385 = vld [vmem:[%s264 + $0x111] sm:$0xff]
        %v1386 = vld [vmem:[%s264 + $0x129] sm:$0xff]
        %v1387 = vld [vmem:[%s264 + $0x131] sm:$0xff]
        %v1388 = vld [vmem:[%s264 + $0x149] sm:$0xff]
        %v1389 = vld [vmem:[%s264 + $0x151] sm:$0xff]
        %v1390 = vld [vmem:[%s264 + $0x169] sm:$0xff]
        %v1391 = vld [vmem:[%s264 + $0x171] sm:$0xff]
        %v1392 = vld [vmem:[%s264 + $0x189] sm:$0xff]
        %v1393 = vld [vmem:[%s264 + $0x191] sm:$0xff]
        %v1394 = vld [vmem:[%s264 + $0x1a9] sm:$0xff]
        %v1395 = vld [vmem:[%s264 + $0x1b1] sm:$0xff]
        %v1396 = vld [vmem:[%s264 + $0x1c9] sm:$0xff]
        %v1397 = vld [vmem:[%s264 + $0x1d1] sm:$0xff]
        %v1398 = vld [vmem:[%s264 + $0x1e9] sm:$0xff]
        %v1399 = vld [vmem:[%s264 + $0x1f1] sm:$0xff]
        %v1400 = vmax.f32 %v1336, %v1368
        %v1401 = vmax.f32 %v1337, %v1369
        %v1402 = vmax.f32 %v1338, %v1370
        %v1403 = vmax.f32 %v1339, %v1371
        %v1404 = vmax.f32 %v1340, %v1372
        %v1405 = vmax.f32 %v1341, %v1373
        %v1406 = vmax.f32 %v1342, %v1374
        %v1407 = vmax.f32 %v1343, %v1375
        %v1408 = vmax.f32 %v1344, %v1376
        %v1409 = vmax.f32 %v1345, %v1377
        %v1410 = vmax.f32 %v1346, %v1378
        %v1411 = vmax.f32 %v1347, %v1379
        %v1412 = vmax.f32 %v1348, %v1380
        %v1413 = vmax.f32 %v1349, %v1381
        %v1414 = vmax.f32 %v1350, %v1382
        %v1415 = vmax.f32 %v1351, %v1383
        %v1416 = vmax.f32 %v1352, %v1384
        %v1417 = vmax.f32 %v1353, %v1385
        %v1418 = vmax.f32 %v1354, %v1386
        %v1419 = vmax.f32 %v1355, %v1387
        %v1420 = vmax.f32 %v1356, %v1388
        %v1421 = vmax.f32 %v1357, %v1389
        %v1422 = vmax.f32 %v1358, %v1390
        %v1423 = vmax.f32 %v1359, %v1391
        %v1424 = vmax.f32 %v1360, %v1392
        %v1425 = vmax.f32 %v1361, %v1393
        %v1426 = vmax.f32 %v1362, %v1394
        %v1427 = vmax.f32 %v1363, %v1395
        %v1428 = vmax.f32 %v1364, %v1396
        %v1429 = vmax.f32 %v1365, %v1397
        %v1430 = vmax.f32 %v1366, %v1398
        %v1431 = vmax.f32 %v1367, %v1399
        %v1432 = vld [vmem:[%s264 + $0xa] sm:$0xff]
        %v1433 = vld [vmem:[%s264 + $0x12] sm:$0xff]
        %v1434 = vld [vmem:[%s264 + $0x2a] sm:$0xff]
        %v1435 = vld [vmem:[%s264 + $0x32] sm:$0xff]
        %v1436 = vld [vmem:[%s264 + $0x4a] sm:$0xff]
        %v1437 = vld [vmem:[%s264 + $0x52] sm:$0xff]
        %v1438 = vld [vmem:[%s264 + $0x6a] sm:$0xff]
        %v1439 = vld [vmem:[%s264 + $0x72] sm:$0xff]
        %v1440 = vld [vmem:[%s264 + $0x8a] sm:$0xff]
        %v1441 = vld [vmem:[%s264 + $0x92] sm:$0xff]
        %v1442 = vld [vmem:[%s264 + $0xaa] sm:$0xff]
        %v1443 = vld [vmem:[%s264 + $0xb2] sm:$0xff]
        %v1444 = vld [vmem:[%s264 + $0xca] sm:$0xff]
        %v1445 = vld [vmem:[%s264 + $0xd2] sm:$0xff]
        %v1446 = vld [vmem:[%s264 + $0xea] sm:$0xff]
        %v1447 = vld [vmem:[%s264 + $0xf2] sm:$0xff]
        %v1448 = vld [vmem:[%s264 + $0x10a] sm:$0xff]
        %v1449 = vld [vmem:[%s264 + $0x112] sm:$0xff]
        %v1450 = vld [vmem:[%s264 + $0x12a] sm:$0xff]
        %v1451 = vld [vmem:[%s264 + $0x132] sm:$0xff]
        %v1452 = vld [vmem:[%s264 + $0x14a] sm:$0xff]
        %v1453 = vld [vmem:[%s264 + $0x152] sm:$0xff]
        %v1454 = vld [vmem:[%s264 + $0x16a] sm:$0xff]
        %v1455 = vld [vmem:[%s264 + $0x172] sm:$0xff]
        %v1456 = vld [vmem:[%s264 + $0x18a] sm:$0xff]
        %v1457 = vld [vmem:[%s264 + $0x192] sm:$0xff]
        %v1458 = vld [vmem:[%s264 + $0x1aa] sm:$0xff]
        %v1459 = vld [vmem:[%s264 + $0x1b2] sm:$0xff]
        %v1460 = vld [vmem:[%s264 + $0x1ca] sm:$0xff]
        %v1461 = vld [vmem:[%s264 + $0x1d2] sm:$0xff]
        %v1462 = vld [vmem:[%s264 + $0x1ea] sm:$0xff]
        %v1463 = vld [vmem:[%s264 + $0x1f2] sm:$0xff]
        %v1464 = vmax.f32 %v1400, %v1432
        %v1465 = vmax.f32 %v1401, %v1433
        %v1466 = vmax.f32 %v1402, %v1434
        %v1467 = vmax.f32 %v1403, %v1435
        %v1468 = vmax.f32 %v1404, %v1436
        %v1469 = vmax.f32 %v1405, %v1437
        %v1470 = vmax.f32 %v1406, %v1438
        %v1471 = vmax.f32 %v1407, %v1439
        %v1472 = vmax.f32 %v1408, %v1440
        %v1473 = vmax.f32 %v1409, %v1441
        %v1474 = vmax.f32 %v1410, %v1442
        %v1475 = vmax.f32 %v1411, %v1443
        %v1476 = vmax.f32 %v1412, %v1444
        %v1477 = vmax.f32 %v1413, %v1445
        %v1478 = vmax.f32 %v1414, %v1446
        %v1479 = vmax.f32 %v1415, %v1447
        %v1480 = vmax.f32 %v1416, %v1448
        %v1481 = vmax.f32 %v1417, %v1449
        %v1482 = vmax.f32 %v1418, %v1450
        %v1483 = vmax.f32 %v1419, %v1451
        %v1484 = vmax.f32 %v1420, %v1452
        %v1485 = vmax.f32 %v1421, %v1453
        %v1486 = vmax.f32 %v1422, %v1454
        %v1487 = vmax.f32 %v1423, %v1455
        %v1488 = vmax.f32 %v1424, %v1456
        %v1489 = vmax.f32 %v1425, %v1457
        %v1490 = vmax.f32 %v1426, %v1458
        %v1491 = vmax.f32 %v1427, %v1459
        %v1492 = vmax.f32 %v1428, %v1460
        %v1493 = vmax.f32 %v1429, %v1461
        %v1494 = vmax.f32 %v1430, %v1462
        %v1495 = vmax.f32 %v1431, %v1463
        %1496 = vst.msk [vmem:[%s264 + $0x8] sm:$0xff] %vm246, %v1464
        %1497 = vst.msk [vmem:[%s264 + $0x10] sm:$0xff] %vm246, %v1465
        %1498 = vst.msk [vmem:[%s264 + $0x28] sm:$0xff] %vm246, %v1466
        %1499 = vst.msk [vmem:[%s264 + $0x30] sm:$0xff] %vm246, %v1467
        %1500 = vst.msk [vmem:[%s264 + $0x48] sm:$0xff] %vm246, %v1468
        %1501 = vst.msk [vmem:[%s264 + $0x50] sm:$0xff] %vm246, %v1469
        %1502 = vst.msk [vmem:[%s264 + $0x68] sm:$0xff] %vm246, %v1470
        %1503 = vst.msk [vmem:[%s264 + $0x70] sm:$0xff] %vm246, %v1471
        %1504 = vst.msk [vmem:[%s264 + $0x88] sm:$0xff] %vm246, %v1472
        %1505 = vst.msk [vmem:[%s264 + $0x90] sm:$0xff] %vm246, %v1473
        %1506 = vst.msk [vmem:[%s264 + $0xa8] sm:$0xff] %vm246, %v1474
        %1507 = vst.msk [vmem:[%s264 + $0xb0] sm:$0xff] %vm246, %v1475
        %1508 = vst.msk [vmem:[%s264 + $0xc8] sm:$0xff] %vm246, %v1476
        %1509 = vst.msk [vmem:[%s264 + $0xd0] sm:$0xff] %vm246, %v1477
        %1510 = vst.msk [vmem:[%s264 + $0xe8] sm:$0xff] %vm246, %v1478
        %1511 = vst.msk [vmem:[%s264 + $0xf0] sm:$0xff] %vm246, %v1479
        %1512 = vst.msk [vmem:[%s264 + $0x108] sm:$0xff] %vm246, %v1480
        %1513 = vst.msk [vmem:[%s264 + $0x110] sm:$0xff] %vm246, %v1481
        %1514 = vst.msk [vmem:[%s264 + $0x128] sm:$0xff] %vm246, %v1482
        %1515 = vst.msk [vmem:[%s264 + $0x130] sm:$0xff] %vm246, %v1483
        %1516 = vst.msk [vmem:[%s264 + $0x148] sm:$0xff] %vm246, %v1484
        %1517 = vst.msk [vmem:[%s264 + $0x150] sm:$0xff] %vm246, %v1485
        %1518 = vst.msk [vmem:[%s264 + $0x168] sm:$0xff] %vm246, %v1486
        %1519 = vst.msk [vmem:[%s264 + $0x170] sm:$0xff] %vm246, %v1487
        %1520 = vst.msk [vmem:[%s264 + $0x188] sm:$0xff] %vm246, %v1488
        %1521 = vst.msk [vmem:[%s264 + $0x190] sm:$0xff] %vm246, %v1489
        %1522 = vst.msk [vmem:[%s264 + $0x1a8] sm:$0xff] %vm246, %v1490
        %1523 = vst.msk [vmem:[%s264 + $0x1b0] sm:$0xff] %vm246, %v1491
        %1524 = vst.msk [vmem:[%s264 + $0x1c8] sm:$0xff] %vm246, %v1492
        %1525 = vst.msk [vmem:[%s264 + $0x1d0] sm:$0xff] %vm246, %v1493
        %1526 = vst.msk [vmem:[%s264 + $0x1e8] sm:$0xff] %vm246, %v1494
        %1527 = vst.msk [vmem:[%s264 + $0x1f0] sm:$0xff] %vm246, %v1495
        %v1528 = vld [vmem:[#allocation2 + $0x8] sm:$0xff]
        %v1529 = vld [vmem:[#allocation2 + $0x10] sm:$0xff]
        %v1530 = vld [vmem:[#allocation2 + $0x28] sm:$0xff]
        %v1531 = vld [vmem:[#allocation2 + $0x30] sm:$0xff]
        %v1532 = vld [vmem:[#allocation2 + $0x48] sm:$0xff]
        %v1533 = vld [vmem:[#allocation2 + $0x50] sm:$0xff]
        %v1534 = vld [vmem:[#allocation2 + $0x68] sm:$0xff]
        %v1535 = vld [vmem:[#allocation2 + $0x70] sm:$0xff]
        %v1536 = vld [vmem:[#allocation2 + $0x88] sm:$0xff]
        %v1537 = vld [vmem:[#allocation2 + $0x90] sm:$0xff]
        %v1538 = vld [vmem:[#allocation2 + $0xa8] sm:$0xff]
        %v1539 = vld [vmem:[#allocation2 + $0xb0] sm:$0xff]
        %v1540 = vld [vmem:[#allocation2 + $0xc8] sm:$0xff]
        %v1541 = vld [vmem:[#allocation2 + $0xd0] sm:$0xff]
        %v1542 = vld [vmem:[#allocation2 + $0xe8] sm:$0xff]
        %v1543 = vld [vmem:[#allocation2 + $0xf0] sm:$0xff]
        %v1544 = vld [vmem:[#allocation2 + $0x108] sm:$0xff]
        %v1545 = vld [vmem:[#allocation2 + $0x110] sm:$0xff]
        %v1546 = vld [vmem:[#allocation2 + $0x128] sm:$0xff]
        %v1547 = vld [vmem:[#allocation2 + $0x130] sm:$0xff]
        %v1548 = vld [vmem:[#allocation2 + $0x148] sm:$0xff]
        %v1549 = vld [vmem:[#allocation2 + $0x150] sm:$0xff]
        %v1550 = vld [vmem:[#allocation2 + $0x168] sm:$0xff]
        %v1551 = vld [vmem:[#allocation2 + $0x170] sm:$0xff]
        %v1552 = vld [vmem:[#allocation2 + $0x188] sm:$0xff]
        %v1553 = vld [vmem:[#allocation2 + $0x190] sm:$0xff]
        %v1554 = vld [vmem:[#allocation2 + $0x1a8] sm:$0xff]
        %v1555 = vld [vmem:[#allocation2 + $0x1b0] sm:$0xff]
        %v1556 = vld [vmem:[#allocation2 + $0x1c8] sm:$0xff]
        %v1557 = vld [vmem:[#allocation2 + $0x1d0] sm:$0xff]
        %v1558 = vld [vmem:[#allocation2 + $0x1e8] sm:$0xff]
        %v1559 = vld [vmem:[#allocation2 + $0x1f0] sm:$0xff]
        %v1560 = vmax.f32 %v1464, %v1528
        %v1561 = vmax.f32 %v1465, %v1529
        %v1562 = vmax.f32 %v1466, %v1530
        %v1563 = vmax.f32 %v1467, %v1531
        %v1564 = vmax.f32 %v1468, %v1532
        %v1565 = vmax.f32 %v1469, %v1533
        %v1566 = vmax.f32 %v1470, %v1534
        %v1567 = vmax.f32 %v1471, %v1535
        %v1568 = vmax.f32 %v1472, %v1536
        %v1569 = vmax.f32 %v1473, %v1537
        %v1570 = vmax.f32 %v1474, %v1538
        %v1571 = vmax.f32 %v1475, %v1539
        %v1572 = vmax.f32 %v1476, %v1540
        %v1573 = vmax.f32 %v1477, %v1541
        %v1574 = vmax.f32 %v1478, %v1542
        %v1575 = vmax.f32 %v1479, %v1543
        %v1576 = vmax.f32 %v1480, %v1544
        %v1577 = vmax.f32 %v1481, %v1545
        %v1578 = vmax.f32 %v1482, %v1546
        %v1579 = vmax.f32 %v1483, %v1547
        %v1580 = vmax.f32 %v1484, %v1548
        %v1581 = vmax.f32 %v1485, %v1549
        %v1582 = vmax.f32 %v1486, %v1550
        %v1583 = vmax.f32 %v1487, %v1551
        %v1584 = vmax.f32 %v1488, %v1552
        %v1585 = vmax.f32 %v1489, %v1553
        %v1586 = vmax.f32 %v1490, %v1554
        %v1587 = vmax.f32 %v1491, %v1555
        %v1588 = vmax.f32 %v1492, %v1556
        %v1589 = vmax.f32 %v1493, %v1557
        %v1590 = vmax.f32 %v1494, %v1558
        %v1591 = vmax.f32 %v1495, %v1559
        %s1592 = scalar_lea.vmem [#allocation2], 32
        %v1593 = vld [vmem:[%s1592 + $0x8] sm:$0xff]
        %v1594 = vld [vmem:[%s1592 + $0x10] sm:$0xff]
        %v1595 = vld [vmem:[%s1592 + $0x28] sm:$0xff]
        %v1596 = vld [vmem:[%s1592 + $0x30] sm:$0xff]
        %v1597 = vld [vmem:[%s1592 + $0x48] sm:$0xff]
        %v1598 = vld [vmem:[%s1592 + $0x50] sm:$0xff]
        %v1599 = vld [vmem:[%s1592 + $0x68] sm:$0xff]
        %v1600 = vld [vmem:[%s1592 + $0x70] sm:$0xff]
        %v1601 = vld [vmem:[%s1592 + $0x88] sm:$0xff]
        %v1602 = vld [vmem:[%s1592 + $0x90] sm:$0xff]
        %v1603 = vld [vmem:[%s1592 + $0xa8] sm:$0xff]
        %v1604 = vld [vmem:[%s1592 + $0xb0] sm:$0xff]
        %v1605 = vld [vmem:[%s1592 + $0xc8] sm:$0xff]
        %v1606 = vld [vmem:[%s1592 + $0xd0] sm:$0xff]
        %v1607 = vld [vmem:[%s1592 + $0xe8] sm:$0xff]
        %v1608 = vld [vmem:[%s1592 + $0xf0] sm:$0xff]
        %v1609 = vld [vmem:[%s1592 + $0x108] sm:$0xff]
        %v1610 = vld [vmem:[%s1592 + $0x110] sm:$0xff]
        %v1611 = vld [vmem:[%s1592 + $0x128] sm:$0xff]
        %v1612 = vld [vmem:[%s1592 + $0x130] sm:$0xff]
        %v1613 = vld [vmem:[%s1592 + $0x148] sm:$0xff]
        %v1614 = vld [vmem:[%s1592 + $0x150] sm:$0xff]
        %v1615 = vld [vmem:[%s1592 + $0x168] sm:$0xff]
        %v1616 = vld [vmem:[%s1592 + $0x170] sm:$0xff]
        %v1617 = vld [vmem:[%s1592 + $0x188] sm:$0xff]
        %v1618 = vld [vmem:[%s1592 + $0x190] sm:$0xff]
        %v1619 = vld [vmem:[%s1592 + $0x1a8] sm:$0xff]
        %v1620 = vld [vmem:[%s1592 + $0x1b0] sm:$0xff]
        %v1621 = vld [vmem:[%s1592 + $0x1c8] sm:$0xff]
        %v1622 = vld [vmem:[%s1592 + $0x1d0] sm:$0xff]
        %v1623 = vld [vmem:[%s1592 + $0x1e8] sm:$0xff]
        %v1624 = vld [vmem:[%s1592 + $0x1f0] sm:$0xff]
        %v1625 = vmax.f32 %v1560, %v1593
        %v1626 = vmax.f32 %v1561, %v1594
        %v1627 = vmax.f32 %v1562, %v1595
        %v1628 = vmax.f32 %v1563, %v1596
        %v1629 = vmax.f32 %v1564, %v1597
        %v1630 = vmax.f32 %v1565, %v1598
        %v1631 = vmax.f32 %v1566, %v1599
        %v1632 = vmax.f32 %v1567, %v1600
        %v1633 = vmax.f32 %v1568, %v1601
        %v1634 = vmax.f32 %v1569, %v1602
        %v1635 = vmax.f32 %v1570, %v1603
        %v1636 = vmax.f32 %v1571, %v1604
        %v1637 = vmax.f32 %v1572, %v1605
        %v1638 = vmax.f32 %v1573, %v1606
        %v1639 = vmax.f32 %v1574, %v1607
        %v1640 = vmax.f32 %v1575, %v1608
        %v1641 = vmax.f32 %v1576, %v1609
        %v1642 = vmax.f32 %v1577, %v1610
        %v1643 = vmax.f32 %v1578, %v1611
        %v1644 = vmax.f32 %v1579, %v1612
        %v1645 = vmax.f32 %v1580, %v1613
        %v1646 = vmax.f32 %v1581, %v1614
        %v1647 = vmax.f32 %v1582, %v1615
        %v1648 = vmax.f32 %v1583, %v1616
        %v1649 = vmax.f32 %v1584, %v1617
        %v1650 = vmax.f32 %v1585, %v1618
        %v1651 = vmax.f32 %v1586, %v1619
        %v1652 = vmax.f32 %v1587, %v1620
        %v1653 = vmax.f32 %v1588, %v1621
        %v1654 = vmax.f32 %v1589, %v1622
        %v1655 = vmax.f32 %v1590, %v1623
        %v1656 = vmax.f32 %v1591, %v1624
        %s1657 = scalar_lea.vmem [#allocation2], 96
        %v1658 = vld [vmem:[%s1657 + $0x8] sm:$0xff]
        %v1659 = vld [vmem:[%s1657 + $0x10] sm:$0xff]
        %v1660 = vld [vmem:[%s1657 + $0x28] sm:$0xff]
        %v1661 = vld [vmem:[%s1657 + $0x30] sm:$0xff]
        %v1662 = vld [vmem:[%s1657 + $0x48] sm:$0xff]
        %v1663 = vld [vmem:[%s1657 + $0x50] sm:$0xff]
        %v1664 = vld [vmem:[%s1657 + $0x68] sm:$0xff]
        %v1665 = vld [vmem:[%s1657 + $0x70] sm:$0xff]
        %v1666 = vld [vmem:[%s1657 + $0x88] sm:$0xff]
        %v1667 = vld [vmem:[%s1657 + $0x90] sm:$0xff]
        %v1668 = vld [vmem:[%s1657 + $0xa8] sm:$0xff]
        %v1669 = vld [vmem:[%s1657 + $0xb0] sm:$0xff]
        %v1670 = vld [vmem:[%s1657 + $0xc8] sm:$0xff]
        %v1671 = vld [vmem:[%s1657 + $0xd0] sm:$0xff]
        %v1672 = vld [vmem:[%s1657 + $0xe8] sm:$0xff]
        %v1673 = vld [vmem:[%s1657 + $0xf0] sm:$0xff]
        %v1674 = vld [vmem:[%s1657 + $0x108] sm:$0xff]
        %v1675 = vld [vmem:[%s1657 + $0x110] sm:$0xff]
        %v1676 = vld [vmem:[%s1657 + $0x128] sm:$0xff]
        %v1677 = vld [vmem:[%s1657 + $0x130] sm:$0xff]
        %v1678 = vld [vmem:[%s1657 + $0x148] sm:$0xff]
        %v1679 = vld [vmem:[%s1657 + $0x150] sm:$0xff]
        %v1680 = vld [vmem:[%s1657 + $0x168] sm:$0xff]
        %v1681 = vld [vmem:[%s1657 + $0x170] sm:$0xff]
        %v1682 = vld [vmem:[%s1657 + $0x188] sm:$0xff]
        %v1683 = vld [vmem:[%s1657 + $0x190] sm:$0xff]
        %v1684 = vld [vmem:[%s1657 + $0x1a8] sm:$0xff]
        %v1685 = vld [vmem:[%s1657 + $0x1b0] sm:$0xff]
        %v1686 = vld [vmem:[%s1657 + $0x1c8] sm:$0xff]
        %v1687 = vld [vmem:[%s1657 + $0x1d0] sm:$0xff]
        %v1688 = vld [vmem:[%s1657 + $0x1e8] sm:$0xff]
        %v1689 = vld [vmem:[%s1657 + $0x1f0] sm:$0xff]
        %v1690 = vmax.f32 %v1625, %v1658
        %v1691 = vmax.f32 %v1626, %v1659
        %v1692 = vmax.f32 %v1627, %v1660
        %v1693 = vmax.f32 %v1628, %v1661
        %v1694 = vmax.f32 %v1629, %v1662
        %v1695 = vmax.f32 %v1630, %v1663
        %v1696 = vmax.f32 %v1631, %v1664
        %v1697 = vmax.f32 %v1632, %v1665
        %v1698 = vmax.f32 %v1633, %v1666
        %v1699 = vmax.f32 %v1634, %v1667
        %v1700 = vmax.f32 %v1635, %v1668
        %v1701 = vmax.f32 %v1636, %v1669
        %v1702 = vmax.f32 %v1637, %v1670
        %v1703 = vmax.f32 %v1638, %v1671
        %v1704 = vmax.f32 %v1639, %v1672
        %v1705 = vmax.f32 %v1640, %v1673
        %v1706 = vmax.f32 %v1641, %v1674
        %v1707 = vmax.f32 %v1642, %v1675
        %v1708 = vmax.f32 %v1643, %v1676
        %v1709 = vmax.f32 %v1644, %v1677
        %v1710 = vmax.f32 %v1645, %v1678
        %v1711 = vmax.f32 %v1646, %v1679
        %v1712 = vmax.f32 %v1647, %v1680
        %v1713 = vmax.f32 %v1648, %v1681
        %v1714 = vmax.f32 %v1649, %v1682
        %v1715 = vmax.f32 %v1650, %v1683
        %v1716 = vmax.f32 %v1651, %v1684
        %v1717 = vmax.f32 %v1652, %v1685
        %v1718 = vmax.f32 %v1653, %v1686
        %v1719 = vmax.f32 %v1654, %v1687
        %v1720 = vmax.f32 %v1655, %v1688
        %v1721 = vmax.f32 %v1656, %v1689
        %s1722 = scalar_lea.vmem [#allocation2], 128
        %v1723 = vld [vmem:[%s1722 + $0x8] sm:$0xff]
        %v1724 = vld [vmem:[%s1722 + $0x10] sm:$0xff]
        %v1725 = vld [vmem:[%s1722 + $0x28] sm:$0xff]
        %v1726 = vld [vmem:[%s1722 + $0x30] sm:$0xff]
        %v1727 = vld [vmem:[%s1722 + $0x48] sm:$0xff]
        %v1728 = vld [vmem:[%s1722 + $0x50] sm:$0xff]
        %v1729 = vld [vmem:[%s1722 + $0x68] sm:$0xff]
        %v1730 = vld [vmem:[%s1722 + $0x70] sm:$0xff]
        %v1731 = vld [vmem:[%s1722 + $0x88] sm:$0xff]
        %v1732 = vld [vmem:[%s1722 + $0x90] sm:$0xff]
        %v1733 = vld [vmem:[%s1722 + $0xa8] sm:$0xff]
        %v1734 = vld [vmem:[%s1722 + $0xb0] sm:$0xff]
        %v1735 = vld [vmem:[%s1722 + $0xc8] sm:$0xff]
        %v1736 = vld [vmem:[%s1722 + $0xd0] sm:$0xff]
        %v1737 = vld [vmem:[%s1722 + $0xe8] sm:$0xff]
        %v1738 = vld [vmem:[%s1722 + $0xf0] sm:$0xff]
        %v1739 = vld [vmem:[%s1722 + $0x108] sm:$0xff]
        %v1740 = vld [vmem:[%s1722 + $0x110] sm:$0xff]
        %v1741 = vld [vmem:[%s1722 + $0x128] sm:$0xff]
        %v1742 = vld [vmem:[%s1722 + $0x130] sm:$0xff]
        %v1743 = vld [vmem:[%s1722 + $0x148] sm:$0xff]
        %v1744 = vld [vmem:[%s1722 + $0x150] sm:$0xff]
        %v1745 = vld [vmem:[%s1722 + $0x168] sm:$0xff]
        %v1746 = vld [vmem:[%s1722 + $0x170] sm:$0xff]
        %v1747 = vld [vmem:[%s1722 + $0x188] sm:$0xff]
        %v1748 = vld [vmem:[%s1722 + $0x190] sm:$0xff]
        %v1749 = vld [vmem:[%s1722 + $0x1a8] sm:$0xff]
        %v1750 = vld [vmem:[%s1722 + $0x1b0] sm:$0xff]
        %v1751 = vld [vmem:[%s1722 + $0x1c8] sm:$0xff]
        %v1752 = vld [vmem:[%s1722 + $0x1d0] sm:$0xff]
        %v1753 = vld [vmem:[%s1722 + $0x1e8] sm:$0xff]
        %v1754 = vld [vmem:[%s1722 + $0x1f0] sm:$0xff]
        %v1755 = vmax.f32 %v1690, %v1723
        %v1756 = vmax.f32 %v1691, %v1724
        %v1757 = vmax.f32 %v1692, %v1725
        %v1758 = vmax.f32 %v1693, %v1726
        %v1759 = vmax.f32 %v1694, %v1727
        %v1760 = vmax.f32 %v1695, %v1728
        %v1761 = vmax.f32 %v1696, %v1729
        %v1762 = vmax.f32 %v1697, %v1730
        %v1763 = vmax.f32 %v1698, %v1731
        %v1764 = vmax.f32 %v1699, %v1732
        %v1765 = vmax.f32 %v1700, %v1733
        %v1766 = vmax.f32 %v1701, %v1734
        %v1767 = vmax.f32 %v1702, %v1735
        %v1768 = vmax.f32 %v1703, %v1736
        %v1769 = vmax.f32 %v1704, %v1737
        %v1770 = vmax.f32 %v1705, %v1738
        %v1771 = vmax.f32 %v1706, %v1739
        %v1772 = vmax.f32 %v1707, %v1740
        %v1773 = vmax.f32 %v1708, %v1741
        %v1774 = vmax.f32 %v1709, %v1742
        %v1775 = vmax.f32 %v1710, %v1743
        %v1776 = vmax.f32 %v1711, %v1744
        %v1777 = vmax.f32 %v1712, %v1745
        %v1778 = vmax.f32 %v1713, %v1746
        %v1779 = vmax.f32 %v1714, %v1747
        %v1780 = vmax.f32 %v1715, %v1748
        %v1781 = vmax.f32 %v1716, %v1749
        %v1782 = vmax.f32 %v1717, %v1750
        %v1783 = vmax.f32 %v1718, %v1751
        %v1784 = vmax.f32 %v1719, %v1752
        %v1785 = vmax.f32 %v1720, %v1753
        %v1786 = vmax.f32 %v1721, %v1754
        %v1787 = vpack.c.bf16 %v1755, %v1755
        %v1788 = vpack.c.bf16 %v1756, %v1756
        %v1789 = vpack.c.bf16 %v1757, %v1757
        %v1790 = vpack.c.bf16 %v1758, %v1758
        %v1791 = vpack.c.bf16 %v1759, %v1759
        %v1792 = vpack.c.bf16 %v1760, %v1760
        %v1793 = vpack.c.bf16 %v1761, %v1761
        %v1794 = vpack.c.bf16 %v1762, %v1762
        %v1795 = vpack.c.bf16 %v1763, %v1763
        %v1796 = vpack.c.bf16 %v1764, %v1764
        %v1797 = vpack.c.bf16 %v1765, %v1765
        %v1798 = vpack.c.bf16 %v1766, %v1766
        %v1799 = vpack.c.bf16 %v1767, %v1767
        %v1800 = vpack.c.bf16 %v1768, %v1768
        %v1801 = vpack.c.bf16 %v1769, %v1769
        %v1802 = vpack.c.bf16 %v1770, %v1770
        %v1803 = vpack.c.bf16 %v1771, %v1771
        %v1804 = vpack.c.bf16 %v1772, %v1772
        %v1805 = vpack.c.bf16 %v1773, %v1773
        %v1806 = vpack.c.bf16 %v1774, %v1774
        %v1807 = vpack.c.bf16 %v1775, %v1775
        %v1808 = vpack.c.bf16 %v1776, %v1776
        %v1809 = vpack.c.bf16 %v1777, %v1777
        %v1810 = vpack.c.bf16 %v1778, %v1778
        %v1811 = vpack.c.bf16 %v1779, %v1779
        %v1812 = vpack.c.bf16 %v1780, %v1780
        %v1813 = vpack.c.bf16 %v1781, %v1781
        %v1814 = vpack.c.bf16 %v1782, %v1782
        %v1815 = vpack.c.bf16 %v1783, %v1783
        %v1816 = vpack.c.bf16 %v1784, %v1784
        %v1817 = vpack.c.bf16 %v1785, %v1785
        %v1818 = vpack.c.bf16 %v1786, %v1786
        %1851 = vrot.lane.b32.xlu0 %v1787, 16
        %v1852 = vpop.permute.xlu0 %1851
        %1853 = vrot.lane.b32.xlu0 %v1788, 16
        %v1854 = vpop.permute.xlu0 %1853
        %1855 = vrot.lane.b32.xlu0 %v1789, 16
        %v1856 = vpop.permute.xlu0 %1855
        %1857 = vrot.lane.b32.xlu0 %v1790, 16
        %v1858 = vpop.permute.xlu0 %1857
        %1859 = vrot.lane.b32.xlu0 %v1791, 16
        %v1860 = vpop.permute.xlu0 %1859
        %1861 = vrot.lane.b32.xlu0 %v1792, 16
        %v1862 = vpop.permute.xlu0 %1861
        %1863 = vrot.lane.b32.xlu0 %v1793, 16
        %v1864 = vpop.permute.xlu0 %1863
        %1865 = vrot.lane.b32.xlu0 %v1794, 16
        %v1866 = vpop.permute.xlu0 %1865
        %1867 = vrot.lane.b32.xlu0 %v1795, 16
        %v1868 = vpop.permute.xlu0 %1867
        %1869 = vrot.lane.b32.xlu0 %v1796, 16
        %v1870 = vpop.permute.xlu0 %1869
        %1871 = vrot.lane.b32.xlu0 %v1797, 16
        %v1872 = vpop.permute.xlu0 %1871
        %1873 = vrot.lane.b32.xlu0 %v1798, 16
        %v1874 = vpop.permute.xlu0 %1873
        %1875 = vrot.lane.b32.xlu0 %v1799, 16
        %v1876 = vpop.permute.xlu0 %1875
        %1877 = vrot.lane.b32.xlu0 %v1800, 16
        %v1878 = vpop.permute.xlu0 %1877
        %1879 = vrot.lane.b32.xlu0 %v1801, 16
        %v1880 = vpop.permute.xlu0 %1879
        %1881 = vrot.lane.b32.xlu0 %v1802, 16
        %v1882 = vpop.permute.xlu0 %1881
        %1883 = vrot.lane.b32.xlu0 %v1803, 16
        %v1884 = vpop.permute.xlu0 %1883
        %1885 = vrot.lane.b32.xlu0 %v1804, 16
        %v1886 = vpop.permute.xlu0 %1885
        %1887 = vrot.lane.b32.xlu0 %v1805, 16
        %v1888 = vpop.permute.xlu0 %1887
        %1889 = vrot.lane.b32.xlu0 %v1806, 16
        %v1890 = vpop.permute.xlu0 %1889
        %1891 = vrot.lane.b32.xlu0 %v1807, 16
        %v1892 = vpop.permute.xlu0 %1891
        %1893 = vrot.lane.b32.xlu0 %v1808, 16
        %v1894 = vpop.permute.xlu0 %1893
        %1895 = vrot.lane.b32.xlu0 %v1809, 16
        %v1896 = vpop.permute.xlu0 %1895
        %1897 = vrot.lane.b32.xlu0 %v1810, 16
        %v1898 = vpop.permute.xlu0 %1897
        %1899 = vrot.lane.b32.xlu0 %v1811, 16
        %v1900 = vpop.permute.xlu0 %1899
        %1901 = vrot.lane.b32.xlu0 %v1812, 16
        %v1902 = vpop.permute.xlu0 %1901
        %1903 = vrot.lane.b32.xlu0 %v1813, 16
        %v1904 = vpop.permute.xlu0 %1903
        %1905 = vrot.lane.b32.xlu0 %v1814, 16
        %v1906 = vpop.permute.xlu0 %1905
        %1907 = vrot.lane.b32.xlu0 %v1815, 16
        %v1908 = vpop.permute.xlu0 %1907
        %1909 = vrot.lane.b32.xlu0 %v1816, 16
        %v1910 = vpop.permute.xlu0 %1909
        %1911 = vrot.lane.b32.xlu0 %v1817, 16
        %v1912 = vpop.permute.xlu0 %1911
        %1913 = vrot.lane.b32.xlu0 %v1818, 16
        %v1914 = vpop.permute.xlu0 %1913
        %vm1947 = vcmask 257152
        %1948 = vst.msk [vmem:[#allocation3] sm:$0xf] %vm1947, %v1852
        %1949 = vst.msk [vmem:[#allocation3 + $0x4] sm:$0xf] %vm1947, %v1854
        %1950 = vst.msk [vmem:[#allocation3 + $0x8] sm:$0xf] %vm1947, %v1856
        %1951 = vst.msk [vmem:[#allocation3 + $0xc] sm:$0xf] %vm1947, %v1858
        %1952 = vst.msk [vmem:[#allocation3 + $0x10] sm:$0xf] %vm1947, %v1860
        %1953 = vst.msk [vmem:[#allocation3 + $0x14] sm:$0xf] %vm1947, %v1862
        %1954 = vst.msk [vmem:[#allocation3 + $0x18] sm:$0xf] %vm1947, %v1864
        %1955 = vst.msk [vmem:[#allocation3 + $0x1c] sm:$0xf] %vm1947, %v1866
        %1956 = vst.msk [vmem:[#allocation3 + $0x20] sm:$0xf] %vm1947, %v1868
        %1957 = vst.msk [vmem:[#allocation3 + $0x24] sm:$0xf] %vm1947, %v1870
        %1958 = vst.msk [vmem:[#allocation3 + $0x28] sm:$0xf] %vm1947, %v1872
        %1959 = vst.msk [vmem:[#allocation3 + $0x2c] sm:$0xf] %vm1947, %v1874
        %1960 = vst.msk [vmem:[#allocation3 + $0x30] sm:$0xf] %vm1947, %v1876
        %1961 = vst.msk [vmem:[#allocation3 + $0x34] sm:$0xf] %vm1947, %v1878
        %1962 = vst.msk [vmem:[#allocation3 + $0x38] sm:$0xf] %vm1947, %v1880
        %1963 = vst.msk [vmem:[#allocation3 + $0x3c] sm:$0xf] %vm1947, %v1882
        %1964 = vst.msk [vmem:[#allocation3 + $0x40] sm:$0xf] %vm1947, %v1884
        %1965 = vst.msk [vmem:[#allocation3 + $0x44] sm:$0xf] %vm1947, %v1886
        %1966 = vst.msk [vmem:[#allocation3 + $0x48] sm:$0xf] %vm1947, %v1888
        %1967 = vst.msk [vmem:[#allocation3 + $0x4c] sm:$0xf] %vm1947, %v1890
        %1968 = vst.msk [vmem:[#allocation3 + $0x50] sm:$0xf] %vm1947, %v1892
        %1969 = vst.msk [vmem:[#allocation3 + $0x54] sm:$0xf] %vm1947, %v1894
        %1970 = vst.msk [vmem:[#allocation3 + $0x58] sm:$0xf] %vm1947, %v1896
        %1971 = vst.msk [vmem:[#allocation3 + $0x5c] sm:$0xf] %vm1947, %v1898
        %1972 = vst.msk [vmem:[#allocation3 + $0x60] sm:$0xf] %vm1947, %v1900
        %1973 = vst.msk [vmem:[#allocation3 + $0x64] sm:$0xf] %vm1947, %v1902
        %1974 = vst.msk [vmem:[#allocation3 + $0x68] sm:$0xf] %vm1947, %v1904
        %1975 = vst.msk [vmem:[#allocation3 + $0x6c] sm:$0xf] %vm1947, %v1906
        %1976 = vst.msk [vmem:[#allocation3 + $0x70] sm:$0xf] %vm1947, %v1908
        %1977 = vst.msk [vmem:[#allocation3 + $0x74] sm:$0xf] %vm1947, %v1910
        %1978 = vst.msk [vmem:[#allocation3 + $0x78] sm:$0xf] %vm1947, %v1912
        %1979 = vst.msk [vmem:[#allocation3 + $0x7c] sm:$0xf] %vm1947, %v1914
        %1980 = vst.msk [vmem:[%s264 + $0x8] sm:$0xff] %vm246, %v1755
        %1981 = vst.msk [vmem:[%s264 + $0x10] sm:$0xff] %vm246, %v1756
        %1982 = vst.msk [vmem:[%s264 + $0x28] sm:$0xff] %vm246, %v1757
        %1983 = vst.msk [vmem:[%s264 + $0x30] sm:$0xff] %vm246, %v1758
        %1984 = vst.msk [vmem:[%s264 + $0x48] sm:$0xff] %vm246, %v1759
        %1985 = vst.msk [vmem:[%s264 + $0x50] sm:$0xff] %vm246, %v1760
        %1986 = vst.msk [vmem:[%s264 + $0x68] sm:$0xff] %vm246, %v1761
        %1987 = vst.msk [vmem:[%s264 + $0x70] sm:$0xff] %vm246, %v1762
        %1988 = vst.msk [vmem:[%s264 + $0x88] sm:$0xff] %vm246, %v1763
        %1989 = vst.msk [vmem:[%s264 + $0x90] sm:$0xff] %vm246, %v1764
        %1990 = vst.msk [vmem:[%s264 + $0xa8] sm:$0xff] %vm246, %v1765
        %1991 = vst.msk [vmem:[%s264 + $0xb0] sm:$0xff] %vm246, %v1766
        %1992 = vst.msk [vmem:[%s264 + $0xc8] sm:$0xff] %vm246, %v1767
        %1993 = vst.msk [vmem:[%s264 + $0xd0] sm:$0xff] %vm246, %v1768
        %1994 = vst.msk [vmem:[%s264 + $0xe8] sm:$0xff] %vm246, %v1769
        %1995 = vst.msk [vmem:[%s264 + $0xf0] sm:$0xff] %vm246, %v1770
        %1996 = vst.msk [vmem:[%s264 + $0x108] sm:$0xff] %vm246, %v1771
        %1997 = vst.msk [vmem:[%s264 + $0x110] sm:$0xff] %vm246, %v1772
        %1998 = vst.msk [vmem:[%s264 + $0x128] sm:$0xff] %vm246, %v1773
        %1999 = vst.msk [vmem:[%s264 + $0x130] sm:$0xff] %vm246, %v1774
        %2000 = vst.msk [vmem:[%s264 + $0x148] sm:$0xff] %vm246, %v1775
        %2001 = vst.msk [vmem:[%s264 + $0x150] sm:$0xff] %vm246, %v1776
        %2002 = vst.msk [vmem:[%s264 + $0x168] sm:$0xff] %vm246, %v1777
        %2003 = vst.msk [vmem:[%s264 + $0x170] sm:$0xff] %vm246, %v1778
        %2004 = vst.msk [vmem:[%s264 + $0x188] sm:$0xff] %vm246, %v1779
        %2005 = vst.msk [vmem:[%s264 + $0x190] sm:$0xff] %vm246, %v1780
        %2006 = vst.msk [vmem:[%s264 + $0x1a8] sm:$0xff] %vm246, %v1781
        %2007 = vst.msk [vmem:[%s264 + $0x1b0] sm:$0xff] %vm246, %v1782
        %2008 = vst.msk [vmem:[%s264 + $0x1c8] sm:$0xff] %vm246, %v1783
        %2009 = vst.msk [vmem:[%s264 + $0x1d0] sm:$0xff] %vm246, %v1784
        %2010 = vst.msk [vmem:[%s264 + $0x1e8] sm:$0xff] %vm246, %v1785
        %2011 = vst.msk [vmem:[%s264 + $0x1f0] sm:$0xff] %vm246, %v1786
        %v2012 = vld [vmem:[%s264 + $0x6] sm:$0xff]
        %v2013 = vld [vmem:[%s264 + $0xe] sm:$0xff]
        %v2014 = vld [vmem:[%s264 + $0x26] sm:$0xff]
        %v2015 = vld [vmem:[%s264 + $0x2e] sm:$0xff]
        %v2016 = vld [vmem:[%s264 + $0x46] sm:$0xff]
        %v2017 = vld [vmem:[%s264 + $0x4e] sm:$0xff]
        %v2018 = vld [vmem:[%s264 + $0x66] sm:$0xff]
        %v2019 = vld [vmem:[%s264 + $0x6e] sm:$0xff]
        %v2020 = vld [vmem:[%s264 + $0x86] sm:$0xff]
        %v2021 = vld [vmem:[%s264 + $0x8e] sm:$0xff]
        %v2022 = vld [vmem:[%s264 + $0xa6] sm:$0xff]
        %v2023 = vld [vmem:[%s264 + $0xae] sm:$0xff]
        %v2024 = vld [vmem:[%s264 + $0xc6] sm:$0xff]
        %v2025 = vld [vmem:[%s264 + $0xce] sm:$0xff]
        %v2026 = vld [vmem:[%s264 + $0xe6] sm:$0xff]
        %v2027 = vld [vmem:[%s264 + $0xee] sm:$0xff]
        %v2028 = vld [vmem:[%s264 + $0x106] sm:$0xff]
        %v2029 = vld [vmem:[%s264 + $0x10e] sm:$0xff]
        %v2030 = vld [vmem:[%s264 + $0x126] sm:$0xff]
        %v2031 = vld [vmem:[%s264 + $0x12e] sm:$0xff]
        %v2032 = vld [vmem:[%s264 + $0x146] sm:$0xff]
        %v2033 = vld [vmem:[%s264 + $0x14e] sm:$0xff]
        %v2034 = vld [vmem:[%s264 + $0x166] sm:$0xff]
        %v2035 = vld [vmem:[%s264 + $0x16e] sm:$0xff]
        %v2036 = vld [vmem:[%s264 + $0x186] sm:$0xff]
        %v2037 = vld [vmem:[%s264 + $0x18e] sm:$0xff]
        %v2038 = vld [vmem:[%s264 + $0x1a6] sm:$0xff]
        %v2039 = vld [vmem:[%s264 + $0x1ae] sm:$0xff]
        %v2040 = vld [vmem:[%s264 + $0x1c6] sm:$0xff]
        %v2041 = vld [vmem:[%s264 + $0x1ce] sm:$0xff]
        %v2042 = vld [vmem:[%s264 + $0x1e6] sm:$0xff]
        %v2043 = vld [vmem:[%s264 + $0x1ee] sm:$0xff]
        %v2044 = vmax.f32 %v1755, %v2012
        %v2045 = vmax.f32 %v1756, %v2013
        %v2046 = vmax.f32 %v1757, %v2014
        %v2047 = vmax.f32 %v1758, %v2015
        %v2048 = vmax.f32 %v1759, %v2016
        %v2049 = vmax.f32 %v1760, %v2017
        %v2050 = vmax.f32 %v1761, %v2018
        %v2051 = vmax.f32 %v1762, %v2019
        %v2052 = vmax.f32 %v1763, %v2020
        %v2053 = vmax.f32 %v1764, %v2021
        %v2054 = vmax.f32 %v1765, %v2022
        %v2055 = vmax.f32 %v1766, %v2023
        %v2056 = vmax.f32 %v1767, %v2024
        %v2057 = vmax.f32 %v1768, %v2025
        %v2058 = vmax.f32 %v1769, %v2026
        %v2059 = vmax.f32 %v1770, %v2027
        %v2060 = vmax.f32 %v1771, %v2028
        %v2061 = vmax.f32 %v1772, %v2029
        %v2062 = vmax.f32 %v1773, %v2030
        %v2063 = vmax.f32 %v1774, %v2031
        %v2064 = vmax.f32 %v1775, %v2032
        %v2065 = vmax.f32 %v1776, %v2033
        %v2066 = vmax.f32 %v1777, %v2034
        %v2067 = vmax.f32 %v1778, %v2035
        %v2068 = vmax.f32 %v1779, %v2036
        %v2069 = vmax.f32 %v1780, %v2037
        %v2070 = vmax.f32 %v1781, %v2038
        %v2071 = vmax.f32 %v1782, %v2039
        %v2072 = vmax.f32 %v1783, %v2040
        %v2073 = vmax.f32 %v1784, %v2041
        %v2074 = vmax.f32 %v1785, %v2042
        %v2075 = vmax.f32 %v1786, %v2043
        %v2076 = vld [vmem:[%s264 + $0x7] sm:$0xff]
        %v2077 = vld [vmem:[%s264 + $0xf] sm:$0xff]
        %v2078 = vld [vmem:[%s264 + $0x27] sm:$0xff]
        %v2079 = vld [vmem:[%s264 + $0x2f] sm:$0xff]
        %v2080 = vld [vmem:[%s264 + $0x47] sm:$0xff]
        %v2081 = vld [vmem:[%s264 + $0x4f] sm:$0xff]
        %v2082 = vld [vmem:[%s264 + $0x67] sm:$0xff]
        %v2083 = vld [vmem:[%s264 + $0x6f] sm:$0xff]
        %v2084 = vld [vmem:[%s264 + $0x87] sm:$0xff]
        %v2085 = vld [vmem:[%s264 + $0x8f] sm:$0xff]
        %v2086 = vld [vmem:[%s264 + $0xa7] sm:$0xff]
        %v2087 = vld [vmem:[%s264 + $0xaf] sm:$0xff]
        %v2088 = vld [vmem:[%s264 + $0xc7] sm:$0xff]
        %v2089 = vld [vmem:[%s264 + $0xcf] sm:$0xff]
        %v2090 = vld [vmem:[%s264 + $0xe7] sm:$0xff]
        %v2091 = vld [vmem:[%s264 + $0xef] sm:$0xff]
        %v2092 = vld [vmem:[%s264 + $0x107] sm:$0xff]
        %v2093 = vld [vmem:[%s264 + $0x10f] sm:$0xff]
        %v2094 = vld [vmem:[%s264 + $0x127] sm:$0xff]
        %v2095 = vld [vmem:[%s264 + $0x12f] sm:$0xff]
        %v2096 = vld [vmem:[%s264 + $0x147] sm:$0xff]
        %v2097 = vld [vmem:[%s264 + $0x14f] sm:$0xff]
        %v2098 = vld [vmem:[%s264 + $0x167] sm:$0xff]
        %v2099 = vld [vmem:[%s264 + $0x16f] sm:$0xff]
        %v2100 = vld [vmem:[%s264 + $0x187] sm:$0xff]
        %v2101 = vld [vmem:[%s264 + $0x18f] sm:$0xff]
        %v2102 = vld [vmem:[%s264 + $0x1a7] sm:$0xff]
        %v2103 = vld [vmem:[%s264 + $0x1af] sm:$0xff]
        %v2104 = vld [vmem:[%s264 + $0x1c7] sm:$0xff]
        %v2105 = vld [vmem:[%s264 + $0x1cf] sm:$0xff]
        %v2106 = vld [vmem:[%s264 + $0x1e7] sm:$0xff]
        %v2107 = vld [vmem:[%s264 + $0x1ef] sm:$0xff]
        %v2108 = vmax.f32 %v2044, %v2076
        %v2109 = vmax.f32 %v2045, %v2077
        %v2110 = vmax.f32 %v2046, %v2078
        %v2111 = vmax.f32 %v2047, %v2079
        %v2112 = vmax.f32 %v2048, %v2080
        %v2113 = vmax.f32 %v2049, %v2081
        %v2114 = vmax.f32 %v2050, %v2082
        %v2115 = vmax.f32 %v2051, %v2083
        %v2116 = vmax.f32 %v2052, %v2084
        %v2117 = vmax.f32 %v2053, %v2085
        %v2118 = vmax.f32 %v2054, %v2086
        %v2119 = vmax.f32 %v2055, %v2087
        %v2120 = vmax.f32 %v2056, %v2088
        %v2121 = vmax.f32 %v2057, %v2089
        %v2122 = vmax.f32 %v2058, %v2090
        %v2123 = vmax.f32 %v2059, %v2091
        %v2124 = vmax.f32 %v2060, %v2092
        %v2125 = vmax.f32 %v2061, %v2093
        %v2126 = vmax.f32 %v2062, %v2094
        %v2127 = vmax.f32 %v2063, %v2095
        %v2128 = vmax.f32 %v2064, %v2096
        %v2129 = vmax.f32 %v2065, %v2097
        %v2130 = vmax.f32 %v2066, %v2098
        %v2131 = vmax.f32 %v2067, %v2099
        %v2132 = vmax.f32 %v2068, %v2100
        %v2133 = vmax.f32 %v2069, %v2101
        %v2134 = vmax.f32 %v2070, %v2102
        %v2135 = vmax.f32 %v2071, %v2103
        %v2136 = vmax.f32 %v2072, %v2104
        %v2137 = vmax.f32 %v2073, %v2105
        %v2138 = vmax.f32 %v2074, %v2106
        %v2139 = vmax.f32 %v2075, %v2107
        %v2140 = vld [vmem:[%s264 + $0x9] sm:$0xff]
        %v2141 = vld [vmem:[%s264 + $0x11] sm:$0xff]
        %v2142 = vld [vmem:[%s264 + $0x29] sm:$0xff]
        %v2143 = vld [vmem:[%s264 + $0x31] sm:$0xff]
        %v2144 = vld [vmem:[%s264 + $0x49] sm:$0xff]
        %v2145 = vld [vmem:[%s264 + $0x51] sm:$0xff]
        %v2146 = vld [vmem:[%s264 + $0x69] sm:$0xff]
        %v2147 = vld [vmem:[%s264 + $0x71] sm:$0xff]
        %v2148 = vld [vmem:[%s264 + $0x89] sm:$0xff]
        %v2149 = vld [vmem:[%s264 + $0x91] sm:$0xff]
        %v2150 = vld [vmem:[%s264 + $0xa9] sm:$0xff]
        %v2151 = vld [vmem:[%s264 + $0xb1] sm:$0xff]
        %v2152 = vld [vmem:[%s264 + $0xc9] sm:$0xff]
        %v2153 = vld [vmem:[%s264 + $0xd1] sm:$0xff]
        %v2154 = vld [vmem:[%s264 + $0xe9] sm:$0xff]
        %v2155 = vld [vmem:[%s264 + $0xf1] sm:$0xff]
        %v2156 = vld [vmem:[%s264 + $0x109] sm:$0xff]
        %v2157 = vld [vmem:[%s264 + $0x111] sm:$0xff]
        %v2158 = vld [vmem:[%s264 + $0x129] sm:$0xff]
        %v2159 = vld [vmem:[%s264 + $0x131] sm:$0xff]
        %v2160 = vld [vmem:[%s264 + $0x149] sm:$0xff]
        %v2161 = vld [vmem:[%s264 + $0x151] sm:$0xff]
        %v2162 = vld [vmem:[%s264 + $0x169] sm:$0xff]
        %v2163 = vld [vmem:[%s264 + $0x171] sm:$0xff]
        %v2164 = vld [vmem:[%s264 + $0x189] sm:$0xff]
        %v2165 = vld [vmem:[%s264 + $0x191] sm:$0xff]
        %v2166 = vld [vmem:[%s264 + $0x1a9] sm:$0xff]
        %v2167 = vld [vmem:[%s264 + $0x1b1] sm:$0xff]
        %v2168 = vld [vmem:[%s264 + $0x1c9] sm:$0xff]
        %v2169 = vld [vmem:[%s264 + $0x1d1] sm:$0xff]
        %v2170 = vld [vmem:[%s264 + $0x1e9] sm:$0xff]
        %v2171 = vld [vmem:[%s264 + $0x1f1] sm:$0xff]
        %v2172 = vmax.f32 %v2108, %v2140
        %v2173 = vmax.f32 %v2109, %v2141
        %v2174 = vmax.f32 %v2110, %v2142
        %v2175 = vmax.f32 %v2111, %v2143
        %v2176 = vmax.f32 %v2112, %v2144
        %v2177 = vmax.f32 %v2113, %v2145
        %v2178 = vmax.f32 %v2114, %v2146
        %v2179 = vmax.f32 %v2115, %v2147
        %v2180 = vmax.f32 %v2116, %v2148
        %v2181 = vmax.f32 %v2117, %v2149
        %v2182 = vmax.f32 %v2118, %v2150
        %v2183 = vmax.f32 %v2119, %v2151
        %v2184 = vmax.f32 %v2120, %v2152
        %v2185 = vmax.f32 %v2121, %v2153
        %v2186 = vmax.f32 %v2122, %v2154
        %v2187 = vmax.f32 %v2123, %v2155
        %v2188 = vmax.f32 %v2124, %v2156
        %v2189 = vmax.f32 %v2125, %v2157
        %v2190 = vmax.f32 %v2126, %v2158
        %v2191 = vmax.f32 %v2127, %v2159
        %v2192 = vmax.f32 %v2128, %v2160
        %v2193 = vmax.f32 %v2129, %v2161
        %v2194 = vmax.f32 %v2130, %v2162
        %v2195 = vmax.f32 %v2131, %v2163
        %v2196 = vmax.f32 %v2132, %v2164
        %v2197 = vmax.f32 %v2133, %v2165
        %v2198 = vmax.f32 %v2134, %v2166
        %v2199 = vmax.f32 %v2135, %v2167
        %v2200 = vmax.f32 %v2136, %v2168
        %v2201 = vmax.f32 %v2137, %v2169
        %v2202 = vmax.f32 %v2138, %v2170
        %v2203 = vmax.f32 %v2139, %v2171
        %v2204 = vld [vmem:[%s264 + $0xa] sm:$0xff]
        %v2205 = vld [vmem:[%s264 + $0x12] sm:$0xff]
        %v2206 = vld [vmem:[%s264 + $0x2a] sm:$0xff]
        %v2207 = vld [vmem:[%s264 + $0x32] sm:$0xff]
        %v2208 = vld [vmem:[%s264 + $0x4a] sm:$0xff]
        %v2209 = vld [vmem:[%s264 + $0x52] sm:$0xff]
        %v2210 = vld [vmem:[%s264 + $0x6a] sm:$0xff]
        %v2211 = vld [vmem:[%s264 + $0x72] sm:$0xff]
        %v2212 = vld [vmem:[%s264 + $0x8a] sm:$0xff]
        %v2213 = vld [vmem:[%s264 + $0x92] sm:$0xff]
        %v2214 = vld [vmem:[%s264 + $0xaa] sm:$0xff]
        %v2215 = vld [vmem:[%s264 + $0xb2] sm:$0xff]
        %v2216 = vld [vmem:[%s264 + $0xca] sm:$0xff]
        %v2217 = vld [vmem:[%s264 + $0xd2] sm:$0xff]
        %v2218 = vld [vmem:[%s264 + $0xea] sm:$0xff]
        %v2219 = vld [vmem:[%s264 + $0xf2] sm:$0xff]
        %v2220 = vld [vmem:[%s264 + $0x10a] sm:$0xff]
        %v2221 = vld [vmem:[%s264 + $0x112] sm:$0xff]
        %v2222 = vld [vmem:[%s264 + $0x12a] sm:$0xff]
        %v2223 = vld [vmem:[%s264 + $0x132] sm:$0xff]
        %v2224 = vld [vmem:[%s264 + $0x14a] sm:$0xff]
        %v2225 = vld [vmem:[%s264 + $0x152] sm:$0xff]
        %v2226 = vld [vmem:[%s264 + $0x16a] sm:$0xff]
        %v2227 = vld [vmem:[%s264 + $0x172] sm:$0xff]
        %v2228 = vld [vmem:[%s264 + $0x18a] sm:$0xff]
        %v2229 = vld [vmem:[%s264 + $0x192] sm:$0xff]
        %v2230 = vld [vmem:[%s264 + $0x1aa] sm:$0xff]
        %v2231 = vld [vmem:[%s264 + $0x1b2] sm:$0xff]
        %v2232 = vld [vmem:[%s264 + $0x1ca] sm:$0xff]
        %v2233 = vld [vmem:[%s264 + $0x1d2] sm:$0xff]
        %v2234 = vld [vmem:[%s264 + $0x1ea] sm:$0xff]
        %v2235 = vld [vmem:[%s264 + $0x1f2] sm:$0xff]
        %v2236 = vmax.f32 %v2172, %v2204
        %v2237 = vmax.f32 %v2173, %v2205
        %v2238 = vmax.f32 %v2174, %v2206
        %v2239 = vmax.f32 %v2175, %v2207
        %v2240 = vmax.f32 %v2176, %v2208
        %v2241 = vmax.f32 %v2177, %v2209
        %v2242 = vmax.f32 %v2178, %v2210
        %v2243 = vmax.f32 %v2179, %v2211
        %v2244 = vmax.f32 %v2180, %v2212
        %v2245 = vmax.f32 %v2181, %v2213
        %v2246 = vmax.f32 %v2182, %v2214
        %v2247 = vmax.f32 %v2183, %v2215
        %v2248 = vmax.f32 %v2184, %v2216
        %v2249 = vmax.f32 %v2185, %v2217
        %v2250 = vmax.f32 %v2186, %v2218
        %v2251 = vmax.f32 %v2187, %v2219
        %v2252 = vmax.f32 %v2188, %v2220
        %v2253 = vmax.f32 %v2189, %v2221
        %v2254 = vmax.f32 %v2190, %v2222
        %v2255 = vmax.f32 %v2191, %v2223
        %v2256 = vmax.f32 %v2192, %v2224
        %v2257 = vmax.f32 %v2193, %v2225
        %v2258 = vmax.f32 %v2194, %v2226
        %v2259 = vmax.f32 %v2195, %v2227
        %v2260 = vmax.f32 %v2196, %v2228
        %v2261 = vmax.f32 %v2197, %v2229
        %v2262 = vmax.f32 %v2198, %v2230
        %v2263 = vmax.f32 %v2199, %v2231
        %v2264 = vmax.f32 %v2200, %v2232
        %v2265 = vmax.f32 %v2201, %v2233
        %v2266 = vmax.f32 %v2202, %v2234
        %v2267 = vmax.f32 %v2203, %v2235
        %2268 = vst.msk [vmem:[%s264 + $0x8] sm:$0xff] %vm246, %v2236
        %2269 = vst.msk [vmem:[%s264 + $0x10] sm:$0xff] %vm246, %v2237
        %2270 = vst.msk [vmem:[%s264 + $0x28] sm:$0xff] %vm246, %v2238
        %2271 = vst.msk [vmem:[%s264 + $0x30] sm:$0xff] %vm246, %v2239
        %2272 = vst.msk [vmem:[%s264 + $0x48] sm:$0xff] %vm246, %v2240
        %2273 = vst.msk [vmem:[%s264 + $0x50] sm:$0xff] %vm246, %v2241
        %2274 = vst.msk [vmem:[%s264 + $0x68] sm:$0xff] %vm246, %v2242
        %2275 = vst.msk [vmem:[%s264 + $0x70] sm:$0xff] %vm246, %v2243
        %2276 = vst.msk [vmem:[%s264 + $0x88] sm:$0xff] %vm246, %v2244
        %2277 = vst.msk [vmem:[%s264 + $0x90] sm:$0xff] %vm246, %v2245
        %2278 = vst.msk [vmem:[%s264 + $0xa8] sm:$0xff] %vm246, %v2246
        %2279 = vst.msk [vmem:[%s264 + $0xb0] sm:$0xff] %vm246, %v2247
        %2280 = vst.msk [vmem:[%s264 + $0xc8] sm:$0xff] %vm246, %v2248
        %2281 = vst.msk [vmem:[%s264 + $0xd0] sm:$0xff] %vm246, %v2249
        %2282 = vst.msk [vmem:[%s264 + $0xe8] sm:$0xff] %vm246, %v2250
        %2283 = vst.msk [vmem:[%s264 + $0xf0] sm:$0xff] %vm246, %v2251
        %2284 = vst.msk [vmem:[%s264 + $0x108] sm:$0xff] %vm246, %v2252
        %2285 = vst.msk [vmem:[%s264 + $0x110] sm:$0xff] %vm246, %v2253
        %2286 = vst.msk [vmem:[%s264 + $0x128] sm:$0xff] %vm246, %v2254
        %2287 = vst.msk [vmem:[%s264 + $0x130] sm:$0xff] %vm246, %v2255
        %2288 = vst.msk [vmem:[%s264 + $0x148] sm:$0xff] %vm246, %v2256
        %2289 = vst.msk [vmem:[%s264 + $0x150] sm:$0xff] %vm246, %v2257
        %2290 = vst.msk [vmem:[%s264 + $0x168] sm:$0xff] %vm246, %v2258
        %2291 = vst.msk [vmem:[%s264 + $0x170] sm:$0xff] %vm246, %v2259
        %2292 = vst.msk [vmem:[%s264 + $0x188] sm:$0xff] %vm246, %v2260
        %2293 = vst.msk [vmem:[%s264 + $0x190] sm:$0xff] %vm246, %v2261
        %2294 = vst.msk [vmem:[%s264 + $0x1a8] sm:$0xff] %vm246, %v2262
        %2295 = vst.msk [vmem:[%s264 + $0x1b0] sm:$0xff] %vm246, %v2263
        %2296 = vst.msk [vmem:[%s264 + $0x1c8] sm:$0xff] %vm246, %v2264
        %2297 = vst.msk [vmem:[%s264 + $0x1d0] sm:$0xff] %vm246, %v2265
        %2298 = vst.msk [vmem:[%s264 + $0x1e8] sm:$0xff] %vm246, %v2266
        %2299 = vst.msk [vmem:[%s264 + $0x1f0] sm:$0xff] %vm246, %v2267
        %v2300 = vld [vmem:[#allocation2 + $0x8] sm:$0xff]
        %v2301 = vld [vmem:[#allocation2 + $0x10] sm:$0xff]
        %v2302 = vld [vmem:[#allocation2 + $0x28] sm:$0xff]
        %v2303 = vld [vmem:[#allocation2 + $0x30] sm:$0xff]
        %v2304 = vld [vmem:[#allocation2 + $0x48] sm:$0xff]
        %v2305 = vld [vmem:[#allocation2 + $0x50] sm:$0xff]
        %v2306 = vld [vmem:[#allocation2 + $0x68] sm:$0xff]
        %v2307 = vld [vmem:[#allocation2 + $0x70] sm:$0xff]
        %v2308 = vld [vmem:[#allocation2 + $0x88] sm:$0xff]
        %v2309 = vld [vmem:[#allocation2 + $0x90] sm:$0xff]
        %v2310 = vld [vmem:[#allocation2 + $0xa8] sm:$0xff]
        %v2311 = vld [vmem:[#allocation2 + $0xb0] sm:$0xff]
        %v2312 = vld [vmem:[#allocation2 + $0xc8] sm:$0xff]
        %v2313 = vld [vmem:[#allocation2 + $0xd0] sm:$0xff]
        %v2314 = vld [vmem:[#allocation2 + $0xe8] sm:$0xff]
        %v2315 = vld [vmem:[#allocation2 + $0xf0] sm:$0xff]
        %v2316 = vld [vmem:[#allocation2 + $0x108] sm:$0xff]
        %v2317 = vld [vmem:[#allocation2 + $0x110] sm:$0xff]
        %v2318 = vld [vmem:[#allocation2 + $0x128] sm:$0xff]
        %v2319 = vld [vmem:[#allocation2 + $0x130] sm:$0xff]
        %v2320 = vld [vmem:[#allocation2 + $0x148] sm:$0xff]
        %v2321 = vld [vmem:[#allocation2 + $0x150] sm:$0xff]
        %v2322 = vld [vmem:[#allocation2 + $0x168] sm:$0xff]
        %v2323 = vld [vmem:[#allocation2 + $0x170] sm:$0xff]
        %v2324 = vld [vmem:[#allocation2 + $0x188] sm:$0xff]
        %v2325 = vld [vmem:[#allocation2 + $0x190] sm:$0xff]
        %v2326 = vld [vmem:[#allocation2 + $0x1a8] sm:$0xff]
        %v2327 = vld [vmem:[#allocation2 + $0x1b0] sm:$0xff]
        %v2328 = vld [vmem:[#allocation2 + $0x1c8] sm:$0xff]
        %v2329 = vld [vmem:[#allocation2 + $0x1d0] sm:$0xff]
        %v2330 = vld [vmem:[#allocation2 + $0x1e8] sm:$0xff]
        %v2331 = vld [vmem:[#allocation2 + $0x1f0] sm:$0xff]
        %v2332 = vmax.f32 %v2236, %v2300
        %v2333 = vmax.f32 %v2237, %v2301
        %v2334 = vmax.f32 %v2238, %v2302
        %v2335 = vmax.f32 %v2239, %v2303
        %v2336 = vmax.f32 %v2240, %v2304
        %v2337 = vmax.f32 %v2241, %v2305
        %v2338 = vmax.f32 %v2242, %v2306
        %v2339 = vmax.f32 %v2243, %v2307
        %v2340 = vmax.f32 %v2244, %v2308
        %v2341 = vmax.f32 %v2245, %v2309
        %v2342 = vmax.f32 %v2246, %v2310
        %v2343 = vmax.f32 %v2247, %v2311
        %v2344 = vmax.f32 %v2248, %v2312
        %v2345 = vmax.f32 %v2249, %v2313
        %v2346 = vmax.f32 %v2250, %v2314
        %v2347 = vmax.f32 %v2251, %v2315
        %v2348 = vmax.f32 %v2252, %v2316
        %v2349 = vmax.f32 %v2253, %v2317
        %v2350 = vmax.f32 %v2254, %v2318
        %v2351 = vmax.f32 %v2255, %v2319
        %v2352 = vmax.f32 %v2256, %v2320
        %v2353 = vmax.f32 %v2257, %v2321
        %v2354 = vmax.f32 %v2258, %v2322
        %v2355 = vmax.f32 %v2259, %v2323
        %v2356 = vmax.f32 %v2260, %v2324
        %v2357 = vmax.f32 %v2261, %v2325
        %v2358 = vmax.f32 %v2262, %v2326
        %v2359 = vmax.f32 %v2263, %v2327
        %v2360 = vmax.f32 %v2264, %v2328
        %v2361 = vmax.f32 %v2265, %v2329
        %v2362 = vmax.f32 %v2266, %v2330
        %v2363 = vmax.f32 %v2267, %v2331
        %v2364 = vld [vmem:[%s1592 + $0x8] sm:$0xff]
        %v2365 = vld [vmem:[%s1592 + $0x10] sm:$0xff]
        %v2366 = vld [vmem:[%s1592 + $0x28] sm:$0xff]
        %v2367 = vld [vmem:[%s1592 + $0x30] sm:$0xff]
        %v2368 = vld [vmem:[%s1592 + $0x48] sm:$0xff]
        %v2369 = vld [vmem:[%s1592 + $0x50] sm:$0xff]
        %v2370 = vld [vmem:[%s1592 + $0x68] sm:$0xff]
        %v2371 = vld [vmem:[%s1592 + $0x70] sm:$0xff]
        %v2372 = vld [vmem:[%s1592 + $0x88] sm:$0xff]
        %v2373 = vld [vmem:[%s1592 + $0x90] sm:$0xff]
        %v2374 = vld [vmem:[%s1592 + $0xa8] sm:$0xff]
        %v2375 = vld [vmem:[%s1592 + $0xb0] sm:$0xff]
        %v2376 = vld [vmem:[%s1592 + $0xc8] sm:$0xff]
        %v2377 = vld [vmem:[%s1592 + $0xd0] sm:$0xff]
        %v2378 = vld [vmem:[%s1592 + $0xe8] sm:$0xff]
        %v2379 = vld [vmem:[%s1592 + $0xf0] sm:$0xff]
        %v2380 = vld [vmem:[%s1592 + $0x108] sm:$0xff]
        %v2381 = vld [vmem:[%s1592 + $0x110] sm:$0xff]
        %v2382 = vld [vmem:[%s1592 + $0x128] sm:$0xff]
        %v2383 = vld [vmem:[%s1592 + $0x130] sm:$0xff]
        %v2384 = vld [vmem:[%s1592 + $0x148] sm:$0xff]
        %v2385 = vld [vmem:[%s1592 + $0x150] sm:$0xff]
        %v2386 = vld [vmem:[%s1592 + $0x168] sm:$0xff]
        %v2387 = vld [vmem:[%s1592 + $0x170] sm:$0xff]
        %v2388 = vld [vmem:[%s1592 + $0x188] sm:$0xff]
        %v2389 = vld [vmem:[%s1592 + $0x190] sm:$0xff]
        %v2390 = vld [vmem:[%s1592 + $0x1a8] sm:$0xff]
        %v2391 = vld [vmem:[%s1592 + $0x1b0] sm:$0xff]
        %v2392 = vld [vmem:[%s1592 + $0x1c8] sm:$0xff]
        %v2393 = vld [vmem:[%s1592 + $0x1d0] sm:$0xff]
        %v2394 = vld [vmem:[%s1592 + $0x1e8] sm:$0xff]
        %v2395 = vld [vmem:[%s1592 + $0x1f0] sm:$0xff]
        %v2396 = vmax.f32 %v2332, %v2364
        %v2397 = vmax.f32 %v2333, %v2365
        %v2398 = vmax.f32 %v2334, %v2366
        %v2399 = vmax.f32 %v2335, %v2367
        %v2400 = vmax.f32 %v2336, %v2368
        %v2401 = vmax.f32 %v2337, %v2369
        %v2402 = vmax.f32 %v2338, %v2370
        %v2403 = vmax.f32 %v2339, %v2371
        %v2404 = vmax.f32 %v2340, %v2372
        %v2405 = vmax.f32 %v2341, %v2373
        %v2406 = vmax.f32 %v2342, %v2374
        %v2407 = vmax.f32 %v2343, %v2375
        %v2408 = vmax.f32 %v2344, %v2376
        %v2409 = vmax.f32 %v2345, %v2377
        %v2410 = vmax.f32 %v2346, %v2378
        %v2411 = vmax.f32 %v2347, %v2379
        %v2412 = vmax.f32 %v2348, %v2380
        %v2413 = vmax.f32 %v2349, %v2381
        %v2414 = vmax.f32 %v2350, %v2382
        %v2415 = vmax.f32 %v2351, %v2383
        %v2416 = vmax.f32 %v2352, %v2384
        %v2417 = vmax.f32 %v2353, %v2385
        %v2418 = vmax.f32 %v2354, %v2386
        %v2419 = vmax.f32 %v2355, %v2387
        %v2420 = vmax.f32 %v2356, %v2388
        %v2421 = vmax.f32 %v2357, %v2389
        %v2422 = vmax.f32 %v2358, %v2390
        %v2423 = vmax.f32 %v2359, %v2391
        %v2424 = vmax.f32 %v2360, %v2392
        %v2425 = vmax.f32 %v2361, %v2393
        %v2426 = vmax.f32 %v2362, %v2394
        %v2427 = vmax.f32 %v2363, %v2395
        %v2428 = vld [vmem:[%s1657 + $0x8] sm:$0xff]
        %v2429 = vld [vmem:[%s1657 + $0x10] sm:$0xff]
        %v2430 = vld [vmem:[%s1657 + $0x28] sm:$0xff]
        %v2431 = vld [vmem:[%s1657 + $0x30] sm:$0xff]
        %v2432 = vld [vmem:[%s1657 + $0x48] sm:$0xff]
        %v2433 = vld [vmem:[%s1657 + $0x50] sm:$0xff]
        %v2434 = vld [vmem:[%s1657 + $0x68] sm:$0xff]
        %v2435 = vld [vmem:[%s1657 + $0x70] sm:$0xff]
        %v2436 = vld [vmem:[%s1657 + $0x88] sm:$0xff]
        %v2437 = vld [vmem:[%s1657 + $0x90] sm:$0xff]
        %v2438 = vld [vmem:[%s1657 + $0xa8] sm:$0xff]
        %v2439 = vld [vmem:[%s1657 + $0xb0] sm:$0xff]
        %v2440 = vld [vmem:[%s1657 + $0xc8] sm:$0xff]
        %v2441 = vld [vmem:[%s1657 + $0xd0] sm:$0xff]
        %v2442 = vld [vmem:[%s1657 + $0xe8] sm:$0xff]
        %v2443 = vld [vmem:[%s1657 + $0xf0] sm:$0xff]
        %v2444 = vld [vmem:[%s1657 + $0x108] sm:$0xff]
        %v2445 = vld [vmem:[%s1657 + $0x110] sm:$0xff]
        %v2446 = vld [vmem:[%s1657 + $0x128] sm:$0xff]
        %v2447 = vld [vmem:[%s1657 + $0x130] sm:$0xff]
        %v2448 = vld [vmem:[%s1657 + $0x148] sm:$0xff]
        %v2449 = vld [vmem:[%s1657 + $0x150] sm:$0xff]
        %v2450 = vld [vmem:[%s1657 + $0x168] sm:$0xff]
        %v2451 = vld [vmem:[%s1657 + $0x170] sm:$0xff]
        %v2452 = vld [vmem:[%s1657 + $0x188] sm:$0xff]
        %v2453 = vld [vmem:[%s1657 + $0x190] sm:$0xff]
        %v2454 = vld [vmem:[%s1657 + $0x1a8] sm:$0xff]
        %v2455 = vld [vmem:[%s1657 + $0x1b0] sm:$0xff]
        %v2456 = vld [vmem:[%s1657 + $0x1c8] sm:$0xff]
        %v2457 = vld [vmem:[%s1657 + $0x1d0] sm:$0xff]
        %v2458 = vld [vmem:[%s1657 + $0x1e8] sm:$0xff]
        %v2459 = vld [vmem:[%s1657 + $0x1f0] sm:$0xff]
        %v2460 = vmax.f32 %v2396, %v2428
        %v2461 = vmax.f32 %v2397, %v2429
        %v2462 = vmax.f32 %v2398, %v2430
        %v2463 = vmax.f32 %v2399, %v2431
        %v2464 = vmax.f32 %v2400, %v2432
        %v2465 = vmax.f32 %v2401, %v2433
        %v2466 = vmax.f32 %v2402, %v2434
        %v2467 = vmax.f32 %v2403, %v2435
        %v2468 = vmax.f32 %v2404, %v2436
        %v2469 = vmax.f32 %v2405, %v2437
        %v2470 = vmax.f32 %v2406, %v2438
        %v2471 = vmax.f32 %v2407, %v2439
        %v2472 = vmax.f32 %v2408, %v2440
        %v2473 = vmax.f32 %v2409, %v2441
        %v2474 = vmax.f32 %v2410, %v2442
        %v2475 = vmax.f32 %v2411, %v2443
        %v2476 = vmax.f32 %v2412, %v2444
        %v2477 = vmax.f32 %v2413, %v2445
        %v2478 = vmax.f32 %v2414, %v2446
        %v2479 = vmax.f32 %v2415, %v2447
        %v2480 = vmax.f32 %v2416, %v2448
        %v2481 = vmax.f32 %v2417, %v2449
        %v2482 = vmax.f32 %v2418, %v2450
        %v2483 = vmax.f32 %v2419, %v2451
        %v2484 = vmax.f32 %v2420, %v2452
        %v2485 = vmax.f32 %v2421, %v2453
        %v2486 = vmax.f32 %v2422, %v2454
        %v2487 = vmax.f32 %v2423, %v2455
        %v2488 = vmax.f32 %v2424, %v2456
        %v2489 = vmax.f32 %v2425, %v2457
        %v2490 = vmax.f32 %v2426, %v2458
        %v2491 = vmax.f32 %v2427, %v2459
        %v2492 = vld [vmem:[%s1722 + $0x8] sm:$0xff]
        %v2493 = vld [vmem:[%s1722 + $0x10] sm:$0xff]
        %v2494 = vld [vmem:[%s1722 + $0x28] sm:$0xff]
        %v2495 = vld [vmem:[%s1722 + $0x30] sm:$0xff]
        %v2496 = vld [vmem:[%s1722 + $0x48] sm:$0xff]
        %v2497 = vld [vmem:[%s1722 + $0x50] sm:$0xff]
        %v2498 = vld [vmem:[%s1722 + $0x68] sm:$0xff]
        %v2499 = vld [vmem:[%s1722 + $0x70] sm:$0xff]
        %v2500 = vld [vmem:[%s1722 + $0x88] sm:$0xff]
        %v2501 = vld [vmem:[%s1722 + $0x90] sm:$0xff]
        %v2502 = vld [vmem:[%s1722 + $0xa8] sm:$0xff]
        %v2503 = vld [vmem:[%s1722 + $0xb0] sm:$0xff]
        %v2504 = vld [vmem:[%s1722 + $0xc8] sm:$0xff]
        %v2505 = vld [vmem:[%s1722 + $0xd0] sm:$0xff]
        %v2506 = vld [vmem:[%s1722 + $0xe8] sm:$0xff]
        %v2507 = vld [vmem:[%s1722 + $0xf0] sm:$0xff]
        %v2508 = vld [vmem:[%s1722 + $0x108] sm:$0xff]
        %v2509 = vld [vmem:[%s1722 + $0x110] sm:$0xff]
        %v2510 = vld [vmem:[%s1722 + $0x128] sm:$0xff]
        %v2511 = vld [vmem:[%s1722 + $0x130] sm:$0xff]
        %v2512 = vld [vmem:[%s1722 + $0x148] sm:$0xff]
        %v2513 = vld [vmem:[%s1722 + $0x150] sm:$0xff]
        %v2514 = vld [vmem:[%s1722 + $0x168] sm:$0xff]
        %v2515 = vld [vmem:[%s1722 + $0x170] sm:$0xff]
        %v2516 = vld [vmem:[%s1722 + $0x188] sm:$0xff]
        %v2517 = vld [vmem:[%s1722 + $0x190] sm:$0xff]
        %v2518 = vld [vmem:[%s1722 + $0x1a8] sm:$0xff]
        %v2519 = vld [vmem:[%s1722 + $0x1b0] sm:$0xff]
        %v2520 = vld [vmem:[%s1722 + $0x1c8] sm:$0xff]
        %v2521 = vld [vmem:[%s1722 + $0x1d0] sm:$0xff]
        %v2522 = vld [vmem:[%s1722 + $0x1e8] sm:$0xff]
        %v2523 = vld [vmem:[%s1722 + $0x1f0] sm:$0xff]
        %v2524 = vmax.f32 %v2460, %v2492
        %v2525 = vmax.f32 %v2461, %v2493
        %v2526 = vmax.f32 %v2462, %v2494
        %v2527 = vmax.f32 %v2463, %v2495
        %v2528 = vmax.f32 %v2464, %v2496
        %v2529 = vmax.f32 %v2465, %v2497
        %v2530 = vmax.f32 %v2466, %v2498
        %v2531 = vmax.f32 %v2467, %v2499
        %v2532 = vmax.f32 %v2468, %v2500
        %v2533 = vmax.f32 %v2469, %v2501
        %v2534 = vmax.f32 %v2470, %v2502
        %v2535 = vmax.f32 %v2471, %v2503
        %v2536 = vmax.f32 %v2472, %v2504
        %v2537 = vmax.f32 %v2473, %v2505
        %v2538 = vmax.f32 %v2474, %v2506
        %v2539 = vmax.f32 %v2475, %v2507
        %v2540 = vmax.f32 %v2476, %v2508
        %v2541 = vmax.f32 %v2477, %v2509
        %v2542 = vmax.f32 %v2478, %v2510
        %v2543 = vmax.f32 %v2479, %v2511
        %v2544 = vmax.f32 %v2480, %v2512
        %v2545 = vmax.f32 %v2481, %v2513
        %v2546 = vmax.f32 %v2482, %v2514
        %v2547 = vmax.f32 %v2483, %v2515
        %v2548 = vmax.f32 %v2484, %v2516
        %v2549 = vmax.f32 %v2485, %v2517
        %v2550 = vmax.f32 %v2486, %v2518
        %v2551 = vmax.f32 %v2487, %v2519
        %v2552 = vmax.f32 %v2488, %v2520
        %v2553 = vmax.f32 %v2489, %v2521
        %v2554 = vmax.f32 %v2490, %v2522
        %v2555 = vmax.f32 %v2491, %v2523
        %v2556 = vpack.c.bf16 %v2524, %v2524
        %v2557 = vpack.c.bf16 %v2525, %v2525
        %v2558 = vpack.c.bf16 %v2526, %v2526
        %v2559 = vpack.c.bf16 %v2527, %v2527
        %v2560 = vpack.c.bf16 %v2528, %v2528
        %v2561 = vpack.c.bf16 %v2529, %v2529
        %v2562 = vpack.c.bf16 %v2530, %v2530
        %v2563 = vpack.c.bf16 %v2531, %v2531
        %v2564 = vpack.c.bf16 %v2532, %v2532
        %v2565 = vpack.c.bf16 %v2533, %v2533
        %v2566 = vpack.c.bf16 %v2534, %v2534
        %v2567 = vpack.c.bf16 %v2535, %v2535
        %v2568 = vpack.c.bf16 %v2536, %v2536
        %v2569 = vpack.c.bf16 %v2537, %v2537
        %v2570 = vpack.c.bf16 %v2538, %v2538
        %v2571 = vpack.c.bf16 %v2539, %v2539
        %v2572 = vpack.c.bf16 %v2540, %v2540
        %v2573 = vpack.c.bf16 %v2541, %v2541
        %v2574 = vpack.c.bf16 %v2542, %v2542
        %v2575 = vpack.c.bf16 %v2543, %v2543
        %v2576 = vpack.c.bf16 %v2544, %v2544
        %v2577 = vpack.c.bf16 %v2545, %v2545
        %v2578 = vpack.c.bf16 %v2546, %v2546
        %v2579 = vpack.c.bf16 %v2547, %v2547
        %v2580 = vpack.c.bf16 %v2548, %v2548
        %v2581 = vpack.c.bf16 %v2549, %v2549
        %v2582 = vpack.c.bf16 %v2550, %v2550
        %v2583 = vpack.c.bf16 %v2551, %v2551
        %v2584 = vpack.c.bf16 %v2552, %v2552
        %v2585 = vpack.c.bf16 %v2553, %v2553
        %v2586 = vpack.c.bf16 %v2554, %v2554
        %v2587 = vpack.c.bf16 %v2555, %v2555
        %2620 = vrot.lane.b32.xlu0 %v2556, 32
        %v2621 = vpop.permute.xlu0 %2620
        %2622 = vrot.lane.b32.xlu0 %v2557, 32
        %v2623 = vpop.permute.xlu0 %2622
        %2624 = vrot.lane.b32.xlu0 %v2558, 32
        %v2625 = vpop.permute.xlu0 %2624
        %2626 = vrot.lane.b32.xlu0 %v2559, 32
        %v2627 = vpop.permute.xlu0 %2626
        %2628 = vrot.lane.b32.xlu0 %v2560, 32
        %v2629 = vpop.permute.xlu0 %2628
        %2630 = vrot.lane.b32.xlu0 %v2561, 32
        %v2631 = vpop.permute.xlu0 %2630
        %2632 = vrot.lane.b32.xlu0 %v2562, 32
        %v2633 = vpop.permute.xlu0 %2632
        %2634 = vrot.lane.b32.xlu0 %v2563, 32
        %v2635 = vpop.permute.xlu0 %2634
        %2636 = vrot.lane.b32.xlu0 %v2564, 32
        %v2637 = vpop.permute.xlu0 %2636
        %2638 = vrot.lane.b32.xlu0 %v2565, 32
        %v2639 = vpop.permute.xlu0 %2638
        %2640 = vrot.lane.b32.xlu0 %v2566, 32
        %v2641 = vpop.permute.xlu0 %2640
        %2642 = vrot.lane.b32.xlu0 %v2567, 32
        %v2643 = vpop.permute.xlu0 %2642
        %2644 = vrot.lane.b32.xlu0 %v2568, 32
        %v2645 = vpop.permute.xlu0 %2644
        %2646 = vrot.lane.b32.xlu0 %v2569, 32
        %v2647 = vpop.permute.xlu0 %2646
        %2648 = vrot.lane.b32.xlu0 %v2570, 32
        %v2649 = vpop.permute.xlu0 %2648
        %2650 = vrot.lane.b32.xlu0 %v2571, 32
        %v2651 = vpop.permute.xlu0 %2650
        %2652 = vrot.lane.b32.xlu0 %v2572, 32
        %v2653 = vpop.permute.xlu0 %2652
        %2654 = vrot.lane.b32.xlu0 %v2573, 32
        %v2655 = vpop.permute.xlu0 %2654
        %2656 = vrot.lane.b32.xlu0 %v2574, 32
        %v2657 = vpop.permute.xlu0 %2656
        %2658 = vrot.lane.b32.xlu0 %v2575, 32
        %v2659 = vpop.permute.xlu0 %2658
        %2660 = vrot.lane.b32.xlu0 %v2576, 32
        %v2661 = vpop.permute.xlu0 %2660
        %2662 = vrot.lane.b32.xlu0 %v2577, 32
        %v2663 = vpop.permute.xlu0 %2662
        %2664 = vrot.lane.b32.xlu0 %v2578, 32
        %v2665 = vpop.permute.xlu0 %2664
        %2666 = vrot.lane.b32.xlu0 %v2579, 32
        %v2667 = vpop.permute.xlu0 %2666
        %2668 = vrot.lane.b32.xlu0 %v2580, 32
        %v2669 = vpop.permute.xlu0 %2668
        %2670 = vrot.lane.b32.xlu0 %v2581, 32
        %v2671 = vpop.permute.xlu0 %2670
        %2672 = vrot.lane.b32.xlu0 %v2582, 32
        %v2673 = vpop.permute.xlu0 %2672
        %2674 = vrot.lane.b32.xlu0 %v2583, 32
        %v2675 = vpop.permute.xlu0 %2674
        %2676 = vrot.lane.b32.xlu0 %v2584, 32
        %v2677 = vpop.permute.xlu0 %2676
        %2678 = vrot.lane.b32.xlu0 %v2585, 32
        %v2679 = vpop.permute.xlu0 %2678
        %2680 = vrot.lane.b32.xlu0 %v2586, 32
        %v2681 = vpop.permute.xlu0 %2680
        %2682 = vrot.lane.b32.xlu0 %v2587, 32
        %v2683 = vpop.permute.xlu0 %2682
        %vm2716 = vcmask 388352
        %2717 = vst.msk [vmem:[#allocation3] sm:$0xf] %vm2716, %v2621
        %2718 = vst.msk [vmem:[#allocation3 + $0x4] sm:$0xf] %vm2716, %v2623
        %2719 = vst.msk [vmem:[#allocation3 + $0x8] sm:$0xf] %vm2716, %v2625
        %2720 = vst.msk [vmem:[#allocation3 + $0xc] sm:$0xf] %vm2716, %v2627
        %2721 = vst.msk [vmem:[#allocation3 + $0x10] sm:$0xf] %vm2716, %v2629
        %2722 = vst.msk [vmem:[#allocation3 + $0x14] sm:$0xf] %vm2716, %v2631
        %2723 = vst.msk [vmem:[#allocation3 + $0x18] sm:$0xf] %vm2716, %v2633
        %2724 = vst.msk [vmem:[#allocation3 + $0x1c] sm:$0xf] %vm2716, %v2635
        %2725 = vst.msk [vmem:[#allocation3 + $0x20] sm:$0xf] %vm2716, %v2637
        %2726 = vst.msk [vmem:[#allocation3 + $0x24] sm:$0xf] %vm2716, %v2639
        %2727 = vst.msk [vmem:[#allocation3 + $0x28] sm:$0xf] %vm2716, %v2641
        %2728 = vst.msk [vmem:[#allocation3 + $0x2c] sm:$0xf] %vm2716, %v2643
        %2729 = vst.msk [vmem:[#allocation3 + $0x30] sm:$0xf] %vm2716, %v2645
        %2730 = vst.msk [vmem:[#allocation3 + $0x34] sm:$0xf] %vm2716, %v2647
        %2731 = vst.msk [vmem:[#allocation3 + $0x38] sm:$0xf] %vm2716, %v2649
        %2732 = vst.msk [vmem:[#allocation3 + $0x3c] sm:$0xf] %vm2716, %v2651
        %2733 = vst.msk [vmem:[#allocation3 + $0x40] sm:$0xf] %vm2716, %v2653
        %2734 = vst.msk [vmem:[#allocation3 + $0x44] sm:$0xf] %vm2716, %v2655
        %2735 = vst.msk [vmem:[#allocation3 + $0x48] sm:$0xf] %vm2716, %v2657
        %2736 = vst.msk [vmem:[#allocation3 + $0x4c] sm:$0xf] %vm2716, %v2659
        %2737 = vst.msk [vmem:[#allocation3 + $0x50] sm:$0xf] %vm2716, %v2661
        %2738 = vst.msk [vmem:[#allocation3 + $0x54] sm:$0xf] %vm2716, %v2663
        %2739 = vst.msk [vmem:[#allocation3 + $0x58] sm:$0xf] %vm2716, %v2665
        %2740 = vst.msk [vmem:[#allocation3 + $0x5c] sm:$0xf] %vm2716, %v2667
        %2741 = vst.msk [vmem:[#allocation3 + $0x60] sm:$0xf] %vm2716, %v2669
        %2742 = vst.msk [vmem:[#allocation3 + $0x64] sm:$0xf] %vm2716, %v2671
        %2743 = vst.msk [vmem:[#allocation3 + $0x68] sm:$0xf] %vm2716, %v2673
        %2744 = vst.msk [vmem:[#allocation3 + $0x6c] sm:$0xf] %vm2716, %v2675
        %2745 = vst.msk [vmem:[#allocation3 + $0x70] sm:$0xf] %vm2716, %v2677
        %2746 = vst.msk [vmem:[#allocation3 + $0x74] sm:$0xf] %vm2716, %v2679
        %2747 = vst.msk [vmem:[#allocation3 + $0x78] sm:$0xf] %vm2716, %v2681
        %2748 = vst.msk [vmem:[#allocation3 + $0x7c] sm:$0xf] %vm2716, %v2683
        %2749 = vst.msk [vmem:[%s264 + $0x8] sm:$0xff] %vm246, %v2524
        %2750 = vst.msk [vmem:[%s264 + $0x10] sm:$0xff] %vm246, %v2525
        %2751 = vst.msk [vmem:[%s264 + $0x28] sm:$0xff] %vm246, %v2526
        %2752 = vst.msk [vmem:[%s264 + $0x30] sm:$0xff] %vm246, %v2527
        %2753 = vst.msk [vmem:[%s264 + $0x48] sm:$0xff] %vm246, %v2528
        %2754 = vst.msk [vmem:[%s264 + $0x50] sm:$0xff] %vm246, %v2529
        %2755 = vst.msk [vmem:[%s264 + $0x68] sm:$0xff] %vm246, %v2530
        %2756 = vst.msk [vmem:[%s264 + $0x70] sm:$0xff] %vm246, %v2531
        %2757 = vst.msk [vmem:[%s264 + $0x88] sm:$0xff] %vm246, %v2532
        %2758 = vst.msk [vmem:[%s264 + $0x90] sm:$0xff] %vm246, %v2533
        %2759 = vst.msk [vmem:[%s264 + $0xa8] sm:$0xff] %vm246, %v2534
        %2760 = vst.msk [vmem:[%s264 + $0xb0] sm:$0xff] %vm246, %v2535
        %2761 = vst.msk [vmem:[%s264 + $0xc8] sm:$0xff] %vm246, %v2536
        %2762 = vst.msk [vmem:[%s264 + $0xd0] sm:$0xff] %vm246, %v2537
        %2763 = vst.msk [vmem:[%s264 + $0xe8] sm:$0xff] %vm246, %v2538
        %2764 = vst.msk [vmem:[%s264 + $0xf0] sm:$0xff] %vm246, %v2539
        %2765 = vst.msk [vmem:[%s264 + $0x108] sm:$0xff] %vm246, %v2540
        %2766 = vst.msk [vmem:[%s264 + $0x110] sm:$0xff] %vm246, %v2541
        %2767 = vst.msk [vmem:[%s264 + $0x128] sm:$0xff] %vm246, %v2542
        %2768 = vst.msk [vmem:[%s264 + $0x130] sm:$0xff] %vm246, %v2543
        %2769 = vst.msk [vmem:[%s264 + $0x148] sm:$0xff] %vm246, %v2544
        %2770 = vst.msk [vmem:[%s264 + $0x150] sm:$0xff] %vm246, %v2545
        %2771 = vst.msk [vmem:[%s264 + $0x168] sm:$0xff] %vm246, %v2546
        %2772 = vst.msk [vmem:[%s264 + $0x170] sm:$0xff] %vm246, %v2547
        %2773 = vst.msk [vmem:[%s264 + $0x188] sm:$0xff] %vm246, %v2548
        %2774 = vst.msk [vmem:[%s264 + $0x190] sm:$0xff] %vm246, %v2549
        %2775 = vst.msk [vmem:[%s264 + $0x1a8] sm:$0xff] %vm246, %v2550
        %2776 = vst.msk [vmem:[%s264 + $0x1b0] sm:$0xff] %vm246, %v2551
        %2777 = vst.msk [vmem:[%s264 + $0x1c8] sm:$0xff] %vm246, %v2552
        %2778 = vst.msk [vmem:[%s264 + $0x1d0] sm:$0xff] %vm246, %v2553
        %2779 = vst.msk [vmem:[%s264 + $0x1e8] sm:$0xff] %vm246, %v2554
        %2780 = vst.msk [vmem:[%s264 + $0x1f0] sm:$0xff] %vm246, %v2555
        %v2781 = vld [vmem:[%s264 + $0x6] sm:$0xff]
        %v2782 = vld [vmem:[%s264 + $0xe] sm:$0xff]
        %v2783 = vld [vmem:[%s264 + $0x26] sm:$0xff]
        %v2784 = vld [vmem:[%s264 + $0x2e] sm:$0xff]
        %v2785 = vld [vmem:[%s264 + $0x46] sm:$0xff]
        %v2786 = vld [vmem:[%s264 + $0x4e] sm:$0xff]
        %v2787 = vld [vmem:[%s264 + $0x66] sm:$0xff]
        %v2788 = vld [vmem:[%s264 + $0x6e] sm:$0xff]
        %v2789 = vld [vmem:[%s264 + $0x86] sm:$0xff]
        %v2790 = vld [vmem:[%s264 + $0x8e] sm:$0xff]
        %v2791 = vld [vmem:[%s264 + $0xa6] sm:$0xff]
        %v2792 = vld [vmem:[%s264 + $0xae] sm:$0xff]
        %v2793 = vld [vmem:[%s264 + $0xc6] sm:$0xff]
        %v2794 = vld [vmem:[%s264 + $0xce] sm:$0xff]
        %v2795 = vld [vmem:[%s264 + $0xe6] sm:$0xff]
        %v2796 = vld [vmem:[%s264 + $0xee] sm:$0xff]
        %v2797 = vld [vmem:[%s264 + $0x106] sm:$0xff]
        %v2798 = vld [vmem:[%s264 + $0x10e] sm:$0xff]
        %v2799 = vld [vmem:[%s264 + $0x126] sm:$0xff]
        %v2800 = vld [vmem:[%s264 + $0x12e] sm:$0xff]
        %v2801 = vld [vmem:[%s264 + $0x146] sm:$0xff]
        %v2802 = vld [vmem:[%s264 + $0x14e] sm:$0xff]
        %v2803 = vld [vmem:[%s264 + $0x166] sm:$0xff]
        %v2804 = vld [vmem:[%s264 + $0x16e] sm:$0xff]
        %v2805 = vld [vmem:[%s264 + $0x186] sm:$0xff]
        %v2806 = vld [vmem:[%s264 + $0x18e] sm:$0xff]
        %v2807 = vld [vmem:[%s264 + $0x1a6] sm:$0xff]
        %v2808 = vld [vmem:[%s264 + $0x1ae] sm:$0xff]
        %v2809 = vld [vmem:[%s264 + $0x1c6] sm:$0xff]
        %v2810 = vld [vmem:[%s264 + $0x1ce] sm:$0xff]
        %v2811 = vld [vmem:[%s264 + $0x1e6] sm:$0xff]
        %v2812 = vld [vmem:[%s264 + $0x1ee] sm:$0xff]
        %v2813 = vmax.f32 %v2524, %v2781
        %v2814 = vmax.f32 %v2525, %v2782
        %v2815 = vmax.f32 %v2526, %v2783
        %v2816 = vmax.f32 %v2527, %v2784
        %v2817 = vmax.f32 %v2528, %v2785
        %v2818 = vmax.f32 %v2529, %v2786
        %v2819 = vmax.f32 %v2530, %v2787
        %v2820 = vmax.f32 %v2531, %v2788
        %v2821 = vmax.f32 %v2532, %v2789
        %v2822 = vmax.f32 %v2533, %v2790
        %v2823 = vmax.f32 %v2534, %v2791
        %v2824 = vmax.f32 %v2535, %v2792
        %v2825 = vmax.f32 %v2536, %v2793
        %v2826 = vmax.f32 %v2537, %v2794
        %v2827 = vmax.f32 %v2538, %v2795
        %v2828 = vmax.f32 %v2539, %v2796
        %v2829 = vmax.f32 %v2540, %v2797
        %v2830 = vmax.f32 %v2541, %v2798
        %v2831 = vmax.f32 %v2542, %v2799
        %v2832 = vmax.f32 %v2543, %v2800
        %v2833 = vmax.f32 %v2544, %v2801
        %v2834 = vmax.f32 %v2545, %v2802
        %v2835 = vmax.f32 %v2546, %v2803
        %v2836 = vmax.f32 %v2547, %v2804
        %v2837 = vmax.f32 %v2548, %v2805
        %v2838 = vmax.f32 %v2549, %v2806
        %v2839 = vmax.f32 %v2550, %v2807
        %v2840 = vmax.f32 %v2551, %v2808
        %v2841 = vmax.f32 %v2552, %v2809
        %v2842 = vmax.f32 %v2553, %v2810
        %v2843 = vmax.f32 %v2554, %v2811
        %v2844 = vmax.f32 %v2555, %v2812
        %v2845 = vld [vmem:[%s264 + $0x7] sm:$0xff]
        %v2846 = vld [vmem:[%s264 + $0xf] sm:$0xff]
        %v2847 = vld [vmem:[%s264 + $0x27] sm:$0xff]
        %v2848 = vld [vmem:[%s264 + $0x2f] sm:$0xff]
        %v2849 = vld [vmem:[%s264 + $0x47] sm:$0xff]
        %v2850 = vld [vmem:[%s264 + $0x4f] sm:$0xff]
        %v2851 = vld [vmem:[%s264 + $0x67] sm:$0xff]
        %v2852 = vld [vmem:[%s264 + $0x6f] sm:$0xff]
        %v2853 = vld [vmem:[%s264 + $0x87] sm:$0xff]
        %v2854 = vld [vmem:[%s264 + $0x8f] sm:$0xff]
        %v2855 = vld [vmem:[%s264 + $0xa7] sm:$0xff]
        %v2856 = vld [vmem:[%s264 + $0xaf] sm:$0xff]
        %v2857 = vld [vmem:[%s264 + $0xc7] sm:$0xff]
        %v2858 = vld [vmem:[%s264 + $0xcf] sm:$0xff]
        %v2859 = vld [vmem:[%s264 + $0xe7] sm:$0xff]
        %v2860 = vld [vmem:[%s264 + $0xef] sm:$0xff]
        %v2861 = vld [vmem:[%s264 + $0x107] sm:$0xff]
        %v2862 = vld [vmem:[%s264 + $0x10f] sm:$0xff]
        %v2863 = vld [vmem:[%s264 + $0x127] sm:$0xff]
        %v2864 = vld [vmem:[%s264 + $0x12f] sm:$0xff]
        %v2865 = vld [vmem:[%s264 + $0x147] sm:$0xff]
        %v2866 = vld [vmem:[%s264 + $0x14f] sm:$0xff]
        %v2867 = vld [vmem:[%s264 + $0x167] sm:$0xff]
        %v2868 = vld [vmem:[%s264 + $0x16f] sm:$0xff]
        %v2869 = vld [vmem:[%s264 + $0x187] sm:$0xff]
        %v2870 = vld [vmem:[%s264 + $0x18f] sm:$0xff]
        %v2871 = vld [vmem:[%s264 + $0x1a7] sm:$0xff]
        %v2872 = vld [vmem:[%s264 + $0x1af] sm:$0xff]
        %v2873 = vld [vmem:[%s264 + $0x1c7] sm:$0xff]
        %v2874 = vld [vmem:[%s264 + $0x1cf] sm:$0xff]
        %v2875 = vld [vmem:[%s264 + $0x1e7] sm:$0xff]
        %v2876 = vld [vmem:[%s264 + $0x1ef] sm:$0xff]
        %v2877 = vmax.f32 %v2813, %v2845
        %v2878 = vmax.f32 %v2814, %v2846
        %v2879 = vmax.f32 %v2815, %v2847
        %v2880 = vmax.f32 %v2816, %v2848
        %v2881 = vmax.f32 %v2817, %v2849
        %v2882 = vmax.f32 %v2818, %v2850
        %v2883 = vmax.f32 %v2819, %v2851
        %v2884 = vmax.f32 %v2820, %v2852
        %v2885 = vmax.f32 %v2821, %v2853
        %v2886 = vmax.f32 %v2822, %v2854
        %v2887 = vmax.f32 %v2823, %v2855
        %v2888 = vmax.f32 %v2824, %v2856
        %v2889 = vmax.f32 %v2825, %v2857
        %v2890 = vmax.f32 %v2826, %v2858
        %v2891 = vmax.f32 %v2827, %v2859
        %v2892 = vmax.f32 %v2828, %v2860
        %v2893 = vmax.f32 %v2829, %v2861
        %v2894 = vmax.f32 %v2830, %v2862
        %v2895 = vmax.f32 %v2831, %v2863
        %v2896 = vmax.f32 %v2832, %v2864
        %v2897 = vmax.f32 %v2833, %v2865
        %v2898 = vmax.f32 %v2834, %v2866
        %v2899 = vmax.f32 %v2835, %v2867
        %v2900 = vmax.f32 %v2836, %v2868
        %v2901 = vmax.f32 %v2837, %v2869
        %v2902 = vmax.f32 %v2838, %v2870
        %v2903 = vmax.f32 %v2839, %v2871
        %v2904 = vmax.f32 %v2840, %v2872
        %v2905 = vmax.f32 %v2841, %v2873
        %v2906 = vmax.f32 %v2842, %v2874
        %v2907 = vmax.f32 %v2843, %v2875
        %v2908 = vmax.f32 %v2844, %v2876
        %v2909 = vld [vmem:[%s264 + $0x9] sm:$0xff]
        %v2910 = vld [vmem:[%s264 + $0x11] sm:$0xff]
        %v2911 = vld [vmem:[%s264 + $0x29] sm:$0xff]
        %v2912 = vld [vmem:[%s264 + $0x31] sm:$0xff]
        %v2913 = vld [vmem:[%s264 + $0x49] sm:$0xff]
        %v2914 = vld [vmem:[%s264 + $0x51] sm:$0xff]
        %v2915 = vld [vmem:[%s264 + $0x69] sm:$0xff]
        %v2916 = vld [vmem:[%s264 + $0x71] sm:$0xff]
        %v2917 = vld [vmem:[%s264 + $0x89] sm:$0xff]
        %v2918 = vld [vmem:[%s264 + $0x91] sm:$0xff]
        %v2919 = vld [vmem:[%s264 + $0xa9] sm:$0xff]
        %v2920 = vld [vmem:[%s264 + $0xb1] sm:$0xff]
        %v2921 = vld [vmem:[%s264 + $0xc9] sm:$0xff]
        %v2922 = vld [vmem:[%s264 + $0xd1] sm:$0xff]
        %v2923 = vld [vmem:[%s264 + $0xe9] sm:$0xff]
        %v2924 = vld [vmem:[%s264 + $0xf1] sm:$0xff]
        %v2925 = vld [vmem:[%s264 + $0x109] sm:$0xff]
        %v2926 = vld [vmem:[%s264 + $0x111] sm:$0xff]
        %v2927 = vld [vmem:[%s264 + $0x129] sm:$0xff]
        %v2928 = vld [vmem:[%s264 + $0x131] sm:$0xff]
        %v2929 = vld [vmem:[%s264 + $0x149] sm:$0xff]
        %v2930 = vld [vmem:[%s264 + $0x151] sm:$0xff]
        %v2931 = vld [vmem:[%s264 + $0x169] sm:$0xff]
        %v2932 = vld [vmem:[%s264 + $0x171] sm:$0xff]
        %v2933 = vld [vmem:[%s264 + $0x189] sm:$0xff]
        %v2934 = vld [vmem:[%s264 + $0x191] sm:$0xff]
        %v2935 = vld [vmem:[%s264 + $0x1a9] sm:$0xff]
        %v2936 = vld [vmem:[%s264 + $0x1b1] sm:$0xff]
        %v2937 = vld [vmem:[%s264 + $0x1c9] sm:$0xff]
        %v2938 = vld [vmem:[%s264 + $0x1d1] sm:$0xff]
        %v2939 = vld [vmem:[%s264 + $0x1e9] sm:$0xff]
        %v2940 = vld [vmem:[%s264 + $0x1f1] sm:$0xff]
        %v2941 = vmax.f32 %v2877, %v2909
        %v2942 = vmax.f32 %v2878, %v2910
        %v2943 = vmax.f32 %v2879, %v2911
        %v2944 = vmax.f32 %v2880, %v2912
        %v2945 = vmax.f32 %v2881, %v2913
        %v2946 = vmax.f32 %v2882, %v2914
        %v2947 = vmax.f32 %v2883, %v2915
        %v2948 = vmax.f32 %v2884, %v2916
        %v2949 = vmax.f32 %v2885, %v2917
        %v2950 = vmax.f32 %v2886, %v2918
        %v2951 = vmax.f32 %v2887, %v2919
        %v2952 = vmax.f32 %v2888, %v2920
        %v2953 = vmax.f32 %v2889, %v2921
        %v2954 = vmax.f32 %v2890, %v2922
        %v2955 = vmax.f32 %v2891, %v2923
        %v2956 = vmax.f32 %v2892, %v2924
        %v2957 = vmax.f32 %v2893, %v2925
        %v2958 = vmax.f32 %v2894, %v2926
        %v2959 = vmax.f32 %v2895, %v2927
        %v2960 = vmax.f32 %v2896, %v2928
        %v2961 = vmax.f32 %v2897, %v2929
        %v2962 = vmax.f32 %v2898, %v2930
        %v2963 = vmax.f32 %v2899, %v2931
        %v2964 = vmax.f32 %v2900, %v2932
        %v2965 = vmax.f32 %v2901, %v2933
        %v2966 = vmax.f32 %v2902, %v2934
        %v2967 = vmax.f32 %v2903, %v2935
        %v2968 = vmax.f32 %v2904, %v2936
        %v2969 = vmax.f32 %v2905, %v2937
        %v2970 = vmax.f32 %v2906, %v2938
        %v2971 = vmax.f32 %v2907, %v2939
        %v2972 = vmax.f32 %v2908, %v2940
        %v2973 = vld [vmem:[%s264 + $0xa] sm:$0xff]
        %v2974 = vld [vmem:[%s264 + $0x12] sm:$0xff]
        %v2975 = vld [vmem:[%s264 + $0x2a] sm:$0xff]
        %v2976 = vld [vmem:[%s264 + $0x32] sm:$0xff]
        %v2977 = vld [vmem:[%s264 + $0x4a] sm:$0xff]
        %v2978 = vld [vmem:[%s264 + $0x52] sm:$0xff]
        %v2979 = vld [vmem:[%s264 + $0x6a] sm:$0xff]
        %v2980 = vld [vmem:[%s264 + $0x72] sm:$0xff]
        %v2981 = vld [vmem:[%s264 + $0x8a] sm:$0xff]
        %v2982 = vld [vmem:[%s264 + $0x92] sm:$0xff]
        %v2983 = vld [vmem:[%s264 + $0xaa] sm:$0xff]
        %v2984 = vld [vmem:[%s264 + $0xb2] sm:$0xff]
        %v2985 = vld [vmem:[%s264 + $0xca] sm:$0xff]
        %v2986 = vld [vmem:[%s264 + $0xd2] sm:$0xff]
        %v2987 = vld [vmem:[%s264 + $0xea] sm:$0xff]
        %v2988 = vld [vmem:[%s264 + $0xf2] sm:$0xff]
        %v2989 = vld [vmem:[%s264 + $0x10a] sm:$0xff]
        %v2990 = vld [vmem:[%s264 + $0x112] sm:$0xff]
        %v2991 = vld [vmem:[%s264 + $0x12a] sm:$0xff]
        %v2992 = vld [vmem:[%s264 + $0x132] sm:$0xff]
        %v2993 = vld [vmem:[%s264 + $0x14a] sm:$0xff]
        %v2994 = vld [vmem:[%s264 + $0x152] sm:$0xff]
        %v2995 = vld [vmem:[%s264 + $0x16a] sm:$0xff]
        %v2996 = vld [vmem:[%s264 + $0x172] sm:$0xff]
        %v2997 = vld [vmem:[%s264 + $0x18a] sm:$0xff]
        %v2998 = vld [vmem:[%s264 + $0x192] sm:$0xff]
        %v2999 = vld [vmem:[%s264 + $0x1aa] sm:$0xff]
        %v3000 = vld [vmem:[%s264 + $0x1b2] sm:$0xff]
        %v3001 = vld [vmem:[%s264 + $0x1ca] sm:$0xff]
        %v3002 = vld [vmem:[%s264 + $0x1d2] sm:$0xff]
        %v3003 = vld [vmem:[%s264 + $0x1ea] sm:$0xff]
        %v3004 = vld [vmem:[%s264 + $0x1f2] sm:$0xff]
        %v3005 = vmax.f32 %v2941, %v2973
        %v3006 = vmax.f32 %v2942, %v2974
        %v3007 = vmax.f32 %v2943, %v2975
        %v3008 = vmax.f32 %v2944, %v2976
        %v3009 = vmax.f32 %v2945, %v2977
        %v3010 = vmax.f32 %v2946, %v2978
        %v3011 = vmax.f32 %v2947, %v2979
        %v3012 = vmax.f32 %v2948, %v2980
        %v3013 = vmax.f32 %v2949, %v2981
        %v3014 = vmax.f32 %v2950, %v2982
        %v3015 = vmax.f32 %v2951, %v2983
        %v3016 = vmax.f32 %v2952, %v2984
        %v3017 = vmax.f32 %v2953, %v2985
        %v3018 = vmax.f32 %v2954, %v2986
        %v3019 = vmax.f32 %v2955, %v2987
        %v3020 = vmax.f32 %v2956, %v2988
        %v3021 = vmax.f32 %v2957, %v2989
        %v3022 = vmax.f32 %v2958, %v2990
        %v3023 = vmax.f32 %v2959, %v2991
        %v3024 = vmax.f32 %v2960, %v2992
        %v3025 = vmax.f32 %v2961, %v2993
        %v3026 = vmax.f32 %v2962, %v2994
        %v3027 = vmax.f32 %v2963, %v2995
        %v3028 = vmax.f32 %v2964, %v2996
        %v3029 = vmax.f32 %v2965, %v2997
        %v3030 = vmax.f32 %v2966, %v2998
        %v3031 = vmax.f32 %v2967, %v2999
        %v3032 = vmax.f32 %v2968, %v3000
        %v3033 = vmax.f32 %v2969, %v3001
        %v3034 = vmax.f32 %v2970, %v3002
        %v3035 = vmax.f32 %v2971, %v3003
        %v3036 = vmax.f32 %v2972, %v3004
        %3037 = vst.msk [vmem:[%s264 + $0x8] sm:$0xff] %vm246, %v3005
        %3038 = vst.msk [vmem:[%s264 + $0x10] sm:$0xff] %vm246, %v3006
        %3039 = vst.msk [vmem:[%s264 + $0x28] sm:$0xff] %vm246, %v3007
        %3040 = vst.msk [vmem:[%s264 + $0x30] sm:$0xff] %vm246, %v3008
        %3041 = vst.msk [vmem:[%s264 + $0x48] sm:$0xff] %vm246, %v3009
        %3042 = vst.msk [vmem:[%s264 + $0x50] sm:$0xff] %vm246, %v3010
        %3043 = vst.msk [vmem:[%s264 + $0x68] sm:$0xff] %vm246, %v3011
        %3044 = vst.msk [vmem:[%s264 + $0x70] sm:$0xff] %vm246, %v3012
        %3045 = vst.msk [vmem:[%s264 + $0x88] sm:$0xff] %vm246, %v3013
        %3046 = vst.msk [vmem:[%s264 + $0x90] sm:$0xff] %vm246, %v3014
        %3047 = vst.msk [vmem:[%s264 + $0xa8] sm:$0xff] %vm246, %v3015
        %3048 = vst.msk [vmem:[%s264 + $0xb0] sm:$0xff] %vm246, %v3016
        %3049 = vst.msk [vmem:[%s264 + $0xc8] sm:$0xff] %vm246, %v3017
        %3050 = vst.msk [vmem:[%s264 + $0xd0] sm:$0xff] %vm246, %v3018
        %3051 = vst.msk [vmem:[%s264 + $0xe8] sm:$0xff] %vm246, %v3019
        %3052 = vst.msk [vmem:[%s264 + $0xf0] sm:$0xff] %vm246, %v3020
        %3053 = vst.msk [vmem:[%s264 + $0x108] sm:$0xff] %vm246, %v3021
        %3054 = vst.msk [vmem:[%s264 + $0x110] sm:$0xff] %vm246, %v3022
        %3055 = vst.msk [vmem:[%s264 + $0x128] sm:$0xff] %vm246, %v3023
        %3056 = vst.msk [vmem:[%s264 + $0x130] sm:$0xff] %vm246, %v3024
        %3057 = vst.msk [vmem:[%s264 + $0x148] sm:$0xff] %vm246, %v3025
        %3058 = vst.msk [vmem:[%s264 + $0x150] sm:$0xff] %vm246, %v3026
        %3059 = vst.msk [vmem:[%s264 + $0x168] sm:$0xff] %vm246, %v3027
        %3060 = vst.msk [vmem:[%s264 + $0x170] sm:$0xff] %vm246, %v3028
        %3061 = vst.msk [vmem:[%s264 + $0x188] sm:$0xff] %vm246, %v3029
        %3062 = vst.msk [vmem:[%s264 + $0x190] sm:$0xff] %vm246, %v3030
        %3063 = vst.msk [vmem:[%s264 + $0x1a8] sm:$0xff] %vm246, %v3031
        %3064 = vst.msk [vmem:[%s264 + $0x1b0] sm:$0xff] %vm246, %v3032
        %3065 = vst.msk [vmem:[%s264 + $0x1c8] sm:$0xff] %vm246, %v3033
        %3066 = vst.msk [vmem:[%s264 + $0x1d0] sm:$0xff] %vm246, %v3034
        %3067 = vst.msk [vmem:[%s264 + $0x1e8] sm:$0xff] %vm246, %v3035
        %3068 = vst.msk [vmem:[%s264 + $0x1f0] sm:$0xff] %vm246, %v3036
        %v3069 = vld [vmem:[#allocation2 + $0x8] sm:$0xff]
        %v3070 = vld [vmem:[#allocation2 + $0x10] sm:$0xff]
        %v3071 = vld [vmem:[#allocation2 + $0x28] sm:$0xff]
        %v3072 = vld [vmem:[#allocation2 + $0x30] sm:$0xff]
        %v3073 = vld [vmem:[#allocation2 + $0x48] sm:$0xff]
        %v3074 = vld [vmem:[#allocation2 + $0x50] sm:$0xff]
        %v3075 = vld [vmem:[#allocation2 + $0x68] sm:$0xff]
        %v3076 = vld [vmem:[#allocation2 + $0x70] sm:$0xff]
        %v3077 = vld [vmem:[#allocation2 + $0x88] sm:$0xff]
        %v3078 = vld [vmem:[#allocation2 + $0x90] sm:$0xff]
        %v3079 = vld [vmem:[#allocation2 + $0xa8] sm:$0xff]
        %v3080 = vld [vmem:[#allocation2 + $0xb0] sm:$0xff]
        %v3081 = vld [vmem:[#allocation2 + $0xc8] sm:$0xff]
        %v3082 = vld [vmem:[#allocation2 + $0xd0] sm:$0xff]
        %v3083 = vld [vmem:[#allocation2 + $0xe8] sm:$0xff]
        %v3084 = vld [vmem:[#allocation2 + $0xf0] sm:$0xff]
        %v3085 = vld [vmem:[#allocation2 + $0x108] sm:$0xff]
        %v3086 = vld [vmem:[#allocation2 + $0x110] sm:$0xff]
        %v3087 = vld [vmem:[#allocation2 + $0x128] sm:$0xff]
        %v3088 = vld [vmem:[#allocation2 + $0x130] sm:$0xff]
        %v3089 = vld [vmem:[#allocation2 + $0x148] sm:$0xff]
        %v3090 = vld [vmem:[#allocation2 + $0x150] sm:$0xff]
        %v3091 = vld [vmem:[#allocation2 + $0x168] sm:$0xff]
        %v3092 = vld [vmem:[#allocation2 + $0x170] sm:$0xff]
        %v3093 = vld [vmem:[#allocation2 + $0x188] sm:$0xff]
        %v3094 = vld [vmem:[#allocation2 + $0x190] sm:$0xff]
        %v3095 = vld [vmem:[#allocation2 + $0x1a8] sm:$0xff]
        %v3096 = vld [vmem:[#allocation2 + $0x1b0] sm:$0xff]
        %v3097 = vld [vmem:[#allocation2 + $0x1c8] sm:$0xff]
        %v3098 = vld [vmem:[#allocation2 + $0x1d0] sm:$0xff]
        %v3099 = vld [vmem:[#allocation2 + $0x1e8] sm:$0xff]
        %v3100 = vld [vmem:[#allocation2 + $0x1f0] sm:$0xff]
        %v3101 = vmax.f32 %v3005, %v3069
        %v3102 = vmax.f32 %v3006, %v3070
        %v3103 = vmax.f32 %v3007, %v3071
        %v3104 = vmax.f32 %v3008, %v3072
        %v3105 = vmax.f32 %v3009, %v3073
        %v3106 = vmax.f32 %v3010, %v3074
        %v3107 = vmax.f32 %v3011, %v3075
        %v3108 = vmax.f32 %v3012, %v3076
        %v3109 = vmax.f32 %v3013, %v3077
        %v3110 = vmax.f32 %v3014, %v3078
        %v3111 = vmax.f32 %v3015, %v3079
        %v3112 = vmax.f32 %v3016, %v3080
        %v3113 = vmax.f32 %v3017, %v3081
        %v3114 = vmax.f32 %v3018, %v3082
        %v3115 = vmax.f32 %v3019, %v3083
        %v3116 = vmax.f32 %v3020, %v3084
        %v3117 = vmax.f32 %v3021, %v3085
        %v3118 = vmax.f32 %v3022, %v3086
        %v3119 = vmax.f32 %v3023, %v3087
        %v3120 = vmax.f32 %v3024, %v3088
        %v3121 = vmax.f32 %v3025, %v3089
        %v3122 = vmax.f32 %v3026, %v3090
        %v3123 = vmax.f32 %v3027, %v3091
        %v3124 = vmax.f32 %v3028, %v3092
        %v3125 = vmax.f32 %v3029, %v3093
        %v3126 = vmax.f32 %v3030, %v3094
        %v3127 = vmax.f32 %v3031, %v3095
        %v3128 = vmax.f32 %v3032, %v3096
        %v3129 = vmax.f32 %v3033, %v3097
        %v3130 = vmax.f32 %v3034, %v3098
        %v3131 = vmax.f32 %v3035, %v3099
        %v3132 = vmax.f32 %v3036, %v3100
        %v3133 = vld [vmem:[%s1592 + $0x8] sm:$0xff]
        %v3134 = vld [vmem:[%s1592 + $0x10] sm:$0xff]
        %v3135 = vld [vmem:[%s1592 + $0x28] sm:$0xff]
        %v3136 = vld [vmem:[%s1592 + $0x30] sm:$0xff]
        %v3137 = vld [vmem:[%s1592 + $0x48] sm:$0xff]
        %v3138 = vld [vmem:[%s1592 + $0x50] sm:$0xff]
        %v3139 = vld [vmem:[%s1592 + $0x68] sm:$0xff]
        %v3140 = vld [vmem:[%s1592 + $0x70] sm:$0xff]
        %v3141 = vld [vmem:[%s1592 + $0x88] sm:$0xff]
        %v3142 = vld [vmem:[%s1592 + $0x90] sm:$0xff]
        %v3143 = vld [vmem:[%s1592 + $0xa8] sm:$0xff]
        %v3144 = vld [vmem:[%s1592 + $0xb0] sm:$0xff]
        %v3145 = vld [vmem:[%s1592 + $0xc8] sm:$0xff]
        %v3146 = vld [vmem:[%s1592 + $0xd0] sm:$0xff]
        %v3147 = vld [vmem:[%s1592 + $0xe8] sm:$0xff]
        %v3148 = vld [vmem:[%s1592 + $0xf0] sm:$0xff]
        %v3149 = vld [vmem:[%s1592 + $0x108] sm:$0xff]
        %v3150 = vld [vmem:[%s1592 + $0x110] sm:$0xff]
        %v3151 = vld [vmem:[%s1592 + $0x128] sm:$0xff]
        %v3152 = vld [vmem:[%s1592 + $0x130] sm:$0xff]
        %v3153 = vld [vmem:[%s1592 + $0x148] sm:$0xff]
        %v3154 = vld [vmem:[%s1592 + $0x150] sm:$0xff]
        %v3155 = vld [vmem:[%s1592 + $0x168] sm:$0xff]
        %v3156 = vld [vmem:[%s1592 + $0x170] sm:$0xff]
        %v3157 = vld [vmem:[%s1592 + $0x188] sm:$0xff]
        %v3158 = vld [vmem:[%s1592 + $0x190] sm:$0xff]
        %v3159 = vld [vmem:[%s1592 + $0x1a8] sm:$0xff]
        %v3160 = vld [vmem:[%s1592 + $0x1b0] sm:$0xff]
        %v3161 = vld [vmem:[%s1592 + $0x1c8] sm:$0xff]
        %v3162 = vld [vmem:[%s1592 + $0x1d0] sm:$0xff]
        %v3163 = vld [vmem:[%s1592 + $0x1e8] sm:$0xff]
        %v3164 = vld [vmem:[%s1592 + $0x1f0] sm:$0xff]
        %v3165 = vmax.f32 %v3101, %v3133
        %v3166 = vmax.f32 %v3102, %v3134
        %v3167 = vmax.f32 %v3103, %v3135
        %v3168 = vmax.f32 %v3104, %v3136
        %v3169 = vmax.f32 %v3105, %v3137
        %v3170 = vmax.f32 %v3106, %v3138
        %v3171 = vmax.f32 %v3107, %v3139
        %v3172 = vmax.f32 %v3108, %v3140
        %v3173 = vmax.f32 %v3109, %v3141
        %v3174 = vmax.f32 %v3110, %v3142
        %v3175 = vmax.f32 %v3111, %v3143
        %v3176 = vmax.f32 %v3112, %v3144
        %v3177 = vmax.f32 %v3113, %v3145
        %v3178 = vmax.f32 %v3114, %v3146
        %v3179 = vmax.f32 %v3115, %v3147
        %v3180 = vmax.f32 %v3116, %v3148
        %v3181 = vmax.f32 %v3117, %v3149
        %v3182 = vmax.f32 %v3118, %v3150
        %v3183 = vmax.f32 %v3119, %v3151
        %v3184 = vmax.f32 %v3120, %v3152
        %v3185 = vmax.f32 %v3121, %v3153
        %v3186 = vmax.f32 %v3122, %v3154
        %v3187 = vmax.f32 %v3123, %v3155
        %v3188 = vmax.f32 %v3124, %v3156
        %v3189 = vmax.f32 %v3125, %v3157
        %v3190 = vmax.f32 %v3126, %v3158
        %v3191 = vmax.f32 %v3127, %v3159
        %v3192 = vmax.f32 %v3128, %v3160
        %v3193 = vmax.f32 %v3129, %v3161
        %v3194 = vmax.f32 %v3130, %v3162
        %v3195 = vmax.f32 %v3131, %v3163
        %v3196 = vmax.f32 %v3132, %v3164
        %v3197 = vld [vmem:[%s1657 + $0x8] sm:$0xff]
        %v3198 = vld [vmem:[%s1657 + $0x10] sm:$0xff]
        %v3199 = vld [vmem:[%s1657 + $0x28] sm:$0xff]
        %v3200 = vld [vmem:[%s1657 + $0x30] sm:$0xff]
        %v3201 = vld [vmem:[%s1657 + $0x48] sm:$0xff]
        %v3202 = vld [vmem:[%s1657 + $0x50] sm:$0xff]
        %v3203 = vld [vmem:[%s1657 + $0x68] sm:$0xff]
        %v3204 = vld [vmem:[%s1657 + $0x70] sm:$0xff]
        %v3205 = vld [vmem:[%s1657 + $0x88] sm:$0xff]
        %v3206 = vld [vmem:[%s1657 + $0x90] sm:$0xff]
        %v3207 = vld [vmem:[%s1657 + $0xa8] sm:$0xff]
        %v3208 = vld [vmem:[%s1657 + $0xb0] sm:$0xff]
        %v3209 = vld [vmem:[%s1657 + $0xc8] sm:$0xff]
        %v3210 = vld [vmem:[%s1657 + $0xd0] sm:$0xff]
        %v3211 = vld [vmem:[%s1657 + $0xe8] sm:$0xff]
        %v3212 = vld [vmem:[%s1657 + $0xf0] sm:$0xff]
        %v3213 = vld [vmem:[%s1657 + $0x108] sm:$0xff]
        %v3214 = vld [vmem:[%s1657 + $0x110] sm:$0xff]
        %v3215 = vld [vmem:[%s1657 + $0x128] sm:$0xff]
        %v3216 = vld [vmem:[%s1657 + $0x130] sm:$0xff]
        %v3217 = vld [vmem:[%s1657 + $0x148] sm:$0xff]
        %v3218 = vld [vmem:[%s1657 + $0x150] sm:$0xff]
        %v3219 = vld [vmem:[%s1657 + $0x168] sm:$0xff]
        %v3220 = vld [vmem:[%s1657 + $0x170] sm:$0xff]
        %v3221 = vld [vmem:[%s1657 + $0x188] sm:$0xff]
        %v3222 = vld [vmem:[%s1657 + $0x190] sm:$0xff]
        %v3223 = vld [vmem:[%s1657 + $0x1a8] sm:$0xff]
        %v3224 = vld [vmem:[%s1657 + $0x1b0] sm:$0xff]
        %v3225 = vld [vmem:[%s1657 + $0x1c8] sm:$0xff]
        %v3226 = vld [vmem:[%s1657 + $0x1d0] sm:$0xff]
        %v3227 = vld [vmem:[%s1657 + $0x1e8] sm:$0xff]
        %v3228 = vld [vmem:[%s1657 + $0x1f0] sm:$0xff]
        %v3229 = vmax.f32 %v3165, %v3197
        %v3230 = vmax.f32 %v3166, %v3198
        %v3231 = vmax.f32 %v3167, %v3199
        %v3232 = vmax.f32 %v3168, %v3200
        %v3233 = vmax.f32 %v3169, %v3201
        %v3234 = vmax.f32 %v3170, %v3202
        %v3235 = vmax.f32 %v3171, %v3203
        %v3236 = vmax.f32 %v3172, %v3204
        %v3237 = vmax.f32 %v3173, %v3205
        %v3238 = vmax.f32 %v3174, %v3206
        %v3239 = vmax.f32 %v3175, %v3207
        %v3240 = vmax.f32 %v3176, %v3208
        %v3241 = vmax.f32 %v3177, %v3209
        %v3242 = vmax.f32 %v3178, %v3210
        %v3243 = vmax.f32 %v3179, %v3211
        %v3244 = vmax.f32 %v3180, %v3212
        %v3245 = vmax.f32 %v3181, %v3213
        %v3246 = vmax.f32 %v3182, %v3214
        %v3247 = vmax.f32 %v3183, %v3215
        %v3248 = vmax.f32 %v3184, %v3216
        %v3249 = vmax.f32 %v3185, %v3217
        %v3250 = vmax.f32 %v3186, %v3218
        %v3251 = vmax.f32 %v3187, %v3219
        %v3252 = vmax.f32 %v3188, %v3220
        %v3253 = vmax.f32 %v3189, %v3221
        %v3254 = vmax.f32 %v3190, %v3222
        %v3255 = vmax.f32 %v3191, %v3223
        %v3256 = vmax.f32 %v3192, %v3224
        %v3257 = vmax.f32 %v3193, %v3225
        %v3258 = vmax.f32 %v3194, %v3226
        %v3259 = vmax.f32 %v3195, %v3227
        %v3260 = vmax.f32 %v3196, %v3228
        %v3261 = vld [vmem:[%s1722 + $0x8] sm:$0xff]
        %v3262 = vld [vmem:[%s1722 + $0x10] sm:$0xff]
        %v3263 = vld [vmem:[%s1722 + $0x28] sm:$0xff]
        %v3264 = vld [vmem:[%s1722 + $0x30] sm:$0xff]
        %v3265 = vld [vmem:[%s1722 + $0x48] sm:$0xff]
        %v3266 = vld [vmem:[%s1722 + $0x50] sm:$0xff]
        %v3267 = vld [vmem:[%s1722 + $0x68] sm:$0xff]
        %v3268 = vld [vmem:[%s1722 + $0x70] sm:$0xff]
        %v3269 = vld [vmem:[%s1722 + $0x88] sm:$0xff]
        %v3270 = vld [vmem:[%s1722 + $0x90] sm:$0xff]
        %v3271 = vld [vmem:[%s1722 + $0xa8] sm:$0xff]
        %v3272 = vld [vmem:[%s1722 + $0xb0] sm:$0xff]
        %v3273 = vld [vmem:[%s1722 + $0xc8] sm:$0xff]
        %v3274 = vld [vmem:[%s1722 + $0xd0] sm:$0xff]
        %v3275 = vld [vmem:[%s1722 + $0xe8] sm:$0xff]
        %v3276 = vld [vmem:[%s1722 + $0xf0] sm:$0xff]
        %v3277 = vld [vmem:[%s1722 + $0x108] sm:$0xff]
        %v3278 = vld [vmem:[%s1722 + $0x110] sm:$0xff]
        %v3279 = vld [vmem:[%s1722 + $0x128] sm:$0xff]
        %v3280 = vld [vmem:[%s1722 + $0x130] sm:$0xff]
        %v3281 = vld [vmem:[%s1722 + $0x148] sm:$0xff]
        %v3282 = vld [vmem:[%s1722 + $0x150] sm:$0xff]
        %v3283 = vld [vmem:[%s1722 + $0x168] sm:$0xff]
        %v3284 = vld [vmem:[%s1722 + $0x170] sm:$0xff]
        %v3285 = vld [vmem:[%s1722 + $0x188] sm:$0xff]
        %v3286 = vld [vmem:[%s1722 + $0x190] sm:$0xff]
        %v3287 = vld [vmem:[%s1722 + $0x1a8] sm:$0xff]
        %v3288 = vld [vmem:[%s1722 + $0x1b0] sm:$0xff]
        %v3289 = vld [vmem:[%s1722 + $0x1c8] sm:$0xff]
        %v3290 = vld [vmem:[%s1722 + $0x1d0] sm:$0xff]
        %v3291 = vld [vmem:[%s1722 + $0x1e8] sm:$0xff]
        %v3292 = vld [vmem:[%s1722 + $0x1f0] sm:$0xff]
        %v3293 = vmax.f32 %v3229, %v3261
        %v3294 = vmax.f32 %v3230, %v3262
        %v3295 = vmax.f32 %v3231, %v3263
        %v3296 = vmax.f32 %v3232, %v3264
        %v3297 = vmax.f32 %v3233, %v3265
        %v3298 = vmax.f32 %v3234, %v3266
        %v3299 = vmax.f32 %v3235, %v3267
        %v3300 = vmax.f32 %v3236, %v3268
        %v3301 = vmax.f32 %v3237, %v3269
        %v3302 = vmax.f32 %v3238, %v3270
        %v3303 = vmax.f32 %v3239, %v3271
        %v3304 = vmax.f32 %v3240, %v3272
        %v3305 = vmax.f32 %v3241, %v3273
        %v3306 = vmax.f32 %v3242, %v3274
        %v3307 = vmax.f32 %v3243, %v3275
        %v3308 = vmax.f32 %v3244, %v3276
        %v3309 = vmax.f32 %v3245, %v3277
        %v3310 = vmax.f32 %v3246, %v3278
        %v3311 = vmax.f32 %v3247, %v3279
        %v3312 = vmax.f32 %v3248, %v3280
        %v3313 = vmax.f32 %v3249, %v3281
        %v3314 = vmax.f32 %v3250, %v3282
        %v3315 = vmax.f32 %v3251, %v3283
        %v3316 = vmax.f32 %v3252, %v3284
        %v3317 = vmax.f32 %v3253, %v3285
        %v3318 = vmax.f32 %v3254, %v3286
        %v3319 = vmax.f32 %v3255, %v3287
        %v3320 = vmax.f32 %v3256, %v3288
        %v3321 = vmax.f32 %v3257, %v3289
        %v3322 = vmax.f32 %v3258, %v3290
        %v3323 = vmax.f32 %v3259, %v3291
        %v3324 = vmax.f32 %v3260, %v3292
        %v3325 = vpack.c.bf16 %v3293, %v3293
        %v3326 = vpack.c.bf16 %v3294, %v3294
        %v3327 = vpack.c.bf16 %v3295, %v3295
        %v3328 = vpack.c.bf16 %v3296, %v3296
        %v3329 = vpack.c.bf16 %v3297, %v3297
        %v3330 = vpack.c.bf16 %v3298, %v3298
        %v3331 = vpack.c.bf16 %v3299, %v3299
        %v3332 = vpack.c.bf16 %v3300, %v3300
        %v3333 = vpack.c.bf16 %v3301, %v3301
        %v3334 = vpack.c.bf16 %v3302, %v3302
        %v3335 = vpack.c.bf16 %v3303, %v3303
        %v3336 = vpack.c.bf16 %v3304, %v3304
        %v3337 = vpack.c.bf16 %v3305, %v3305
        %v3338 = vpack.c.bf16 %v3306, %v3306
        %v3339 = vpack.c.bf16 %v3307, %v3307
        %v3340 = vpack.c.bf16 %v3308, %v3308
        %v3341 = vpack.c.bf16 %v3309, %v3309
        %v3342 = vpack.c.bf16 %v3310, %v3310
        %v3343 = vpack.c.bf16 %v3311, %v3311
        %v3344 = vpack.c.bf16 %v3312, %v3312
        %v3345 = vpack.c.bf16 %v3313, %v3313
        %v3346 = vpack.c.bf16 %v3314, %v3314
        %v3347 = vpack.c.bf16 %v3315, %v3315
        %v3348 = vpack.c.bf16 %v3316, %v3316
        %v3349 = vpack.c.bf16 %v3317, %v3317
        %v3350 = vpack.c.bf16 %v3318, %v3318
        %v3351 = vpack.c.bf16 %v3319, %v3319
        %v3352 = vpack.c.bf16 %v3320, %v3320
        %v3353 = vpack.c.bf16 %v3321, %v3321
        %v3354 = vpack.c.bf16 %v3322, %v3322
        %v3355 = vpack.c.bf16 %v3323, %v3323
        %v3356 = vpack.c.bf16 %v3324, %v3324
        %3389 = vrot.lane.b32.xlu0 %v3325, 48
        %v3390 = vpop.permute.xlu0 %3389
        %3391 = vrot.lane.b32.xlu0 %v3326, 48
        %v3392 = vpop.permute.xlu0 %3391
        %3393 = vrot.lane.b32.xlu0 %v3327, 48
        %v3394 = vpop.permute.xlu0 %3393
        %3395 = vrot.lane.b32.xlu0 %v3328, 48
        %v3396 = vpop.permute.xlu0 %3395
        %3397 = vrot.lane.b32.xlu0 %v3329, 48
        %v3398 = vpop.permute.xlu0 %3397
        %3399 = vrot.lane.b32.xlu0 %v3330, 48
        %v3400 = vpop.permute.xlu0 %3399
        %3401 = vrot.lane.b32.xlu0 %v3331, 48
        %v3402 = vpop.permute.xlu0 %3401
        %3403 = vrot.lane.b32.xlu0 %v3332, 48
        %v3404 = vpop.permute.xlu0 %3403
        %3405 = vrot.lane.b32.xlu0 %v3333, 48
        %v3406 = vpop.permute.xlu0 %3405
        %3407 = vrot.lane.b32.xlu0 %v3334, 48
        %v3408 = vpop.permute.xlu0 %3407
        %3409 = vrot.lane.b32.xlu0 %v3335, 48
        %v3410 = vpop.permute.xlu0 %3409
        %3411 = vrot.lane.b32.xlu0 %v3336, 48
        %v3412 = vpop.permute.xlu0 %3411
        %3413 = vrot.lane.b32.xlu0 %v3337, 48
        %v3414 = vpop.permute.xlu0 %3413
        %3415 = vrot.lane.b32.xlu0 %v3338, 48
        %v3416 = vpop.permute.xlu0 %3415
        %3417 = vrot.lane.b32.xlu0 %v3339, 48
        %v3418 = vpop.permute.xlu0 %3417
        %3419 = vrot.lane.b32.xlu0 %v3340, 48
        %v3420 = vpop.permute.xlu0 %3419
        %3421 = vrot.lane.b32.xlu0 %v3341, 48
        %v3422 = vpop.permute.xlu0 %3421
        %3423 = vrot.lane.b32.xlu0 %v3342, 48
        %v3424 = vpop.permute.xlu0 %3423
        %3425 = vrot.lane.b32.xlu0 %v3343, 48
        %v3426 = vpop.permute.xlu0 %3425
        %3427 = vrot.lane.b32.xlu0 %v3344, 48
        %v3428 = vpop.permute.xlu0 %3427
        %3429 = vrot.lane.b32.xlu0 %v3345, 48
        %v3430 = vpop.permute.xlu0 %3429
        %3431 = vrot.lane.b32.xlu0 %v3346, 48
        %v3432 = vpop.permute.xlu0 %3431
        %3433 = vrot.lane.b32.xlu0 %v3347, 48
        %v3434 = vpop.permute.xlu0 %3433
        %3435 = vrot.lane.b32.xlu0 %v3348, 48
        %v3436 = vpop.permute.xlu0 %3435
        %3437 = vrot.lane.b32.xlu0 %v3349, 48
        %v3438 = vpop.permute.xlu0 %3437
        %3439 = vrot.lane.b32.xlu0 %v3350, 48
        %v3440 = vpop.permute.xlu0 %3439
        %3441 = vrot.lane.b32.xlu0 %v3351, 48
        %v3442 = vpop.permute.xlu0 %3441
        %3443 = vrot.lane.b32.xlu0 %v3352, 48
        %v3444 = vpop.permute.xlu0 %3443
        %3445 = vrot.lane.b32.xlu0 %v3353, 48
        %v3446 = vpop.permute.xlu0 %3445
        %3447 = vrot.lane.b32.xlu0 %v3354, 48
        %v3448 = vpop.permute.xlu0 %3447
        %3449 = vrot.lane.b32.xlu0 %v3355, 48
        %v3450 = vpop.permute.xlu0 %3449
        %3451 = vrot.lane.b32.xlu0 %v3356, 48
        %v3452 = vpop.permute.xlu0 %3451
        %vm3485 = vcmask 519552
        %3486 = vst.msk [vmem:[#allocation3] sm:$0xf] %vm3485, %v3390
        %3487 = vst.msk [vmem:[#allocation3 + $0x4] sm:$0xf] %vm3485, %v3392
        %3488 = vst.msk [vmem:[#allocation3 + $0x8] sm:$0xf] %vm3485, %v3394
        %3489 = vst.msk [vmem:[#allocation3 + $0xc] sm:$0xf] %vm3485, %v3396
        %3490 = vst.msk [vmem:[#allocation3 + $0x10] sm:$0xf] %vm3485, %v3398
        %3491 = vst.msk [vmem:[#allocation3 + $0x14] sm:$0xf] %vm3485, %v3400
        %3492 = vst.msk [vmem:[#allocation3 + $0x18] sm:$0xf] %vm3485, %v3402
        %3493 = vst.msk [vmem:[#allocation3 + $0x1c] sm:$0xf] %vm3485, %v3404
        %3494 = vst.msk [vmem:[#allocation3 + $0x20] sm:$0xf] %vm3485, %v3406
        %3495 = vst.msk [vmem:[#allocation3 + $0x24] sm:$0xf] %vm3485, %v3408
        %3496 = vst.msk [vmem:[#allocation3 + $0x28] sm:$0xf] %vm3485, %v3410
        %3497 = vst.msk [vmem:[#allocation3 + $0x2c] sm:$0xf] %vm3485, %v3412
        %3498 = vst.msk [vmem:[#allocation3 + $0x30] sm:$0xf] %vm3485, %v3414
        %3499 = vst.msk [vmem:[#allocation3 + $0x34] sm:$0xf] %vm3485, %v3416
        %3500 = vst.msk [vmem:[#allocation3 + $0x38] sm:$0xf] %vm3485, %v3418
        %3501 = vst.msk [vmem:[#allocation3 + $0x3c] sm:$0xf] %vm3485, %v3420
        %3502 = vst.msk [vmem:[#allocation3 + $0x40] sm:$0xf] %vm3485, %v3422
        %3503 = vst.msk [vmem:[#allocation3 + $0x44] sm:$0xf] %vm3485, %v3424
        %3504 = vst.msk [vmem:[#allocation3 + $0x48] sm:$0xf] %vm3485, %v3426
        %3505 = vst.msk [vmem:[#allocation3 + $0x4c] sm:$0xf] %vm3485, %v3428
        %3506 = vst.msk [vmem:[#allocation3 + $0x50] sm:$0xf] %vm3485, %v3430
        %3507 = vst.msk [vmem:[#allocation3 + $0x54] sm:$0xf] %vm3485, %v3432
        %3508 = vst.msk [vmem:[#allocation3 + $0x58] sm:$0xf] %vm3485, %v3434
        %3509 = vst.msk [vmem:[#allocation3 + $0x5c] sm:$0xf] %vm3485, %v3436
        %3510 = vst.msk [vmem:[#allocation3 + $0x60] sm:$0xf] %vm3485, %v3438
        %3511 = vst.msk [vmem:[#allocation3 + $0x64] sm:$0xf] %vm3485, %v3440
        %3512 = vst.msk [vmem:[#allocation3 + $0x68] sm:$0xf] %vm3485, %v3442
        %3513 = vst.msk [vmem:[#allocation3 + $0x6c] sm:$0xf] %vm3485, %v3444
        %3514 = vst.msk [vmem:[#allocation3 + $0x70] sm:$0xf] %vm3485, %v3446
        %3515 = vst.msk [vmem:[#allocation3 + $0x74] sm:$0xf] %vm3485, %v3448
        %3516 = vst.msk [vmem:[#allocation3 + $0x78] sm:$0xf] %vm3485, %v3450
        %3517 = vst.msk [vmem:[#allocation3 + $0x7c] sm:$0xf] %vm3485, %v3452
        %v3518 = vld [vmem:[#allocation3] sm:$0xf]
        %v3519 = vld [vmem:[#allocation3 + $0x4] sm:$0xf]
        %v3520 = vld [vmem:[#allocation3 + $0x8] sm:$0xf]
        %v3521 = vld [vmem:[#allocation3 + $0xc] sm:$0xf]
        %v3522 = vld [vmem:[#allocation3 + $0x10] sm:$0xf]
        %v3523 = vld [vmem:[#allocation3 + $0x14] sm:$0xf]
        %v3524 = vld [vmem:[#allocation3 + $0x18] sm:$0xf]
        %v3525 = vld [vmem:[#allocation3 + $0x1c] sm:$0xf]
        %v3526 = vld [vmem:[#allocation3 + $0x20] sm:$0xf]
        %v3527 = vld [vmem:[#allocation3 + $0x24] sm:$0xf]
        %v3528 = vld [vmem:[#allocation3 + $0x28] sm:$0xf]
        %v3529 = vld [vmem:[#allocation3 + $0x2c] sm:$0xf]
        %v3530 = vld [vmem:[#allocation3 + $0x30] sm:$0xf]
        %v3531 = vld [vmem:[#allocation3 + $0x34] sm:$0xf]
        %v3532 = vld [vmem:[#allocation3 + $0x38] sm:$0xf]
        %v3533 = vld [vmem:[#allocation3 + $0x3c] sm:$0xf]
        %v3534 = vld [vmem:[#allocation3 + $0x40] sm:$0xf]
        %v3535 = vld [vmem:[#allocation3 + $0x44] sm:$0xf]
        %v3536 = vld [vmem:[#allocation3 + $0x48] sm:$0xf]
        %v3537 = vld [vmem:[#allocation3 + $0x4c] sm:$0xf]
        %v3538 = vld [vmem:[#allocation3 + $0x50] sm:$0xf]
        %v3539 = vld [vmem:[#allocation3 + $0x54] sm:$0xf]
        %v3540 = vld [vmem:[#allocation3 + $0x58] sm:$0xf]
        %v3541 = vld [vmem:[#allocation3 + $0x5c] sm:$0xf]
        %v3542 = vld [vmem:[#allocation3 + $0x60] sm:$0xf]
        %v3543 = vld [vmem:[#allocation3 + $0x64] sm:$0xf]
        %v3544 = vld [vmem:[#allocation3 + $0x68] sm:$0xf]
        %v3545 = vld [vmem:[#allocation3 + $0x6c] sm:$0xf]
        %v3546 = vld [vmem:[#allocation3 + $0x70] sm:$0xf]
        %v3547 = vld [vmem:[#allocation3 + $0x74] sm:$0xf]
        %v3548 = vld [vmem:[#allocation3 + $0x78] sm:$0xf]
        %v3549 = vld [vmem:[#allocation3 + $0x7c] sm:$0xf]
        %v3550 = vld [vmem:[%s3] sm:$0xf]
        %v3551 = vld [vmem:[%s3 + $0x4] sm:$0xf]
        %v3552 = vld [vmem:[%s3 + $0x8] sm:$0xf]
        %v3553 = vld [vmem:[%s3 + $0xc] sm:$0xf]
        %v3554 = vld [vmem:[%s3 + $0x10] sm:$0xf]
        %v3555 = vld [vmem:[%s3 + $0x14] sm:$0xf]
        %v3556 = vld [vmem:[%s3 + $0x18] sm:$0xf]
        %v3557 = vld [vmem:[%s3 + $0x1c] sm:$0xf]
        %v3558 = vld [vmem:[%s4] sm:$0x1]
        %v3560 = vperm.slane %v3558, 0
        %v3594 = vunpack.c.l.b16 %v3518
        %v3595 = vunpack.c.l.b16 %v3519
        %v3596 = vunpack.c.l.b16 %v3520
        %v3597 = vunpack.c.l.b16 %v3521
        %v3598 = vunpack.c.l.b16 %v3522
        %v3599 = vunpack.c.l.b16 %v3523
        %v3600 = vunpack.c.l.b16 %v3524
        %v3601 = vunpack.c.l.b16 %v3525
        %v3602 = vunpack.c.l.b16 %v3526
        %v3603 = vunpack.c.l.b16 %v3527
        %v3604 = vunpack.c.l.b16 %v3528
        %v3605 = vunpack.c.l.b16 %v3529
        %v3606 = vunpack.c.l.b16 %v3530
        %v3607 = vunpack.c.l.b16 %v3531
        %v3608 = vunpack.c.l.b16 %v3532
        %v3609 = vunpack.c.l.b16 %v3533
        %v3610 = vunpack.c.l.b16 %v3534
        %v3611 = vunpack.c.l.b16 %v3535
        %v3612 = vunpack.c.l.b16 %v3536
        %v3613 = vunpack.c.l.b16 %v3537
        %v3614 = vunpack.c.l.b16 %v3538
        %v3615 = vunpack.c.l.b16 %v3539
        %v3616 = vunpack.c.l.b16 %v3540
        %v3617 = vunpack.c.l.b16 %v3541
        %v3618 = vunpack.c.l.b16 %v3542
        %v3619 = vunpack.c.l.b16 %v3543
        %v3620 = vunpack.c.l.b16 %v3544
        %v3621 = vunpack.c.l.b16 %v3545
        %v3622 = vunpack.c.l.b16 %v3546
        %v3623 = vunpack.c.l.b16 %v3547
        %v3624 = vunpack.c.l.b16 %v3548
        %v3625 = vunpack.c.l.b16 %v3549
        %v3626 = vpack.c.b16 %v3595, %v3594
        %v3627 = vpack.c.b16 %v3597, %v3596
        %v3628 = vpack.c.b16 %v3599, %v3598
        %v3629 = vpack.c.b16 %v3601, %v3600
        %v3630 = vpack.c.b16 %v3603, %v3602
        %v3631 = vpack.c.b16 %v3605, %v3604
        %v3632 = vpack.c.b16 %v3607, %v3606
        %v3633 = vpack.c.b16 %v3609, %v3608
        %v3634 = vpack.c.b16 %v3611, %v3610
        %v3635 = vpack.c.b16 %v3613, %v3612
        %v3636 = vpack.c.b16 %v3615, %v3614
        %v3637 = vpack.c.b16 %v3617, %v3616
        %v3638 = vpack.c.b16 %v3619, %v3618
        %v3639 = vpack.c.b16 %v3621, %v3620
        %v3640 = vpack.c.b16 %v3623, %v3622
        %v3641 = vpack.c.b16 %v3625, %v3624
        %v3650 = vunpack.c.l.b16 %v3550
        %v3651 = vunpack.c.l.b16 %v3551
        %v3652 = vunpack.c.l.b16 %v3552
        %v3653 = vunpack.c.l.b16 %v3553
        %v3654 = vunpack.c.l.b16 %v3554
        %v3655 = vunpack.c.l.b16 %v3555
        %v3656 = vunpack.c.l.b16 %v3556
        %v3657 = vunpack.c.l.b16 %v3557
        %v3658 = vpack.c.b16 %v3651, %v3650
        %v3659 = vpack.c.b16 %v3653, %v3652
        %v3660 = vpack.c.b16 %v3655, %v3654
        %v3661 = vpack.c.b16 %v3657, %v3656
        %vm3666 = vcmask 523264
        %v3668 = vsel %vm3666, %v3626, 0
        %v3671 = vsel %vm3666, %v3627, 0
        %v3674 = vsel %vm3666, %v3628, 0
        %v3677 = vsel %vm3666, %v3629, 0
        %v3680 = vsel %vm3666, %v3630, 0
        %v3683 = vsel %vm3666, %v3631, 0
        %v3686 = vsel %vm3666, %v3632, 0
        %v3689 = vsel %vm3666, %v3633, 0
        %v3692 = vsel %vm3666, %v3634, 0
        %v3695 = vsel %vm3666, %v3635, 0
        %v3698 = vsel %vm3666, %v3636, 0
        %v3701 = vsel %vm3666, %v3637, 0
        %v3704 = vsel %vm3666, %v3638, 0
        %v3707 = vsel %vm3666, %v3639, 0
        %v3710 = vsel %vm3666, %v3640, 0
        %v3713 = vsel %vm3666, %v3641, 0
        %3715 = vmatpush.bf16.msra.mxu0 0
        %3716 = vmatpush.bf16.msra.mxu0 0
        %3717 = vmatpush.bf16.msra.mxu0 0
        %3718 = vmatpush.bf16.msra.mxu0 0
        %3719 = vmatpush.bf16.msra.mxu0 %v3661
        %3720 = vmatpush.bf16.msra.mxu0 %v3660
        %3721 = vmatpush.bf16.msra.mxu0 %v3659
        %3722 = vmatpush.bf16.msra.mxu0 %v3658
        %3723 = vmatmul.bf16.gmra.mxu0 %v3668
        %v3724 = vpop.f32.mrf.mxu0
        %v3725 = vadd.f32 %v3560, %v3724
        %v3726 = vpop.f32.mrf.mxu0
        %v3727 = vadd.f32 %v3560, %v3726
        %3728 = vmatmul.bf16.gmra.mxu0 %v3671
        %v3729 = vpop.f32.mrf.mxu0
        %v3730 = vadd.f32 %v3560, %v3729
        %v3731 = vpop.f32.mrf.mxu0
        %v3732 = vadd.f32 %v3560, %v3731
        %3733 = vmatmul.bf16.gmra.mxu0 %v3674
        %v3734 = vpop.f32.mrf.mxu0
        %v3735 = vadd.f32 %v3560, %v3734
        %v3736 = vpop.f32.mrf.mxu0
        %v3737 = vadd.f32 %v3560, %v3736
        %3738 = vmatmul.bf16.gmra.mxu0 %v3677
        %v3739 = vpop.f32.mrf.mxu0
        %v3740 = vadd.f32 %v3560, %v3739
        %v3741 = vpop.f32.mrf.mxu0
        %v3742 = vadd.f32 %v3560, %v3741
        %3743 = vmatmul.bf16.gmra.mxu0 %v3680
        %v3744 = vpop.f32.mrf.mxu0
        %v3745 = vadd.f32 %v3560, %v3744
        %v3746 = vpop.f32.mrf.mxu0
        %v3747 = vadd.f32 %v3560, %v3746
        %3748 = vmatmul.bf16.gmra.mxu0 %v3683
        %v3749 = vpop.f32.mrf.mxu0
        %v3750 = vadd.f32 %v3560, %v3749
        %v3751 = vpop.f32.mrf.mxu0
        %v3752 = vadd.f32 %v3560, %v3751
        %3753 = vmatmul.bf16.gmra.mxu0 %v3686
        %v3754 = vpop.f32.mrf.mxu0
        %v3755 = vadd.f32 %v3560, %v3754
        %v3756 = vpop.f32.mrf.mxu0
        %v3757 = vadd.f32 %v3560, %v3756
        %3758 = vmatmul.bf16.gmra.mxu0 %v3689
        %v3759 = vpop.f32.mrf.mxu0
        %v3760 = vadd.f32 %v3560, %v3759
        %v3761 = vpop.f32.mrf.mxu0
        %v3762 = vadd.f32 %v3560, %v3761
        %3763 = vmatmul.bf16.gmra.mxu0 %v3692
        %v3764 = vpop.f32.mrf.mxu0
        %v3765 = vadd.f32 %v3560, %v3764
        %v3766 = vpop.f32.mrf.mxu0
        %v3767 = vadd.f32 %v3560, %v3766
        %3768 = vmatmul.bf16.gmra.mxu0 %v3695
        %v3769 = vpop.f32.mrf.mxu0
        %v3770 = vadd.f32 %v3560, %v3769
        %v3771 = vpop.f32.mrf.mxu0
        %v3772 = vadd.f32 %v3560, %v3771
        %3773 = vmatmul.bf16.gmra.mxu0 %v3698
        %v3774 = vpop.f32.mrf.mxu0
        %v3775 = vadd.f32 %v3560, %v3774
        %v3776 = vpop.f32.mrf.mxu0
        %v3777 = vadd.f32 %v3560, %v3776
        %3778 = vmatmul.bf16.gmra.mxu0 %v3701
        %v3779 = vpop.f32.mrf.mxu0
        %v3780 = vadd.f32 %v3560, %v3779
        %v3781 = vpop.f32.mrf.mxu0
        %v3782 = vadd.f32 %v3560, %v3781
        %3783 = vmatmul.bf16.gmra.mxu0 %v3704
        %v3784 = vpop.f32.mrf.mxu0
        %v3785 = vadd.f32 %v3560, %v3784
        %v3786 = vpop.f32.mrf.mxu0
        %v3787 = vadd.f32 %v3560, %v3786
        %3788 = vmatmul.bf16.gmra.mxu0 %v3707
        %v3789 = vpop.f32.mrf.mxu0
        %v3790 = vadd.f32 %v3560, %v3789
        %v3791 = vpop.f32.mrf.mxu0
        %v3792 = vadd.f32 %v3560, %v3791
        %3793 = vmatmul.bf16.gmra.mxu0 %v3710
        %v3794 = vpop.f32.mrf.mxu0
        %v3795 = vadd.f32 %v3560, %v3794
        %v3796 = vpop.f32.mrf.mxu0
        %v3797 = vadd.f32 %v3560, %v3796
        %3798 = vmatmul.bf16.gmra.mxu0 %v3713
        %v3799 = vpop.f32.mrf.mxu0
        %v3800 = vadd.f32 %v3560, %v3799
        %v3801 = vpop.f32.mrf.mxu0
        %v3802 = vadd.f32 %v3560, %v3801
        %3803 = vdwg.mxu0
        %v3804 = vxor.u32 %v3725, 2147483648
        %v3805 = vxor.u32 %v3727, 2147483648
        %v3806 = vxor.u32 %v3730, 2147483648
        %v3807 = vxor.u32 %v3732, 2147483648
        %v3808 = vxor.u32 %v3735, 2147483648
        %v3809 = vxor.u32 %v3737, 2147483648
        %v3810 = vxor.u32 %v3740, 2147483648
        %v3811 = vxor.u32 %v3742, 2147483648
        %v3812 = vxor.u32 %v3745, 2147483648
        %v3813 = vxor.u32 %v3747, 2147483648
        %v3814 = vxor.u32 %v3750, 2147483648
        %v3815 = vxor.u32 %v3752, 2147483648
        %v3816 = vxor.u32 %v3755, 2147483648
        %v3817 = vxor.u32 %v3757, 2147483648
        %v3818 = vxor.u32 %v3760, 2147483648
        %v3819 = vxor.u32 %v3762, 2147483648
        %v3820 = vxor.u32 %v3765, 2147483648
        %v3821 = vxor.u32 %v3767, 2147483648
        %v3822 = vxor.u32 %v3770, 2147483648
        %v3823 = vxor.u32 %v3772, 2147483648
        %v3824 = vxor.u32 %v3775, 2147483648
        %v3825 = vxor.u32 %v3777, 2147483648
        %v3826 = vxor.u32 %v3780, 2147483648
        %v3827 = vxor.u32 %v3782, 2147483648
        %v3828 = vxor.u32 %v3785, 2147483648
        %v3829 = vxor.u32 %v3787, 2147483648
        %v3830 = vxor.u32 %v3790, 2147483648
        %v3831 = vxor.u32 %v3792, 2147483648
        %v3832 = vxor.u32 %v3795, 2147483648
        %v3833 = vxor.u32 %v3797, 2147483648
        %v3834 = vxor.u32 %v3800, 2147483648
        %v3835 = vxor.u32 %v3802, 2147483648
        %v3836 = vmul.f32 %v3804, 1.442695
        %v3837 = vpow.pop %v3836
        %v3838 = vmul.f32 %v3805, 1.442695
        %v3839 = vpow.pop %v3838
        %v3840 = vmul.f32 %v3806, 1.442695
        %v3841 = vpow.pop %v3840
        %v3842 = vmul.f32 %v3807, 1.442695
        %v3843 = vpow.pop %v3842
        %v3844 = vmul.f32 %v3808, 1.442695
        %v3845 = vpow.pop %v3844
        %v3846 = vmul.f32 %v3809, 1.442695
        %v3847 = vpow.pop %v3846
        %v3848 = vmul.f32 %v3810, 1.442695
        %v3849 = vpow.pop %v3848
        %v3850 = vmul.f32 %v3811, 1.442695
        %v3851 = vpow.pop %v3850
        %v3852 = vmul.f32 %v3812, 1.442695
        %v3853 = vpow.pop %v3852
        %v3854 = vmul.f32 %v3813, 1.442695
        %v3855 = vpow.pop %v3854
        %v3856 = vmul.f32 %v3814, 1.442695
        %v3857 = vpow.pop %v3856
        %v3858 = vmul.f32 %v3815, 1.442695
        %v3859 = vpow.pop %v3858
        %v3860 = vmul.f32 %v3816, 1.442695
        %v3861 = vpow.pop %v3860
        %v3862 = vmul.f32 %v3817, 1.442695
        %v3863 = vpow.pop %v3862
        %v3864 = vmul.f32 %v3818, 1.442695
        %v3865 = vpow.pop %v3864
        %v3866 = vmul.f32 %v3819, 1.442695
        %v3867 = vpow.pop %v3866
        %v3868 = vmul.f32 %v3820, 1.442695
        %v3869 = vpow.pop %v3868
        %v3870 = vmul.f32 %v3821, 1.442695
        %v3871 = vpow.pop %v3870
        %v3872 = vmul.f32 %v3822, 1.442695
        %v3873 = vpow.pop %v3872
        %v3874 = vmul.f32 %v3823, 1.442695
        %v3875 = vpow.pop %v3874
        %v3876 = vmul.f32 %v3824, 1.442695
        %v3877 = vpow.pop %v3876
        %v3878 = vmul.f32 %v3825, 1.442695
        %v3879 = vpow.pop %v3878
        %v3880 = vmul.f32 %v3826, 1.442695
        %v3881 = vpow.pop %v3880
        %v3882 = vmul.f32 %v3827, 1.442695
        %v3883 = vpow.pop %v3882
        %v3884 = vmul.f32 %v3828, 1.442695
        %v3885 = vpow.pop %v3884
        %v3886 = vmul.f32 %v3829, 1.442695
        %v3887 = vpow.pop %v3886
        %v3888 = vmul.f32 %v3830, 1.442695
        %v3889 = vpow.pop %v3888
        %v3890 = vmul.f32 %v3831, 1.442695
        %v3891 = vpow.pop %v3890
        %v3892 = vmul.f32 %v3832, 1.442695
        %v3893 = vpow.pop %v3892
        %v3894 = vmul.f32 %v3833, 1.442695
        %v3895 = vpow.pop %v3894
        %v3896 = vmul.f32 %v3834, 1.442695
        %v3897 = vpow.pop %v3896
        %v3898 = vmul.f32 %v3835, 1.442695
        %v3899 = vpow.pop %v3898
        %v3900 = vadd.f32 %v3837, 1.0
        %v3901 = vadd.f32 %v3839, 1.0
        %v3902 = vadd.f32 %v3841, 1.0
        %v3903 = vadd.f32 %v3843, 1.0
        %v3904 = vadd.f32 %v3845, 1.0
        %v3905 = vadd.f32 %v3847, 1.0
        %v3906 = vadd.f32 %v3849, 1.0
        %v3907 = vadd.f32 %v3851, 1.0
        %v3908 = vadd.f32 %v3853, 1.0
        %v3909 = vadd.f32 %v3855, 1.0
        %v3910 = vadd.f32 %v3857, 1.0
        %v3911 = vadd.f32 %v3859, 1.0
        %v3912 = vadd.f32 %v3861, 1.0
        %v3913 = vadd.f32 %v3863, 1.0
        %v3914 = vadd.f32 %v3865, 1.0
        %v3915 = vadd.f32 %v3867, 1.0
        %v3916 = vadd.f32 %v3869, 1.0
        %v3917 = vadd.f32 %v3871, 1.0
        %v3918 = vadd.f32 %v3873, 1.0
        %v3919 = vadd.f32 %v3875, 1.0
        %v3920 = vadd.f32 %v3877, 1.0
        %v3921 = vadd.f32 %v3879, 1.0
        %v3922 = vadd.f32 %v3881, 1.0
        %v3923 = vadd.f32 %v3883, 1.0
        %v3924 = vadd.f32 %v3885, 1.0
        %v3925 = vadd.f32 %v3887, 1.0
        %v3926 = vadd.f32 %v3889, 1.0
        %v3927 = vadd.f32 %v3891, 1.0
        %v3928 = vadd.f32 %v3893, 1.0
        %v3929 = vadd.f32 %v3895, 1.0
        %v3930 = vadd.f32 %v3897, 1.0
        %v3931 = vadd.f32 %v3899, 1.0
        %v3932 = vrcp.pop %v3900
        %v3933 = vmul.f32 %v3900, %v3932
        %v3934 = vsub.f32 1.0, %v3933
        %v3935 = vmul.f32 %v3932, %v3934
        %v3936 = vadd.f32 %v3932, %v3935
        %vm3937 = vweird.f32 %v3900
        %vm3938 = vweird.f32 %v3932
        %vm3939 = vmor %vm3937, %vm3938
        %v3940 = vsel %vm3939, %v3932, %v3936
        %v3941 = vand.u32 2147483647, %v3900
        %vm3942 = vcmp.eq.f32.partialorder %v3941, 8.507059e+37
        %v3943 = vand.u32 %v3900, 2147483648
        %v3944 = vor.u32 1.1754944e-38, %v3943
        %v3945 = vsel %vm3942, %v3944, %v3940
        %v3946 = vmul.f32 1.0, %v3945
        %v3947 = vrcp.pop %v3901
        %v3948 = vmul.f32 %v3901, %v3947
        %v3949 = vsub.f32 1.0, %v3948
        %v3950 = vmul.f32 %v3947, %v3949
        %v3951 = vadd.f32 %v3947, %v3950
        %vm3952 = vweird.f32 %v3901
        %vm3953 = vweird.f32 %v3947
        %vm3954 = vmor %vm3952, %vm3953
        %v3955 = vsel %vm3954, %v3947, %v3951
        %v3956 = vand.u32 2147483647, %v3901
        %vm3957 = vcmp.eq.f32.partialorder %v3956, 8.507059e+37
        %v3958 = vand.u32 %v3901, 2147483648
        %v3959 = vor.u32 1.1754944e-38, %v3958
        %v3960 = vsel %vm3957, %v3959, %v3955
        %v3961 = vmul.f32 1.0, %v3960
        %v3962 = vrcp.pop %v3902
        %v3963 = vmul.f32 %v3902, %v3962
        %v3964 = vsub.f32 1.0, %v3963
        %v3965 = vmul.f32 %v3962, %v3964
        %v3966 = vadd.f32 %v3962, %v3965
        %vm3967 = vweird.f32 %v3902
        %vm3968 = vweird.f32 %v3962
        %vm3969 = vmor %vm3967, %vm3968
        %v3970 = vsel %vm3969, %v3962, %v3966
        %v3971 = vand.u32 2147483647, %v3902
        %vm3972 = vcmp.eq.f32.partialorder %v3971, 8.507059e+37
        %v3973 = vand.u32 %v3902, 2147483648
        %v3974 = vor.u32 1.1754944e-38, %v3973
        %v3975 = vsel %vm3972, %v3974, %v3970
        %v3976 = vmul.f32 1.0, %v3975
        %v3977 = vrcp.pop %v3903
        %v3978 = vmul.f32 %v3903, %v3977
        %v3979 = vsub.f32 1.0, %v3978
        %v3980 = vmul.f32 %v3977, %v3979
        %v3981 = vadd.f32 %v3977, %v3980
        %vm3982 = vweird.f32 %v3903
        %vm3983 = vweird.f32 %v3977
        %vm3984 = vmor %vm3982, %vm3983
        %v3985 = vsel %vm3984, %v3977, %v3981
        %v3986 = vand.u32 2147483647, %v3903
        %vm3987 = vcmp.eq.f32.partialorder %v3986, 8.507059e+37
        %v3988 = vand.u32 %v3903, 2147483648
        %v3989 = vor.u32 1.1754944e-38, %v3988
        %v3990 = vsel %vm3987, %v3989, %v3985
        %v3991 = vmul.f32 1.0, %v3990
        %v3992 = vrcp.pop %v3904
        %v3993 = vmul.f32 %v3904, %v3992
        %v3994 = vsub.f32 1.0, %v3993
        %v3995 = vmul.f32 %v3992, %v3994
        %v3996 = vadd.f32 %v3992, %v3995
        %vm3997 = vweird.f32 %v3904
        %vm3998 = vweird.f32 %v3992
        %vm3999 = vmor %vm3997, %vm3998
        %v4000 = vsel %vm3999, %v3992, %v3996
        %v4001 = vand.u32 2147483647, %v3904
        %vm4002 = vcmp.eq.f32.partialorder %v4001, 8.507059e+37
        %v4003 = vand.u32 %v3904, 2147483648
        %v4004 = vor.u32 1.1754944e-38, %v4003
        %v4005 = vsel %vm4002, %v4004, %v4000
        %v4006 = vmul.f32 1.0, %v4005
        %v4007 = vrcp.pop %v3905
        %v4008 = vmul.f32 %v3905, %v4007
        %v4009 = vsub.f32 1.0, %v4008
        %v4010 = vmul.f32 %v4007, %v4009
        %v4011 = vadd.f32 %v4007, %v4010
        %vm4012 = vweird.f32 %v3905
        %vm4013 = vweird.f32 %v4007
        %vm4014 = vmor %vm4012, %vm4013
        %v4015 = vsel %vm4014, %v4007, %v4011
        %v4016 = vand.u32 2147483647, %v3905
        %vm4017 = vcmp.eq.f32.partialorder %v4016, 8.507059e+37
        %v4018 = vand.u32 %v3905, 2147483648
        %v4019 = vor.u32 1.1754944e-38, %v4018
        %v4020 = vsel %vm4017, %v4019, %v4015
        %v4021 = vmul.f32 1.0, %v4020
        %v4022 = vrcp.pop %v3906
        %v4023 = vmul.f32 %v3906, %v4022
        %v4024 = vsub.f32 1.0, %v4023
        %v4025 = vmul.f32 %v4022, %v4024
        %v4026 = vadd.f32 %v4022, %v4025
        %vm4027 = vweird.f32 %v3906
        %vm4028 = vweird.f32 %v4022
        %vm4029 = vmor %vm4027, %vm4028
        %v4030 = vsel %vm4029, %v4022, %v4026
        %v4031 = vand.u32 2147483647, %v3906
        %vm4032 = vcmp.eq.f32.partialorder %v4031, 8.507059e+37
        %v4033 = vand.u32 %v3906, 2147483648
        %v4034 = vor.u32 1.1754944e-38, %v4033
        %v4035 = vsel %vm4032, %v4034, %v4030
        %v4036 = vmul.f32 1.0, %v4035
        %v4037 = vrcp.pop %v3907
        %v4038 = vmul.f32 %v3907, %v4037
        %v4039 = vsub.f32 1.0, %v4038
        %v4040 = vmul.f32 %v4037, %v4039
        %v4041 = vadd.f32 %v4037, %v4040
        %vm4042 = vweird.f32 %v3907
        %vm4043 = vweird.f32 %v4037
        %vm4044 = vmor %vm4042, %vm4043
        %v4045 = vsel %vm4044, %v4037, %v4041
        %v4046 = vand.u32 2147483647, %v3907
        %vm4047 = vcmp.eq.f32.partialorder %v4046, 8.507059e+37
        %v4048 = vand.u32 %v3907, 2147483648
        %v4049 = vor.u32 1.1754944e-38, %v4048
        %v4050 = vsel %vm4047, %v4049, %v4045
        %v4051 = vmul.f32 1.0, %v4050
        %v4052 = vrcp.pop %v3908
        %v4053 = vmul.f32 %v3908, %v4052
        %v4054 = vsub.f32 1.0, %v4053
        %v4055 = vmul.f32 %v4052, %v4054
        %v4056 = vadd.f32 %v4052, %v4055
        %vm4057 = vweird.f32 %v3908
        %vm4058 = vweird.f32 %v4052
        %vm4059 = vmor %vm4057, %vm4058
        %v4060 = vsel %vm4059, %v4052, %v4056
        %v4061 = vand.u32 2147483647, %v3908
        %vm4062 = vcmp.eq.f32.partialorder %v4061, 8.507059e+37
        %v4063 = vand.u32 %v3908, 2147483648
        %v4064 = vor.u32 1.1754944e-38, %v4063
        %v4065 = vsel %vm4062, %v4064, %v4060
        %v4066 = vmul.f32 1.0, %v4065
        %v4067 = vrcp.pop %v3909
        %v4068 = vmul.f32 %v3909, %v4067
        %v4069 = vsub.f32 1.0, %v4068
        %v4070 = vmul.f32 %v4067, %v4069
        %v4071 = vadd.f32 %v4067, %v4070
        %vm4072 = vweird.f32 %v3909
        %vm4073 = vweird.f32 %v4067
        %vm4074 = vmor %vm4072, %vm4073
        %v4075 = vsel %vm4074, %v4067, %v4071
        %v4076 = vand.u32 2147483647, %v3909
        %vm4077 = vcmp.eq.f32.partialorder %v4076, 8.507059e+37
        %v4078 = vand.u32 %v3909, 2147483648
        %v4079 = vor.u32 1.1754944e-38, %v4078
        %v4080 = vsel %vm4077, %v4079, %v4075
        %v4081 = vmul.f32 1.0, %v4080
        %v4082 = vrcp.pop %v3910
        %v4083 = vmul.f32 %v3910, %v4082
        %v4084 = vsub.f32 1.0, %v4083
        %v4085 = vmul.f32 %v4082, %v4084
        %v4086 = vadd.f32 %v4082, %v4085
        %vm4087 = vweird.f32 %v3910
        %vm4088 = vweird.f32 %v4082
        %vm4089 = vmor %vm4087, %vm4088
        %v4090 = vsel %vm4089, %v4082, %v4086
        %v4091 = vand.u32 2147483647, %v3910
        %vm4092 = vcmp.eq.f32.partialorder %v4091, 8.507059e+37
        %v4093 = vand.u32 %v3910, 2147483648
        %v4094 = vor.u32 1.1754944e-38, %v4093
        %v4095 = vsel %vm4092, %v4094, %v4090
        %v4096 = vmul.f32 1.0, %v4095
        %v4097 = vrcp.pop %v3911
        %v4098 = vmul.f32 %v3911, %v4097
        %v4099 = vsub.f32 1.0, %v4098
        %v4100 = vmul.f32 %v4097, %v4099
        %v4101 = vadd.f32 %v4097, %v4100
        %vm4102 = vweird.f32 %v3911
        %vm4103 = vweird.f32 %v4097
        %vm4104 = vmor %vm4102, %vm4103
        %v4105 = vsel %vm4104, %v4097, %v4101
        %v4106 = vand.u32 2147483647, %v3911
        %vm4107 = vcmp.eq.f32.partialorder %v4106, 8.507059e+37
        %v4108 = vand.u32 %v3911, 2147483648
        %v4109 = vor.u32 1.1754944e-38, %v4108
        %v4110 = vsel %vm4107, %v4109, %v4105
        %v4111 = vmul.f32 1.0, %v4110
        %v4112 = vrcp.pop %v3912
        %v4113 = vmul.f32 %v3912, %v4112
        %v4114 = vsub.f32 1.0, %v4113
        %v4115 = vmul.f32 %v4112, %v4114
        %v4116 = vadd.f32 %v4112, %v4115
        %vm4117 = vweird.f32 %v3912
        %vm4118 = vweird.f32 %v4112
        %vm4119 = vmor %vm4117, %vm4118
        %v4120 = vsel %vm4119, %v4112, %v4116
        %v4121 = vand.u32 2147483647, %v3912
        %vm4122 = vcmp.eq.f32.partialorder %v4121, 8.507059e+37
        %v4123 = vand.u32 %v3912, 2147483648
        %v4124 = vor.u32 1.1754944e-38, %v4123
        %v4125 = vsel %vm4122, %v4124, %v4120
        %v4126 = vmul.f32 1.0, %v4125
        %v4127 = vrcp.pop %v3913
        %v4128 = vmul.f32 %v3913, %v4127
        %v4129 = vsub.f32 1.0, %v4128
        %v4130 = vmul.f32 %v4127, %v4129
        %v4131 = vadd.f32 %v4127, %v4130
        %vm4132 = vweird.f32 %v3913
        %vm4133 = vweird.f32 %v4127
        %vm4134 = vmor %vm4132, %vm4133
        %v4135 = vsel %vm4134, %v4127, %v4131
        %v4136 = vand.u32 2147483647, %v3913
        %vm4137 = vcmp.eq.f32.partialorder %v4136, 8.507059e+37
        %v4138 = vand.u32 %v3913, 2147483648
        %v4139 = vor.u32 1.1754944e-38, %v4138
        %v4140 = vsel %vm4137, %v4139, %v4135
        %v4141 = vmul.f32 1.0, %v4140
        %v4142 = vrcp.pop %v3914
        %v4143 = vmul.f32 %v3914, %v4142
        %v4144 = vsub.f32 1.0, %v4143
        %v4145 = vmul.f32 %v4142, %v4144
        %v4146 = vadd.f32 %v4142, %v4145
        %vm4147 = vweird.f32 %v3914
        %vm4148 = vweird.f32 %v4142
        %vm4149 = vmor %vm4147, %vm4148
        %v4150 = vsel %vm4149, %v4142, %v4146
        %v4151 = vand.u32 2147483647, %v3914
        %vm4152 = vcmp.eq.f32.partialorder %v4151, 8.507059e+37
        %v4153 = vand.u32 %v3914, 2147483648
        %v4154 = vor.u32 1.1754944e-38, %v4153
        %v4155 = vsel %vm4152, %v4154, %v4150
        %v4156 = vmul.f32 1.0, %v4155
        %v4157 = vrcp.pop %v3915
        %v4158 = vmul.f32 %v3915, %v4157
        %v4159 = vsub.f32 1.0, %v4158
        %v4160 = vmul.f32 %v4157, %v4159
        %v4161 = vadd.f32 %v4157, %v4160
        %vm4162 = vweird.f32 %v3915
        %vm4163 = vweird.f32 %v4157
        %vm4164 = vmor %vm4162, %vm4163
        %v4165 = vsel %vm4164, %v4157, %v4161
        %v4166 = vand.u32 2147483647, %v3915
        %vm4167 = vcmp.eq.f32.partialorder %v4166, 8.507059e+37
        %v4168 = vand.u32 %v3915, 2147483648
        %v4169 = vor.u32 1.1754944e-38, %v4168
        %v4170 = vsel %vm4167, %v4169, %v4165
        %v4171 = vmul.f32 1.0, %v4170
        %v4172 = vrcp.pop %v3916
        %v4173 = vmul.f32 %v3916, %v4172
        %v4174 = vsub.f32 1.0, %v4173
        %v4175 = vmul.f32 %v4172, %v4174
        %v4176 = vadd.f32 %v4172, %v4175
        %vm4177 = vweird.f32 %v3916
        %vm4178 = vweird.f32 %v4172
        %vm4179 = vmor %vm4177, %vm4178
        %v4180 = vsel %vm4179, %v4172, %v4176
        %v4181 = vand.u32 2147483647, %v3916
        %vm4182 = vcmp.eq.f32.partialorder %v4181, 8.507059e+37
        %v4183 = vand.u32 %v3916, 2147483648
        %v4184 = vor.u32 1.1754944e-38, %v4183
        %v4185 = vsel %vm4182, %v4184, %v4180
        %v4186 = vmul.f32 1.0, %v4185
        %v4187 = vrcp.pop %v3917
        %v4188 = vmul.f32 %v3917, %v4187
        %v4189 = vsub.f32 1.0, %v4188
        %v4190 = vmul.f32 %v4187, %v4189
        %v4191 = vadd.f32 %v4187, %v4190
        %vm4192 = vweird.f32 %v3917
        %vm4193 = vweird.f32 %v4187
        %vm4194 = vmor %vm4192, %vm4193
        %v4195 = vsel %vm4194, %v4187, %v4191
        %v4196 = vand.u32 2147483647, %v3917
        %vm4197 = vcmp.eq.f32.partialorder %v4196, 8.507059e+37
        %v4198 = vand.u32 %v3917, 2147483648
        %v4199 = vor.u32 1.1754944e-38, %v4198
        %v4200 = vsel %vm4197, %v4199, %v4195
        %v4201 = vmul.f32 1.0, %v4200
        %v4202 = vrcp.pop %v3918
        %v4203 = vmul.f32 %v3918, %v4202
        %v4204 = vsub.f32 1.0, %v4203
        %v4205 = vmul.f32 %v4202, %v4204
        %v4206 = vadd.f32 %v4202, %v4205
        %vm4207 = vweird.f32 %v3918
        %vm4208 = vweird.f32 %v4202
        %vm4209 = vmor %vm4207, %vm4208
        %v4210 = vsel %vm4209, %v4202, %v4206
        %v4211 = vand.u32 2147483647, %v3918
        %vm4212 = vcmp.eq.f32.partialorder %v4211, 8.507059e+37
        %v4213 = vand.u32 %v3918, 2147483648
        %v4214 = vor.u32 1.1754944e-38, %v4213
        %v4215 = vsel %vm4212, %v4214, %v4210
        %v4216 = vmul.f32 1.0, %v4215
        %v4217 = vrcp.pop %v3919
        %v4218 = vmul.f32 %v3919, %v4217
        %v4219 = vsub.f32 1.0, %v4218
        %v4220 = vmul.f32 %v4217, %v4219
        %v4221 = vadd.f32 %v4217, %v4220
        %vm4222 = vweird.f32 %v3919
        %vm4223 = vweird.f32 %v4217
        %vm4224 = vmor %vm4222, %vm4223
        %v4225 = vsel %vm4224, %v4217, %v4221
        %v4226 = vand.u32 2147483647, %v3919
        %vm4227 = vcmp.eq.f32.partialorder %v4226, 8.507059e+37
        %v4228 = vand.u32 %v3919, 2147483648
        %v4229 = vor.u32 1.1754944e-38, %v4228
        %v4230 = vsel %vm4227, %v4229, %v4225
        %v4231 = vmul.f32 1.0, %v4230
        %v4232 = vrcp.pop %v3920
        %v4233 = vmul.f32 %v3920, %v4232
        %v4234 = vsub.f32 1.0, %v4233
        %v4235 = vmul.f32 %v4232, %v4234
        %v4236 = vadd.f32 %v4232, %v4235
        %vm4237 = vweird.f32 %v3920
        %vm4238 = vweird.f32 %v4232
        %vm4239 = vmor %vm4237, %vm4238
        %v4240 = vsel %vm4239, %v4232, %v4236
        %v4241 = vand.u32 2147483647, %v3920
        %vm4242 = vcmp.eq.f32.partialorder %v4241, 8.507059e+37
        %v4243 = vand.u32 %v3920, 2147483648
        %v4244 = vor.u32 1.1754944e-38, %v4243
        %v4245 = vsel %vm4242, %v4244, %v4240
        %v4246 = vmul.f32 1.0, %v4245
        %v4247 = vrcp.pop %v3921
        %v4248 = vmul.f32 %v3921, %v4247
        %v4249 = vsub.f32 1.0, %v4248
        %v4250 = vmul.f32 %v4247, %v4249
        %v4251 = vadd.f32 %v4247, %v4250
        %vm4252 = vweird.f32 %v3921
        %vm4253 = vweird.f32 %v4247
        %vm4254 = vmor %vm4252, %vm4253
        %v4255 = vsel %vm4254, %v4247, %v4251
        %v4256 = vand.u32 2147483647, %v3921
        %vm4257 = vcmp.eq.f32.partialorder %v4256, 8.507059e+37
        %v4258 = vand.u32 %v3921, 2147483648
        %v4259 = vor.u32 1.1754944e-38, %v4258
        %v4260 = vsel %vm4257, %v4259, %v4255
        %v4261 = vmul.f32 1.0, %v4260
        %v4262 = vrcp.pop %v3922
        %v4263 = vmul.f32 %v3922, %v4262
        %v4264 = vsub.f32 1.0, %v4263
        %v4265 = vmul.f32 %v4262, %v4264
        %v4266 = vadd.f32 %v4262, %v4265
        %vm4267 = vweird.f32 %v3922
        %vm4268 = vweird.f32 %v4262
        %vm4269 = vmor %vm4267, %vm4268
        %v4270 = vsel %vm4269, %v4262, %v4266
        %v4271 = vand.u32 2147483647, %v3922
        %vm4272 = vcmp.eq.f32.partialorder %v4271, 8.507059e+37
        %v4273 = vand.u32 %v3922, 2147483648
        %v4274 = vor.u32 1.1754944e-38, %v4273
        %v4275 = vsel %vm4272, %v4274, %v4270
        %v4276 = vmul.f32 1.0, %v4275
        %v4277 = vrcp.pop %v3923
        %v4278 = vmul.f32 %v3923, %v4277
        %v4279 = vsub.f32 1.0, %v4278
        %v4280 = vmul.f32 %v4277, %v4279
        %v4281 = vadd.f32 %v4277, %v4280
        %vm4282 = vweird.f32 %v3923
        %vm4283 = vweird.f32 %v4277
        %vm4284 = vmor %vm4282, %vm4283
        %v4285 = vsel %vm4284, %v4277, %v4281
        %v4286 = vand.u32 2147483647, %v3923
        %vm4287 = vcmp.eq.f32.partialorder %v4286, 8.507059e+37
        %v4288 = vand.u32 %v3923, 2147483648
        %v4289 = vor.u32 1.1754944e-38, %v4288
        %v4290 = vsel %vm4287, %v4289, %v4285
        %v4291 = vmul.f32 1.0, %v4290
        %v4292 = vrcp.pop %v3924
        %v4293 = vmul.f32 %v3924, %v4292
        %v4294 = vsub.f32 1.0, %v4293
        %v4295 = vmul.f32 %v4292, %v4294
        %v4296 = vadd.f32 %v4292, %v4295
        %vm4297 = vweird.f32 %v3924
        %vm4298 = vweird.f32 %v4292
        %vm4299 = vmor %vm4297, %vm4298
        %v4300 = vsel %vm4299, %v4292, %v4296
        %v4301 = vand.u32 2147483647, %v3924
        %vm4302 = vcmp.eq.f32.partialorder %v4301, 8.507059e+37
        %v4303 = vand.u32 %v3924, 2147483648
        %v4304 = vor.u32 1.1754944e-38, %v4303
        %v4305 = vsel %vm4302, %v4304, %v4300
        %v4306 = vmul.f32 1.0, %v4305
        %v4307 = vrcp.pop %v3925
        %v4308 = vmul.f32 %v3925, %v4307
        %v4309 = vsub.f32 1.0, %v4308
        %v4310 = vmul.f32 %v4307, %v4309
        %v4311 = vadd.f32 %v4307, %v4310
        %vm4312 = vweird.f32 %v3925
        %vm4313 = vweird.f32 %v4307
        %vm4314 = vmor %vm4312, %vm4313
        %v4315 = vsel %vm4314, %v4307, %v4311
        %v4316 = vand.u32 2147483647, %v3925
        %vm4317 = vcmp.eq.f32.partialorder %v4316, 8.507059e+37
        %v4318 = vand.u32 %v3925, 2147483648
        %v4319 = vor.u32 1.1754944e-38, %v4318
        %v4320 = vsel %vm4317, %v4319, %v4315
        %v4321 = vmul.f32 1.0, %v4320
        %v4322 = vrcp.pop %v3926
        %v4323 = vmul.f32 %v3926, %v4322
        %v4324 = vsub.f32 1.0, %v4323
        %v4325 = vmul.f32 %v4322, %v4324
        %v4326 = vadd.f32 %v4322, %v4325
        %vm4327 = vweird.f32 %v3926
        %vm4328 = vweird.f32 %v4322
        %vm4329 = vmor %vm4327, %vm4328
        %v4330 = vsel %vm4329, %v4322, %v4326
        %v4331 = vand.u32 2147483647, %v3926
        %vm4332 = vcmp.eq.f32.partialorder %v4331, 8.507059e+37
        %v4333 = vand.u32 %v3926, 2147483648
        %v4334 = vor.u32 1.1754944e-38, %v4333
        %v4335 = vsel %vm4332, %v4334, %v4330
        %v4336 = vmul.f32 1.0, %v4335
        %v4337 = vrcp.pop %v3927
        %v4338 = vmul.f32 %v3927, %v4337
        %v4339 = vsub.f32 1.0, %v4338
        %v4340 = vmul.f32 %v4337, %v4339
        %v4341 = vadd.f32 %v4337, %v4340
        %vm4342 = vweird.f32 %v3927
        %vm4343 = vweird.f32 %v4337
        %vm4344 = vmor %vm4342, %vm4343
        %v4345 = vsel %vm4344, %v4337, %v4341
        %v4346 = vand.u32 2147483647, %v3927
        %vm4347 = vcmp.eq.f32.partialorder %v4346, 8.507059e+37
        %v4348 = vand.u32 %v3927, 2147483648
        %v4349 = vor.u32 1.1754944e-38, %v4348
        %v4350 = vsel %vm4347, %v4349, %v4345
        %v4351 = vmul.f32 1.0, %v4350
        %v4352 = vrcp.pop %v3928
        %v4353 = vmul.f32 %v3928, %v4352
        %v4354 = vsub.f32 1.0, %v4353
        %v4355 = vmul.f32 %v4352, %v4354
        %v4356 = vadd.f32 %v4352, %v4355
        %vm4357 = vweird.f32 %v3928
        %vm4358 = vweird.f32 %v4352
        %vm4359 = vmor %vm4357, %vm4358
        %v4360 = vsel %vm4359, %v4352, %v4356
        %v4361 = vand.u32 2147483647, %v3928
        %vm4362 = vcmp.eq.f32.partialorder %v4361, 8.507059e+37
        %v4363 = vand.u32 %v3928, 2147483648
        %v4364 = vor.u32 1.1754944e-38, %v4363
        %v4365 = vsel %vm4362, %v4364, %v4360
        %v4366 = vmul.f32 1.0, %v4365
        %v4367 = vrcp.pop %v3929
        %v4368 = vmul.f32 %v3929, %v4367
        %v4369 = vsub.f32 1.0, %v4368
        %v4370 = vmul.f32 %v4367, %v4369
        %v4371 = vadd.f32 %v4367, %v4370
        %vm4372 = vweird.f32 %v3929
        %vm4373 = vweird.f32 %v4367
        %vm4374 = vmor %vm4372, %vm4373
        %v4375 = vsel %vm4374, %v4367, %v4371
        %v4376 = vand.u32 2147483647, %v3929
        %vm4377 = vcmp.eq.f32.partialorder %v4376, 8.507059e+37
        %v4378 = vand.u32 %v3929, 2147483648
        %v4379 = vor.u32 1.1754944e-38, %v4378
        %v4380 = vsel %vm4377, %v4379, %v4375
        %v4381 = vmul.f32 1.0, %v4380
        %v4382 = vrcp.pop %v3930
        %v4383 = vmul.f32 %v3930, %v4382
        %v4384 = vsub.f32 1.0, %v4383
        %v4385 = vmul.f32 %v4382, %v4384
        %v4386 = vadd.f32 %v4382, %v4385
        %vm4387 = vweird.f32 %v3930
        %vm4388 = vweird.f32 %v4382
        %vm4389 = vmor %vm4387, %vm4388
        %v4390 = vsel %vm4389, %v4382, %v4386
        %v4391 = vand.u32 2147483647, %v3930
        %vm4392 = vcmp.eq.f32.partialorder %v4391, 8.507059e+37
        %v4393 = vand.u32 %v3930, 2147483648
        %v4394 = vor.u32 1.1754944e-38, %v4393
        %v4395 = vsel %vm4392, %v4394, %v4390
        %v4396 = vmul.f32 1.0, %v4395
        %v4397 = vrcp.pop %v3931
        %v4398 = vmul.f32 %v3931, %v4397
        %v4399 = vsub.f32 1.0, %v4398
        %v4400 = vmul.f32 %v4397, %v4399
        %v4401 = vadd.f32 %v4397, %v4400
        %vm4402 = vweird.f32 %v3931
        %vm4403 = vweird.f32 %v4397
        %vm4404 = vmor %vm4402, %vm4403
        %v4405 = vsel %vm4404, %v4397, %v4401
        %v4406 = vand.u32 2147483647, %v3931
        %vm4407 = vcmp.eq.f32.partialorder %v4406, 8.507059e+37
        %v4408 = vand.u32 %v3931, 2147483648
        %v4409 = vor.u32 1.1754944e-38, %v4408
        %v4410 = vsel %vm4407, %v4409, %v4405
        %v4411 = vmul.f32 1.0, %v4410
        %v4412 = vmul.f32 %v3725, %v3946
        %v4413 = vmul.f32 %v3727, %v3961
        %v4414 = vmul.f32 %v3730, %v3976
        %v4415 = vmul.f32 %v3732, %v3991
        %v4416 = vmul.f32 %v3735, %v4006
        %v4417 = vmul.f32 %v3737, %v4021
        %v4418 = vmul.f32 %v3740, %v4036
        %v4419 = vmul.f32 %v3742, %v4051
        %v4420 = vmul.f32 %v3745, %v4066
        %v4421 = vmul.f32 %v3747, %v4081
        %v4422 = vmul.f32 %v3750, %v4096
        %v4423 = vmul.f32 %v3752, %v4111
        %v4424 = vmul.f32 %v3755, %v4126
        %v4425 = vmul.f32 %v3757, %v4141
        %v4426 = vmul.f32 %v3760, %v4156
        %v4427 = vmul.f32 %v3762, %v4171
        %v4428 = vmul.f32 %v3765, %v4186
        %v4429 = vmul.f32 %v3767, %v4201
        %v4430 = vmul.f32 %v3770, %v4216
        %v4431 = vmul.f32 %v3772, %v4231
        %v4432 = vmul.f32 %v3775, %v4246
        %v4433 = vmul.f32 %v3777, %v4261
        %v4434 = vmul.f32 %v3780, %v4276
        %v4435 = vmul.f32 %v3782, %v4291
        %v4436 = vmul.f32 %v3785, %v4306
        %v4437 = vmul.f32 %v3787, %v4321
        %v4438 = vmul.f32 %v3790, %v4336
        %v4439 = vmul.f32 %v3792, %v4351
        %v4440 = vmul.f32 %v3795, %v4366
        %v4441 = vmul.f32 %v3797, %v4381
        %v4442 = vmul.f32 %v3800, %v4396
        %v4443 = vmul.f32 %v3802, %v4411
        %4444 = vst.msk [vmem:[%s244] sm:$0xff] %vm365, %v4412
        %4445 = vst.msk [vmem:[%s244 + $0x8] sm:$0xff] %vm365, %v4413
        %4446 = vst.msk [vmem:[%s244 + $0x10] sm:$0xff] %vm365, %v4414
        %4447 = vst.msk [vmem:[%s244 + $0x18] sm:$0xff] %vm365, %v4415
        %4448 = vst.msk [vmem:[%s244 + $0x20] sm:$0xff] %vm365, %v4416
        %4449 = vst.msk [vmem:[%s244 + $0x28] sm:$0xff] %vm365, %v4417
        %4450 = vst.msk [vmem:[%s244 + $0x30] sm:$0xff] %vm365, %v4418
        %4451 = vst.msk [vmem:[%s244 + $0x38] sm:$0xff] %vm365, %v4419
        %4452 = vst.msk [vmem:[%s244 + $0x40] sm:$0xff] %vm365, %v4420
        %4453 = vst.msk [vmem:[%s244 + $0x48] sm:$0xff] %vm365, %v4421
        %4454 = vst.msk [vmem:[%s244 + $0x50] sm:$0xff] %vm365, %v4422
        %4455 = vst.msk [vmem:[%s244 + $0x58] sm:$0xff] %vm365, %v4423
        %4456 = vst.msk [vmem:[%s244 + $0x60] sm:$0xff] %vm365, %v4424
        %4457 = vst.msk [vmem:[%s244 + $0x68] sm:$0xff] %vm365, %v4425
        %4458 = vst.msk [vmem:[%s244 + $0x70] sm:$0xff] %vm365, %v4426
        %4459 = vst.msk [vmem:[%s244 + $0x78] sm:$0xff] %vm365, %v4427
        %4460 = vst.msk [vmem:[%s244 + $0x80] sm:$0xff] %vm365, %v4428
        %4461 = vst.msk [vmem:[%s244 + $0x88] sm:$0xff] %vm365, %v4429
        %4462 = vst.msk [vmem:[%s244 + $0x90] sm:$0xff] %vm365, %v4430
        %4463 = vst.msk [vmem:[%s244 + $0x98] sm:$0xff] %vm365, %v4431
        %4464 = vst.msk [vmem:[%s244 + $0xa0] sm:$0xff] %vm365, %v4432
        %4465 = vst.msk [vmem:[%s244 + $0xa8] sm:$0xff] %vm365, %v4433
        %4466 = vst.msk [vmem:[%s244 + $0xb0] sm:$0xff] %vm365, %v4434
        %4467 = vst.msk [vmem:[%s244 + $0xb8] sm:$0xff] %vm365, %v4435
        %4468 = vst.msk [vmem:[%s244 + $0xc0] sm:$0xff] %vm365, %v4436
        %4469 = vst.msk [vmem:[%s244 + $0xc8] sm:$0xff] %vm365, %v4437
        %4470 = vst.msk [vmem:[%s244 + $0xd0] sm:$0xff] %vm365, %v4438
        %4471 = vst.msk [vmem:[%s244 + $0xd8] sm:$0xff] %vm365, %v4439
        %4472 = vst.msk [vmem:[%s244 + $0xe0] sm:$0xff] %vm365, %v4440
        %4473 = vst.msk [vmem:[%s244 + $0xe8] sm:$0xff] %vm365, %v4441
        %4474 = vst.msk [vmem:[%s244 + $0xf0] sm:$0xff] %vm365, %v4442
        %4475 = vst.msk [vmem:[%s244 + $0xf8] sm:$0xff] %vm365, %v4443
        %s4476 = sand.u32 %s140, 1
        %s4477 = scalar_lea.sflag [#allocation6], %s4476
        %s4478 = sand.u32 %s140, 1
        %s4479 = smul.addr %s4478, 256
        %s4480 = scalar_lea.vmem [#allocation7], %s4479
        // Predicated region
        $region45: #{sppf_forward.1} parent=39 // pred_check
          %p4481 = pneg %p150
        $region46: #{sppf_forward.1} parent=39 // pred_check_branch
          %4483 = sbr.rel (%p4481) target = $region48
        $region47: #{sppf_forward.1} parent=39 // pred_region
          %4485 = vsyncadd %s4477, 0
          %s4486 = smul.addr %s22, 32
          %s4487 = smul.addr %s4486, 8
          %s4488 = scalar_lea.hbm %s5, %s4487
          %s4489 = sshll.u32 %s4480, 4
          %s4490 = int_to_ptr.vmem [resolvable:$true] %s4489
          %s4491 = sshll.u32 %s4488, 4
          %s4492 = int_to_ptr.hbm [resolvable:$true] %s4491
          %4497 = dma.vmem_to_hbm [thread:$0]  %s4490, 4096, %s4492, %s4477, 128, 128, 8
        $region48: #{sppf_forward.1} parent=39 // pred_fallthru
          _
      $region40: #{sppf_forward.1} parent=5 // pred_fallthru
        _
      %p4498 = scmp.le.s32.totalorder 2, %s17
      // Predicated region
      $region49: #{sppf_forward.1} parent=5 // pred_check
        %p4499 = pneg %p4498
      $region50: #{sppf_forward.1} parent=5 // pred_check_branch
        %4501 = sbr.rel (%p4499) target = $region52
      $region51: #{sppf_forward.1} parent=5 // pred_region
        %s4502 = ssub.s32 %s17, 2
        // Predicated region
        $region53: #{sppf_forward.1} parent=51 // pred_check
          %p4503 = pneg %p156
        $region54: #{sppf_forward.1} parent=51 // pred_check_branch
          %4505 = sbr.rel (%p4503) target = $region56
        $region55: #{sppf_forward.1} parent=51 // pred_region
          %s4506 = sand.u32 %s141, 1
          %s4507 = scalar_lea.sflag [#allocation6], %s4506
          %s4508 = sand.u32 %s141, 1
          %s4509 = smul.addr %s4508, 256
          %s4510 = scalar_lea.vmem [#allocation7], %s4509
          %4512 = dma.done %s4507, 4096
        $region56: #{sppf_forward.1} parent=51 // pred_fallthru
          _
      $region52: #{sppf_forward.1} parent=5 // pred_fallthru
        _
    $region6: #{sppf_forward.1} parent=1 // loop_footer
      %s21 = sadd.s32 1, %s17
    $region7: #{sppf_forward.1} parent=1 // loop_footer_branch
      %16 = sbr.rel target = $region3
    $region8: #{sppf_forward.1} parent=1 // loop_exit
      _
    %4513 = vsyncpa [#allocation5], 1
    %s4514 = scalar_lea.sflag [#allocation5], 1
    %4515 = vsyncpa %s4514, 1
    %4516 = vsyncpa [#allocation6], 1
    %s4517 = scalar_lea.sflag [#allocation6], 1
    %4518 = vsyncpa %s4517, 1

</llo_original>
